<compile_context>
chip_gen: v6e
topology: v6e:2x2x1
jax: 0.10.0
libtpu: 0.0.40
codegen_flags: <defaults>
</compile_context>

<pallas_src>
import math

import jax
import jax.numpy as jnp
from jax.experimental import pallas as pl
from jax.experimental.pallas import tpu as pltpu


def _lsa_kernel(x_ref, w2_ref, e2_ref, o_ref):
    # x_ref : (1, G, tr, L)  folded input tile, L = rf*C (lane-dense minor dim)
    # w2_ref: (L, rf)        kron(I_rf, w)        -> per-position Linear scores
    # e2_ref: (rf, L)        kron(I_rf, 1_{1xC})  -> replicate probs across C
    # o_ref : (1, tr, L)     folded output tile (lane-dense stores)
    G = x_ref.shape[1]
    w2 = w2_ref[...]
    e2 = e2_ref[...]

    # 1) mode scores per group: (tr, rf); position n <-> (r, f) = (n//rf, n%rf)
    scores = []
    for g in range(G):
        xg = x_ref[0, g].astype(jnp.float32)                       # (tr, L)
        scores.append(
            jax.lax.dot_general(
                xg, w2, (((1,), (0,)), ((), ())),
                precision=jax.lax.Precision.HIGHEST,
                preferred_element_type=jnp.float32))

    # 2) numerically stable softmax across the group axis (Python list dim)
    m = scores[0]
    for g in range(1, G):
        m = jnp.maximum(m, scores[g])
    exps = [jnp.exp(s - m) for s in scores]
    denom = exps[0]
    for g in range(1, G):
        denom = denom + exps[g]
    # Exact reciprocal: the approximate EUP rcp here was the source of the
    # previous numerical mismatch; the tile is tiny so exact division is free.
    inv = 1.0 / denom                                              # (tr, rf)

    # 3) weighted sum over groups: fully lane-dense (tr, L), f32 accumulation
    acc = jnp.zeros(o_ref.shape[1:], dtype=jnp.float32)
    for g in range(G):
        probs_g = exps[g] * inv                                    # (tr, rf)
        probs_full = jax.lax.dot_general(                          # (tr, L)
            probs_g, e2, (((1,), (0,)), ((), ())),
            precision=jax.lax.Precision.HIGHEST,
            preferred_element_type=jnp.float32)
        acc = acc + x_ref[0, g].astype(jnp.float32) * probs_full
    o_ref[0] = acc.astype(o_ref.dtype)


def _pick_row_tile(n_rows, G, L, rf, itemsize, vmem_budget_bytes):
    """Largest folded-row tile (multiple of 8, or the full extent) whose
    double-buffered x + out (+ constant operands) footprint fits the budget."""
    const_bytes = 2 * 2 * L * rf * 4            # w2 + e2, double-buffered, f32

    def footprint(tr):
        return const_bytes + 2 * (G + 1) * tr * L * itemsize

    if footprint(n_rows) <= vmem_budget_bytes:
        return n_rows                            # single tile, full extent
    cands = [d for d in range(8, n_rows, 8) if n_rows % d == 0]
    fitting = [d for d in cands if footprint(d) <= vmem_budget_bytes]
    if fitting:
        return max(fitting)
    return min(cands) if cands else n_rows


def learned_soft_aggregate(x, w, b=None, *, vmem_budget_bytes=8 * 1024 * 1024):
    """x: (B, G, N, C); w: (C, 1); b: (1, 1) -> (B, N, C).

    Equals (x * softmax(x @ w + b, axis=1)).sum(axis=1).  The bias is accepted
    for interface parity but unused: softmax over the group axis is invariant
    to adding the same constant to every group's score.
    """
    del b
    B, G, N, C = x.shape

    # Fold rows so the minor dim is a multiple of 128 lanes when possible.
    rf = 128 // math.gcd(C, 128)
    if N % rf != 0:
        rf = 1                                   # correct (lane-sparse) fallback
    L = rf * C
    n_rows = N // rf

    x_folded = x.reshape(B, G, n_rows, L)        # free, contiguous reshape
    eye = jnp.eye(rf, dtype=jnp.float32)
    w2 = jnp.kron(eye, w.astype(jnp.float32))            # (L, rf)
    e2 = jnp.kron(eye, jnp.ones((1, C), jnp.float32))    # (rf, L)

    itemsize = jnp.dtype(x.dtype).itemsize
    tr = _pick_row_tile(n_rows, G, L, rf, itemsize, vmem_budget_bytes)
    grid = (B, n_rows // tr)

    out_folded = pl.pallas_call(
        _lsa_kernel,
        out_shape=jax.ShapeDtypeStruct((B, n_rows, L), x.dtype),
        grid=grid,
        in_specs=[
            pl.BlockSpec((1, G, tr, L), lambda i, j: (i, 0, j, 0)),
            pl.BlockSpec((L, rf), lambda i, j: (0, 0)),   # constant block
            pl.BlockSpec((rf, L), lambda i, j: (0, 0)),   # constant block
        ],
        out_specs=pl.BlockSpec((1, tr, L), lambda i, j: (i, j, 0)),
        compiler_params=pltpu.CompilerParams(
            dimension_semantics=("parallel", "parallel")),
    )(x_folded, w2, e2)
    return out_folded.reshape(B, N, C)


def _reference(x, w, b):
    scores = jnp.einsum('bgnc,ck->bgnk', x, w,
                        precision=jax.lax.Precision.HIGHEST) + b[0, 0]
    probs = jax.nn.softmax(scores, axis=1)       # softmax over the group axis
    return jnp.sum(x * probs, axis=1)            # (B, N, C)


if __name__ == "__main__":
    B, G, N, C = 2, 4, 16, 32   # batch, groups (group_dim axis), seq, num_feat

    key = jax.random.PRNGKey(0)
    kx, kw, kb = jax.random.split(key, 3)

    x = jax.random.normal(kx, (B, G, N, C), dtype=jnp.float32)

    # Deterministic nn.Linear(num_feat, 1) style init: U(-1/sqrt(C), 1/sqrt(C))
    bound = 1.0 / (C ** 0.5)
    w = jax.random.uniform(kw, (C, 1), jnp.float32, -bound, bound)
    b = jax.random.uniform(kb, (1, 1), jnp.float32, -bound, bound)

    out = jax.jit(learned_soft_aggregate)(x, w, b)
    out = jax.block_until_ready(out)

    ref = _reference(x, w, b)
    assert out.shape == (B, N, C)
    # Softmax reciprocal is exact now; the dropped Linear bias is a softmax
    # no-op, so remaining diffs are only fp reduction-order / exp rounding.
    assert jnp.allclose(out, ref, atol=1e-3, rtol=1e-3), "mismatch vs reference"

    print("KERNEL_OK")
</pallas_src>

<mosaic_0001>
module attributes {stable_mosaic.version = 11 : i64} {
  func.func @_lsa_kernel(%arg0: i32, %arg1: i32, %arg2: memref<1x4x4x128xf32, #tpu.memory_space<vmem>>, %arg3: memref<128x4xf32, #tpu.memory_space<vmem>>, %arg4: memref<4x128xf32, #tpu.memory_space<vmem>>, %arg5: memref<1x4x128xf32, #tpu.memory_space<vmem>>) attributes {dimension_semantics = [#tpu.dimension_semantics<parallel>, #tpu.dimension_semantics<parallel>], iteration_bounds = array<i64: 2, 1>, scalar_prefetch = 0 : i64, scratch_operands = 0 : i64, tpu.core_type = #tpu.core_type<tc>, window_params = [{transform_indices = @transform_0, window_bounds = array<i64: 1, 4, 4, 128>}, {pipeline_mode = #tpu.pipeline_mode<synchronous>, transform_indices = @transform_1, window_bounds = array<i64: 128, 4>}, {pipeline_mode = #tpu.pipeline_mode<synchronous>, transform_indices = @transform_2, window_bounds = array<i64: 4, 128>}, {transform_indices = @transform_3, window_bounds = array<i64: 1, 4, 128>}]} {
    %c0 = arith.constant 0 : index
    %c0_0 = arith.constant 0 : index
    %0 = vector.load %arg3[%c0, %c0_0] : memref<128x4xf32, #tpu.memory_space<vmem>>, vector<128x4xf32>
    %c0_1 = arith.constant 0 : index
    %c0_2 = arith.constant 0 : index
    %1 = vector.load %arg4[%c0_1, %c0_2] : memref<4x128xf32, #tpu.memory_space<vmem>>, vector<4x128xf32>
    %c0_3 = arith.constant 0 : index
    %c0_4 = arith.constant 0 : index
    %c0_5 = arith.constant 0 : index
    %c0_6 = arith.constant 0 : index
    %2 = vector.load %arg2[%c0_3, %c0_4, %c0_5, %c0_6] : memref<1x4x4x128xf32, #tpu.memory_space<vmem>>, vector<1x1x4x128xf32>
    %3 = vector.shape_cast %2 : vector<1x1x4x128xf32> to vector<4x128xf32>
    %cst = arith.constant dense<0.000000e+00> : vector<4x4xf32>
    %4 = tpu.matmul %3, %0, %cst {dimension_numbers = #tpu.dot_dimension_numbers<[1], [0], [0], [1], [0, 0, 1, 1], [], []>, precision = #tpu.contract_precision<fp32>} : vector<4x128xf32>, vector<128x4xf32>, vector<4x4xf32> -> vector<4x4xf32>
    %c0_7 = arith.constant 0 : index
    %c1 = arith.constant 1 : index
    %c0_8 = arith.constant 0 : index
    %c0_9 = arith.constant 0 : index
    %5 = vector.load %arg2[%c0_7, %c1, %c0_8, %c0_9] : memref<1x4x4x128xf32, #tpu.memory_space<vmem>>, vector<1x1x4x128xf32>
    %6 = vector.shape_cast %5 : vector<1x1x4x128xf32> to vector<4x128xf32>
    %cst_10 = arith.constant dense<0.000000e+00> : vector<4x4xf32>
    %7 = tpu.matmul %6, %0, %cst_10 {dimension_numbers = #tpu.dot_dimension_numbers<[1], [0], [0], [1], [0, 0, 1, 1], [], []>, precision = #tpu.contract_precision<fp32>} : vector<4x128xf32>, vector<128x4xf32>, vector<4x4xf32> -> vector<4x4xf32>
    %c0_11 = arith.constant 0 : index
    %c2 = arith.constant 2 : index
    %c0_12 = arith.constant 0 : index
    %c0_13 = arith.constant 0 : index
    %8 = vector.load %arg2[%c0_11, %c2, %c0_12, %c0_13] : memref<1x4x4x128xf32, #tpu.memory_space<vmem>>, vector<1x1x4x128xf32>
    %9 = vector.shape_cast %8 : vector<1x1x4x128xf32> to vector<4x128xf32>
    %cst_14 = arith.constant dense<0.000000e+00> : vector<4x4xf32>
    %10 = tpu.matmul %9, %0, %cst_14 {dimension_numbers = #tpu.dot_dimension_numbers<[1], [0], [0], [1], [0, 0, 1, 1], [], []>, precision = #tpu.contract_precision<fp32>} : vector<4x128xf32>, vector<128x4xf32>, vector<4x4xf32> -> vector<4x4xf32>
    %c0_15 = arith.constant 0 : index
    %c3 = arith.constant 3 : index
    %c0_16 = arith.constant 0 : index
    %c0_17 = arith.constant 0 : index
    %11 = vector.load %arg2[%c0_15, %c3, %c0_16, %c0_17] : memref<1x4x4x128xf32, #tpu.memory_space<vmem>>, vector<1x1x4x128xf32>
    %12 = vector.shape_cast %11 : vector<1x1x4x128xf32> to vector<4x128xf32>
    %cst_18 = arith.constant dense<0.000000e+00> : vector<4x4xf32>
    %13 = tpu.matmul %12, %0, %cst_18 {dimension_numbers = #tpu.dot_dimension_numbers<[1], [0], [0], [1], [0, 0, 1, 1], [], []>, precision = #tpu.contract_precision<fp32>} : vector<4x128xf32>, vector<128x4xf32>, vector<4x4xf32> -> vector<4x4xf32>
    %14 = arith.maximumf %4, %7 : vector<4x4xf32>
    %15 = arith.maximumf %14, %10 : vector<4x4xf32>
    %16 = arith.maximumf %15, %13 : vector<4x4xf32>
    %17 = arith.subf %4, %16 : vector<4x4xf32>
    %18 = math.exp %17 : vector<4x4xf32>
    %19 = arith.subf %7, %16 : vector<4x4xf32>
    %20 = math.exp %19 : vector<4x4xf32>
    %21 = arith.subf %10, %16 : vector<4x4xf32>
    %22 = math.exp %21 : vector<4x4xf32>
    %23 = arith.subf %13, %16 : vector<4x4xf32>
    %24 = math.exp %23 : vector<4x4xf32>
    %25 = arith.addf %18, %20 : vector<4x4xf32>
    %26 = arith.addf %25, %22 : vector<4x4xf32>
    %27 = arith.addf %26, %24 : vector<4x4xf32>
    %cst_19 = arith.constant 1.000000e+00 : f32
    %28 = vector.broadcast %cst_19 : f32 to vector<4x4xf32>
    %29 = arith.divf %28, %27 : vector<4x4xf32>
    %cst_20 = arith.constant 0.000000e+00 : f32
    %30 = vector.broadcast %cst_20 : f32 to vector<4x128xf32>
    %31 = arith.mulf %18, %29 : vector<4x4xf32>
    %cst_21 = arith.constant dense<0.000000e+00> : vector<4x128xf32>
    %32 = tpu.matmul %31, %1, %cst_21 {dimension_numbers = #tpu.dot_dimension_numbers<[1], [0], [0], [1], [0, 0, 1, 1], [], []>, precision = #tpu.contract_precision<fp32>} : vector<4x4xf32>, vector<4x128xf32>, vector<4x128xf32> -> vector<4x128xf32>
    %c0_22 = arith.constant 0 : index
    %c0_23 = arith.constant 0 : index
    %c0_24 = arith.constant 0 : index
    %c0_25 = arith.constant 0 : index
    %33 = vector.load %arg2[%c0_22, %c0_23, %c0_24, %c0_25] : memref<1x4x4x128xf32, #tpu.memory_space<vmem>>, vector<1x1x4x128xf32>
    %34 = vector.shape_cast %33 : vector<1x1x4x128xf32> to vector<4x128xf32>
    %35 = arith.mulf %34, %32 : vector<4x128xf32>
    %36 = arith.addf %30, %35 : vector<4x128xf32>
    %37 = arith.mulf %20, %29 : vector<4x4xf32>
    %cst_26 = arith.constant dense<0.000000e+00> : vector<4x128xf32>
    %38 = tpu.matmul %37, %1, %cst_26 {dimension_numbers = #tpu.dot_dimension_numbers<[1], [0], [0], [1], [0, 0, 1, 1], [], []>, precision = #tpu.contract_precision<fp32>} : vector<4x4xf32>, vector<4x128xf32>, vector<4x128xf32> -> vector<4x128xf32>
    %c0_27 = arith.constant 0 : index
    %c1_28 = arith.constant 1 : index
    %c0_29 = arith.constant 0 : index
    %c0_30 = arith.constant 0 : index
    %39 = vector.load %arg2[%c0_27, %c1_28, %c0_29, %c0_30] : memref<1x4x4x128xf32, #tpu.memory_space<vmem>>, vector<1x1x4x128xf32>
    %40 = vector.shape_cast %39 : vector<1x1x4x128xf32> to vector<4x128xf32>
    %41 = arith.mulf %40, %38 : vector<4x128xf32>
    %42 = arith.addf %36, %41 : vector<4x128xf32>
    %43 = arith.mulf %22, %29 : vector<4x4xf32>
    %cst_31 = arith.constant dense<0.000000e+00> : vector<4x128xf32>
    %44 = tpu.matmul %43, %1, %cst_31 {dimension_numbers = #tpu.dot_dimension_numbers<[1], [0], [0], [1], [0, 0, 1, 1], [], []>, precision = #tpu.contract_precision<fp32>} : vector<4x4xf32>, vector<4x128xf32>, vector<4x128xf32> -> vector<4x128xf32>
    %c0_32 = arith.constant 0 : index
    %c2_33 = arith.constant 2 : index
    %c0_34 = arith.constant 0 : index
    %c0_35 = arith.constant 0 : index
    %45 = vector.load %arg2[%c0_32, %c2_33, %c0_34, %c0_35] : memref<1x4x4x128xf32, #tpu.memory_space<vmem>>, vector<1x1x4x128xf32>
    %46 = vector.shape_cast %45 : vector<1x1x4x128xf32> to vector<4x128xf32>
    %47 = arith.mulf %46, %44 : vector<4x128xf32>
    %48 = arith.addf %42, %47 : vector<4x128xf32>
    %49 = arith.mulf %24, %29 : vector<4x4xf32>
    %cst_36 = arith.constant dense<0.000000e+00> : vector<4x128xf32>
    %50 = tpu.matmul %49, %1, %cst_36 {dimension_numbers = #tpu.dot_dimension_numbers<[1], [0], [0], [1], [0, 0, 1, 1], [], []>, precision = #tpu.contract_precision<fp32>} : vector<4x4xf32>, vector<4x128xf32>, vector<4x128xf32> -> vector<4x128xf32>
    %c0_37 = arith.constant 0 : index
    %c3_38 = arith.constant 3 : index
    %c0_39 = arith.constant 0 : index
    %c0_40 = arith.constant 0 : index
    %51 = vector.load %arg2[%c0_37, %c3_38, %c0_39, %c0_40] : memref<1x4x4x128xf32, #tpu.memory_space<vmem>>, vector<1x1x4x128xf32>
    %52 = vector.shape_cast %51 : vector<1x1x4x128xf32> to vector<4x128xf32>
    %53 = arith.mulf %52, %50 : vector<4x128xf32>
    %54 = arith.addf %48, %53 : vector<4x128xf32>
    %c0_41 = arith.constant 0 : index
    %c0_42 = arith.constant 0 : index
    %c0_43 = arith.constant 0 : index
    %55 = vector.load %arg5[%c0_41, %c0_42, %c0_43] : memref<1x4x128xf32, #tpu.memory_space<vmem>>, vector<1x4x128xf32>
    %56 = vector.shape_cast %55 : vector<1x4x128xf32> to vector<4x128xf32>
    %57 = vector.shape_cast %54 : vector<4x128xf32> to vector<1x4x128xf32>
    tpu.vector_store %arg5[%c0_41, %c0_42, %c0_43], %57 {strides = array<i32>} : memref<1x4x128xf32, #tpu.memory_space<vmem>>, vector<1x4x128xf32>,
    return
  }
  func.func @transform_0(%arg0: i32, %arg1: i32) -> (i32, i32, i32, i32) {
    %c0_i32 = arith.constant 0 : i32
    %c0_i32_0 = arith.constant 0 : i32
    %c0_i32_1 = arith.constant 0 : i32
    return %arg0, %c0_i32, %arg1, %c0_i32_0 : i32, i32, i32, i32
  }
  func.func @transform_1(%arg0: i32, %arg1: i32) -> (i32, i32) {
    %c0_i32 = arith.constant 0 : i32
    %c0_i32_0 = arith.constant 0 : i32
    %c0_i32_1 = arith.constant 0 : i32
    return %c0_i32, %c0_i32_0 : i32, i32
  }
  func.func @transform_2(%arg0: i32, %arg1: i32) -> (i32, i32) {
    %c0_i32 = arith.constant 0 : i32
    %c0_i32_0 = arith.constant 0 : i32
    %c0_i32_1 = arith.constant 0 : i32
    return %c0_i32, %c0_i32_0 : i32, i32
  }
  func.func @transform_3(%arg0: i32, %arg1: i32) -> (i32, i32, i32) {
    %c0_i32 = arith.constant 0 : i32
    %c0_i32_0 = arith.constant 0 : i32
    return %arg0, %arg1, %c0_i32 : i32, i32, i32
  }
}

</mosaic_0001>

<llo_original>
// kernel: learned_soft_aggregate.1
$region0: #{learned_soft_aggregate.1}
  #allocation0 [shape = 'u32[]', space=smem, size = 0x4, offset = 0x4, fixed_abs, tag = 'smem constant byte address 0x4 - core index']
  #allocation1 [shape = 'u32[144,128]{1,0:T(1,128)}', space=vmem, size = 0x12000, scoped, tag = 'internal scratch']
  %s0 = inlined_call_operand.vmem [shape: f32[2,4,4,128], index: 0, kind: input, shape index: {}]
  %s1 = inlined_call_operand.vmem [shape: f32[128,4], index: 1, kind: input, shape index: {}]
  %s2 = inlined_call_operand.vmem [shape: f32[4,128], index: 2, kind: input, shape index: {}]
  %s3 = inlined_call_operand.vmem [shape: f32[2,4,128], index: 3, kind: output, shape index: {}]
  %s4 = sld [smem:[#allocation0]]
  $region45: #{learned_soft_aggregate.1} parent=0
    _
  %s6 = ssub.s32 1, %s4
  %s7 = scalar_select 0, %s6, %s4
  loop: start=0, step=1, limit=4
  $region2: #{learned_soft_aggregate.1} parent=0 // loop_pre_header
    _
  $region3: #{learned_soft_aggregate.1} parent=0 // loop_header
    %s9 = sphi 0, %s13
    %p10 = scmp.ge.s32.totalorder %s9, 4
    %s16 = sphi 0, %s28
    %s17 = sphi 0, %s24
    %s18 = sphi 0, %s16
    %s19 = sphi 0, %s17
    %s20 = sphi 0, %s18
    %s21 = sphi 0, %s19
    %s33 = sphi 0, %s35
    %s36 = sphi 0, %s33
    %s37 = sphi 0, %s36
    %s53 = sphi 0, %s37
    %s57 = sphi 0, %s57
    %s59 = sphi 0, %s57
    %s60 = sphi 0, %s59
    %s74 = sphi 0, %s60
    %s78 = sphi 0, %s78
    %s80 = sphi 0, %s78
    %s81 = sphi 0, %s80
    %s95 = sphi 0, %s81
    %s103 = sphi 0, %s105
    %s106 = sphi 0, %s103
    %s107 = sphi 0, %s106
    %s123 = sphi 0, %s107
  $region4: #{learned_soft_aggregate.1} parent=0 // loop_header_branch
    %12 = sbr.rel (%p10) target = $region8
  $region5: #{learned_soft_aggregate.1} parent=0 // loop_body
    %s14 = ssub.s32 %s9, 1
    %s15 = ssub.s32 %s9, 2
    %s22 = sadd.s32 1, %s17
    %p23 = scmp.ge.s32.totalorder %s22, 1
    %s24 = scalar_select %p23, 0, %s22
    %s25 = sadd.s32 1, %s16
    %s26 = scalar_select %p23, %s25, %s16
    %p27 = scmp.ge.s32.totalorder %s26, 2
    %s28 = scalar_select %p27, 0, %s26
    %s29 = ssub.s32 %s16, %s28
    %s30 = ssub.s32 %s17, %s24
    %s31 = sor.u32 %s29, %s30
    %p32 = scmp.eq.s32.totalorder %s31, 0
    %s34 = sadd.s32 %s33, 1
    %s35 = scalar_select %p32, %s33, %s34
    %p38 = pneg %p32
    %p39 = scmp.eq.s32.totalorder %s9, 1
    %p40 = por %p38, %p39
    %p41 = scmp.ne.s32.totalorder %s33, %s36
    %p42 = scmp.eq.s32.totalorder %s9, 0
    %p43 = por %p41, %p42
    %p44 = scmp.ne.s32.totalorder %s33, %s36
    %p45 = scmp.eq.s32.totalorder %s14, 1
    %p46 = por %p44, %p45
    %p47 = scmp.ne.s32.totalorder %s36, %s37
    %p48 = scmp.eq.s32.totalorder %s14, 0
    %p49 = por %p47, %p48
    %p50 = scmp.ne.s32.totalorder %s36, %s37
    %p51 = scmp.eq.s32.totalorder %s15, 1
    %p52 = por %p50, %p51
    %p54 = scmp.ne.s32.totalorder %s37, %s53
    %p55 = scmp.eq.s32.totalorder %s15, 0
    %p56 = por %p54, %p55
    %s58 = sadd.s32 %s57, 1
    %p61 = scmp.eq.s32.totalorder %s9, 1
    %p62 = scmp.ne.s32.totalorder %s57, %s59
    %p63 = scmp.eq.s32.totalorder %s9, 0
    %p64 = por %p62, %p63
    %p65 = scmp.ne.s32.totalorder %s57, %s59
    %p66 = scmp.eq.s32.totalorder %s14, 1
    %p67 = por %p65, %p66
    %p68 = scmp.ne.s32.totalorder %s59, %s60
    %p69 = scmp.eq.s32.totalorder %s14, 0
    %p70 = por %p68, %p69
    %p71 = scmp.ne.s32.totalorder %s59, %s60
    %p72 = scmp.eq.s32.totalorder %s15, 1
    %p73 = por %p71, %p72
    %p75 = scmp.ne.s32.totalorder %s60, %s74
    %p76 = scmp.eq.s32.totalorder %s15, 0
    %p77 = por %p75, %p76
    %s79 = sadd.s32 %s78, 1
    %p82 = scmp.eq.s32.totalorder %s9, 1
    %p83 = scmp.ne.s32.totalorder %s78, %s80
    %p84 = scmp.eq.s32.totalorder %s9, 0
    %p85 = por %p83, %p84
    %p86 = scmp.ne.s32.totalorder %s78, %s80
    %p87 = scmp.eq.s32.totalorder %s14, 1
    %p88 = por %p86, %p87
    %p89 = scmp.ne.s32.totalorder %s80, %s81
    %p90 = scmp.eq.s32.totalorder %s14, 0
    %p91 = por %p89, %p90
    %p92 = scmp.ne.s32.totalorder %s80, %s81
    %p93 = scmp.eq.s32.totalorder %s15, 1
    %p94 = por %p92, %p93
    %p96 = scmp.ne.s32.totalorder %s81, %s95
    %p97 = scmp.eq.s32.totalorder %s15, 0
    %p98 = por %p96, %p97
    %s99 = ssub.s32 %s16, %s28
    %s100 = ssub.s32 %s17, %s24
    %s101 = sor.u32 %s99, %s100
    %p102 = scmp.eq.s32.totalorder %s101, 0
    %s104 = sadd.s32 %s103, 1
    %s105 = scalar_select %p102, %s103, %s104
    %p108 = pneg %p102
    %p109 = scmp.eq.s32.totalorder %s9, 1
    %p110 = por %p108, %p109
    %p111 = scmp.ne.s32.totalorder %s103, %s106
    %p112 = scmp.eq.s32.totalorder %s9, 0
    %p113 = por %p111, %p112
    %p114 = scmp.ne.s32.totalorder %s103, %s106
    %p115 = scmp.eq.s32.totalorder %s14, 1
    %p116 = por %p114, %p115
    %p117 = scmp.ne.s32.totalorder %s106, %s107
    %p118 = scmp.eq.s32.totalorder %s14, 0
    %p119 = por %p117, %p118
    %p120 = scmp.ne.s32.totalorder %s106, %s107
    %p121 = scmp.eq.s32.totalorder %s15, 1
    %p122 = por %p120, %p121
    %p124 = scmp.ne.s32.totalorder %s107, %s123
    %p125 = scmp.eq.s32.totalorder %s15, 0
    %p126 = por %p124, %p125
    %p127 = scmp.le.s32.totalorder 1, %s9
    %p128 = scmp.lt.s32.totalorder %s9, 3
    %p129 = pnand %p127, %p128
    %p130 = pneg %p129
    // Predicated region
    $region9: #{learned_soft_aggregate.1} parent=5 // pred_check
      _
    $region10: #{learned_soft_aggregate.1} parent=5 // pred_check_branch
      %132 = sbr.rel (%p129) target = $region12
    $region11: #{learned_soft_aggregate.1} parent=5 // pred_region
      %s133 = ssub.s32 %s9, 1
      // Predicated region
      $region13: #{learned_soft_aggregate.1} parent=11 // pred_check
        %p134 = pneg %p70
      $region14: #{learned_soft_aggregate.1} parent=11 // pred_check_branch
        %136 = sbr.rel (%p134) target = $region16
      $region15: #{learned_soft_aggregate.1} parent=11 // pred_region
        _
      $region16: #{learned_soft_aggregate.1} parent=11 // pred_fallthru
        _
      // Predicated region
      $region17: #{learned_soft_aggregate.1} parent=11 // pred_check
        %p137 = pneg %p91
      $region18: #{learned_soft_aggregate.1} parent=11 // pred_check_branch
        %139 = sbr.rel (%p137) target = $region20
      $region19: #{learned_soft_aggregate.1} parent=11 // pred_region
        _
      $region20: #{learned_soft_aggregate.1} parent=11 // pred_fallthru
        _
    $region12: #{learned_soft_aggregate.1} parent=5 // pred_fallthru
      _
    %p140 = scmp.lt.s32.totalorder %s9, 2
    // Predicated region
    $region21: #{learned_soft_aggregate.1} parent=5 // pred_check
      %p141 = pneg %p140
    $region22: #{learned_soft_aggregate.1} parent=5 // pred_check_branch
      %143 = sbr.rel (%p141) target = $region24
    $region23: #{learned_soft_aggregate.1} parent=5 // pred_region
      // Predicated region
      $region25: #{learned_soft_aggregate.1} parent=23 // pred_check
        %p144 = pneg %p43
      $region26: #{learned_soft_aggregate.1} parent=23 // pred_check_branch
        %146 = sbr.rel (%p144) target = $region28
      $region27: #{learned_soft_aggregate.1} parent=23 // pred_region
        %p147 = scmp.lt.s32.totalorder %s16, 1
        %s148 = scalar_select %p147, %s16, 1
        %p149 = scmp.lt.s32.totalorder %s17, 0
        %s150 = scalar_select %p149, %s17, 0
        %s151 = smul.addr %s148, 4
        %s152 = sadd.s32 %s150, %s151
        %s153 = smul.addr %s152, 4
        %s154 = scalar_lea.vmem %s0, %s153
      $region28: #{learned_soft_aggregate.1} parent=23 // pred_fallthru
        _
    $region24: #{learned_soft_aggregate.1} parent=5 // pred_fallthru
      _
    %p155 = scmp.le.s32.totalorder 1, %s9
    %p156 = scmp.lt.s32.totalorder %s9, 3
    %p157 = pnand %p155, %p156
    %p158 = pneg %p157
    // Predicated region
    $region29: #{learned_soft_aggregate.1} parent=5 // pred_check
      _
    $region30: #{learned_soft_aggregate.1} parent=5 // pred_check_branch
      %160 = sbr.rel (%p157) target = $region32
    $region31: #{learned_soft_aggregate.1} parent=5 // pred_region
      %s161 = ssub.s32 %s9, 1
      %p162 = scmp.lt.s32.totalorder %s18, 1
      %s163 = scalar_select %p162, %s18, 1
      %p164 = scmp.lt.s32.totalorder %s19, 0
      %s165 = scalar_select %p164, %s19, 0
      %s166 = smul.addr %s163, 4
      %s167 = sadd.s32 %s165, %s166
      %s168 = smul.addr %s167, 4
      %s169 = scalar_lea.vmem %s0, %s168
      %p170 = pneg %p49
      %p171 = pneg %p46
      %p172 = pneg %p70
      %p173 = pneg %p67
      %p174 = pneg %p91
      %p175 = pneg %p88
      %p176 = pneg %p119
      %p177 = pneg %p116
      %p178 = scmp.lt.s32.totalorder %s18, 1
      %s179 = scalar_select %p178, %s18, 1
      %p180 = scmp.lt.s32.totalorder %s19, 0
      %s181 = scalar_select %p180, %s19, 0
      %s182 = sadd.s32 %s181, %s179
      %s183 = smul.addr %s182, 4
      %s184 = scalar_lea.vmem %s3, %s183
      %p185 = scmp.lt.s32.totalorder %s18, 1
      %s186 = scalar_select %p185, %s18, 1
      %p187 = scmp.lt.s32.totalorder %s19, 0
      %s188 = scalar_select %p187, %s19, 0
      %s189 = smul.addr %s186, 4
      %s190 = sadd.s32 %s188, %s189
      %s191 = smul.addr %s190, 4
      %s192 = scalar_lea.vmem %s0, %s191
      %p193 = scmp.lt.s32.totalorder %s18, 1
      %s194 = scalar_select %p193, %s18, 1
      %p195 = scmp.lt.s32.totalorder %s19, 0
      %s196 = scalar_select %p195, %s19, 0
      %s197 = sadd.s32 %s196, %s194
      %s198 = smul.addr %s197, 4
      %s199 = scalar_lea.vmem %s3, %s198
      %v200 = vld [vmem:[%s1] sm:$0xff]
      %v201 = vld [vmem:[%s1 + $0x8] sm:$0xff]
      %v202 = vld [vmem:[%s1 + $0x10] sm:$0xff]
      %v203 = vld [vmem:[%s1 + $0x18] sm:$0xff]
      %v204 = vld [vmem:[%s1 + $0x20] sm:$0xff]
      %v205 = vld [vmem:[%s1 + $0x28] sm:$0xff]
      %v206 = vld [vmem:[%s1 + $0x30] sm:$0xff]
      %v207 = vld [vmem:[%s1 + $0x38] sm:$0xff]
      %v208 = vld [vmem:[%s1 + $0x40] sm:$0xff]
      %v209 = vld [vmem:[%s1 + $0x48] sm:$0xff]
      %v210 = vld [vmem:[%s1 + $0x50] sm:$0xff]
      %v211 = vld [vmem:[%s1 + $0x58] sm:$0xff]
      %v212 = vld [vmem:[%s1 + $0x60] sm:$0xff]
      %v213 = vld [vmem:[%s1 + $0x68] sm:$0xff]
      %v214 = vld [vmem:[%s1 + $0x70] sm:$0xff]
      %v215 = vld [vmem:[%s1 + $0x78] sm:$0xff]
      %v216 = vld [vmem:[%s2] sm:$0xf]
      %v217 = vld [vmem:[%s192] sm:$0xf]
      %218 = vmatprep.subr.mxu0 0.0
      %v219 = vand.u32 %v215, 4294901760
      %220 = vmatpush1.msra.mxu0 %v219
      %221 = vmatprep.subr.mxu0 0.0
      %v222 = vand.u32 %v214, 4294901760
      %223 = vmatpush1.msra.mxu0 %v222
      %224 = vmatprep.subr.mxu0 0.0
      %v225 = vand.u32 %v213, 4294901760
      %226 = vmatpush1.msra.mxu0 %v225
      %227 = vmatprep.subr.mxu0 0.0
      %v228 = vand.u32 %v212, 4294901760
      %229 = vmatpush1.msra.mxu0 %v228
      %230 = vmatprep.subr.mxu0 0.0
      %v231 = vand.u32 %v211, 4294901760
      %232 = vmatpush1.msra.mxu0 %v231
      %233 = vmatprep.subr.mxu0 0.0
      %v234 = vand.u32 %v210, 4294901760
      %235 = vmatpush1.msra.mxu0 %v234
      %236 = vmatprep.subr.mxu0 0.0
      %v237 = vand.u32 %v209, 4294901760
      %238 = vmatpush1.msra.mxu0 %v237
      %239 = vmatprep.subr.mxu0 0.0
      %v240 = vand.u32 %v208, 4294901760
      %241 = vmatpush1.msra.mxu0 %v240
      %242 = vmatprep.subr.mxu0 0.0
      %v243 = vand.u32 %v207, 4294901760
      %244 = vmatpush1.msra.mxu0 %v243
      %245 = vmatprep.subr.mxu0 0.0
      %v246 = vand.u32 %v206, 4294901760
      %247 = vmatpush1.msra.mxu0 %v246
      %248 = vmatprep.subr.mxu0 0.0
      %v249 = vand.u32 %v205, 4294901760
      %250 = vmatpush1.msra.mxu0 %v249
      %251 = vmatprep.subr.mxu0 0.0
      %v252 = vand.u32 %v204, 4294901760
      %253 = vmatpush1.msra.mxu0 %v252
      %254 = vmatprep.subr.mxu0 0.0
      %v255 = vand.u32 %v203, 4294901760
      %256 = vmatpush1.msra.mxu0 %v255
      %257 = vmatprep.subr.mxu0 0.0
      %v258 = vand.u32 %v202, 4294901760
      %259 = vmatpush1.msra.mxu0 %v258
      %260 = vmatprep.subr.mxu0 0.0
      %v261 = vand.u32 %v201, 4294901760
      %262 = vmatpush1.msra.mxu0 %v261
      %263 = vmatprep.subr.mxu0 0.0
      %v264 = vand.u32 %v200, 4294901760
      %265 = vmatpush1.msra.mxu0 %v264
      %266 = vmatprep.subr.mxu0 0.0
      %267 = vmatpush2.msra.mxu0 0.0
      %268 = vmatprep.subr.mxu0 0.0
      %269 = vmatpush2.msra.mxu0 0.0
      %270 = vmatprep.subr.mxu0 0.0
      %271 = vmatpush2.msra.mxu0 0.0
      %272 = vmatprep.subr.mxu0 0.0
      %273 = vmatpush2.msra.mxu0 0.0
      %274 = vmatprep.subr.mxu0 0.0
      %275 = vmatpush2.msra.mxu0 0.0
      %276 = vmatprep.subr.mxu0 0.0
      %277 = vmatpush2.msra.mxu0 0.0
      %278 = vmatprep.subr.mxu0 0.0
      %279 = vmatpush2.msra.mxu0 0.0
      %280 = vmatprep.subr.mxu0 0.0
      %281 = vmatpush2.msra.mxu0 0.0
      %282 = vmatprep.subr.mxu0 0.0
      %283 = vmatpush2.msra.mxu0 0.0
      %284 = vmatprep.subr.mxu0 0.0
      %285 = vmatpush2.msra.mxu0 0.0
      %286 = vmatprep.subr.mxu0 0.0
      %287 = vmatpush2.msra.mxu0 0.0
      %288 = vmatprep.subr.mxu0 0.0
      %289 = vmatpush2.msra.mxu0 0.0
      %290 = vmatprep.subr.mxu0 0.0
      %291 = vmatpush2.msra.mxu0 0.0
      %292 = vmatprep.subr.mxu0 0.0
      %293 = vmatpush2.msra.mxu0 0.0
      %294 = vmatprep.subr.mxu0 0.0
      %295 = vmatpush2.msra.mxu0 0.0
      %296 = vmatprep.subr.mxu0 0.0
      %297 = vmatpush2.msra.mxu0 0.0
      %298 = vmatprep.mubr.f32.mxu0 0.0
      %v299 = vand.u32 %v217, 4294901760
      %v300 = vsub.f32 %v217, %v299
      %v301 = vand.u32 %v300, 4294901760
      %v302 = vsub.f32 %v300, %v301
      %v303 = vand.u32 %v302, 4294901760
      %304 = vmatmul.mubr.f32.gmra.mxu0 %v303
      %v305 = vpop.f32.mrf.mxu0
      %v306 = vadd.f32 0.0, %v305
      %v307 = vpop.f32.mrf.mxu0
      %308 = vdwg.mxu0
      %309 = vmatprep.subr.mxu0 0.0
      %v310 = vand.u32 %v215, 4294901760
      %v311 = vsub.f32 %v215, %v310
      %v312 = vand.u32 %v311, 4294901760
      %v313 = vsub.f32 %v311, %v312
      %v314 = vand.u32 %v313, 4294901760
      %315 = vmatpush1.msra.mxu0 %v314
      %316 = vmatprep.subr.mxu0 0.0
      %v317 = vand.u32 %v214, 4294901760
      %v318 = vsub.f32 %v214, %v317
      %v319 = vand.u32 %v318, 4294901760
      %v320 = vsub.f32 %v318, %v319
      %v321 = vand.u32 %v320, 4294901760
      %322 = vmatpush1.msra.mxu0 %v321
      %323 = vmatprep.subr.mxu0 0.0
      %v324 = vand.u32 %v213, 4294901760
      %v325 = vsub.f32 %v213, %v324
      %v326 = vand.u32 %v325, 4294901760
      %v327 = vsub.f32 %v325, %v326
      %v328 = vand.u32 %v327, 4294901760
      %329 = vmatpush1.msra.mxu0 %v328
      %330 = vmatprep.subr.mxu0 0.0
      %v331 = vand.u32 %v212, 4294901760
      %v332 = vsub.f32 %v212, %v331
      %v333 = vand.u32 %v332, 4294901760
      %v334 = vsub.f32 %v332, %v333
      %v335 = vand.u32 %v334, 4294901760
      %336 = vmatpush1.msra.mxu0 %v335
      %337 = vmatprep.subr.mxu0 0.0
      %v338 = vand.u32 %v211, 4294901760
      %v339 = vsub.f32 %v211, %v338
      %v340 = vand.u32 %v339, 4294901760
      %v341 = vsub.f32 %v339, %v340
      %v342 = vand.u32 %v341, 4294901760
      %343 = vmatpush1.msra.mxu0 %v342
      %344 = vmatprep.subr.mxu0 0.0
      %v345 = vand.u32 %v210, 4294901760
      %v346 = vsub.f32 %v210, %v345
      %v347 = vand.u32 %v346, 4294901760
      %v348 = vsub.f32 %v346, %v347
      %v349 = vand.u32 %v348, 4294901760
      %350 = vmatpush1.msra.mxu0 %v349
      %351 = vmatprep.subr.mxu0 0.0
      %v352 = vand.u32 %v209, 4294901760
      %v353 = vsub.f32 %v209, %v352
      %v354 = vand.u32 %v353, 4294901760
      %v355 = vsub.f32 %v353, %v354
      %v356 = vand.u32 %v355, 4294901760
      %357 = vmatpush1.msra.mxu0 %v356
      %358 = vmatprep.subr.mxu0 0.0
      %v359 = vand.u32 %v208, 4294901760
      %v360 = vsub.f32 %v208, %v359
      %v361 = vand.u32 %v360, 4294901760
      %v362 = vsub.f32 %v360, %v361
      %v363 = vand.u32 %v362, 4294901760
      %364 = vmatpush1.msra.mxu0 %v363
      %365 = vmatprep.subr.mxu0 0.0
      %v366 = vand.u32 %v207, 4294901760
      %v367 = vsub.f32 %v207, %v366
      %v368 = vand.u32 %v367, 4294901760
      %v369 = vsub.f32 %v367, %v368
      %v370 = vand.u32 %v369, 4294901760
      %371 = vmatpush1.msra.mxu0 %v370
      %372 = vmatprep.subr.mxu0 0.0
      %v373 = vand.u32 %v206, 4294901760
      %v374 = vsub.f32 %v206, %v373
      %v375 = vand.u32 %v374, 4294901760
      %v376 = vsub.f32 %v374, %v375
      %v377 = vand.u32 %v376, 4294901760
      %378 = vmatpush1.msra.mxu0 %v377
      %379 = vmatprep.subr.mxu0 0.0
      %v380 = vand.u32 %v205, 4294901760
      %v381 = vsub.f32 %v205, %v380
      %v382 = vand.u32 %v381, 4294901760
      %v383 = vsub.f32 %v381, %v382
      %v384 = vand.u32 %v383, 4294901760
      %385 = vmatpush1.msra.mxu0 %v384
      %386 = vmatprep.subr.mxu0 0.0
      %v387 = vand.u32 %v204, 4294901760
      %v388 = vsub.f32 %v204, %v387
      %v389 = vand.u32 %v388, 4294901760
      %v390 = vsub.f32 %v388, %v389
      %v391 = vand.u32 %v390, 4294901760
      %392 = vmatpush1.msra.mxu0 %v391
      %393 = vmatprep.subr.mxu0 0.0
      %v394 = vand.u32 %v203, 4294901760
      %v395 = vsub.f32 %v203, %v394
      %v396 = vand.u32 %v395, 4294901760
      %v397 = vsub.f32 %v395, %v396
      %v398 = vand.u32 %v397, 4294901760
      %399 = vmatpush1.msra.mxu0 %v398
      %400 = vmatprep.subr.mxu0 0.0
      %v401 = vand.u32 %v202, 4294901760
      %v402 = vsub.f32 %v202, %v401
      %v403 = vand.u32 %v402, 4294901760
      %v404 = vsub.f32 %v402, %v403
      %v405 = vand.u32 %v404, 4294901760
      %406 = vmatpush1.msra.mxu0 %v405
      %407 = vmatprep.subr.mxu0 0.0
      %v408 = vand.u32 %v201, 4294901760
      %v409 = vsub.f32 %v201, %v408
      %v410 = vand.u32 %v409, 4294901760
      %v411 = vsub.f32 %v409, %v410
      %v412 = vand.u32 %v411, 4294901760
      %413 = vmatpush1.msra.mxu0 %v412
      %414 = vmatprep.subr.mxu0 0.0
      %v415 = vand.u32 %v200, 4294901760
      %v416 = vsub.f32 %v200, %v415
      %v417 = vand.u32 %v416, 4294901760
      %v418 = vsub.f32 %v416, %v417
      %v419 = vand.u32 %v418, 4294901760
      %420 = vmatpush1.msra.mxu0 %v419
      %421 = vmatprep.subr.mxu0 0.0
      %422 = vmatpush2.msra.mxu0 0.0
      %423 = vmatprep.subr.mxu0 0.0
      %424 = vmatpush2.msra.mxu0 0.0
      %425 = vmatprep.subr.mxu0 0.0
      %426 = vmatpush2.msra.mxu0 0.0
      %427 = vmatprep.subr.mxu0 0.0
      %428 = vmatpush2.msra.mxu0 0.0
      %429 = vmatprep.subr.mxu0 0.0
      %430 = vmatpush2.msra.mxu0 0.0
      %431 = vmatprep.subr.mxu0 0.0
      %432 = vmatpush2.msra.mxu0 0.0
      %433 = vmatprep.subr.mxu0 0.0
      %434 = vmatpush2.msra.mxu0 0.0
      %435 = vmatprep.subr.mxu0 0.0
      %436 = vmatpush2.msra.mxu0 0.0
      %437 = vmatprep.subr.mxu0 0.0
      %438 = vmatpush2.msra.mxu0 0.0
      %439 = vmatprep.subr.mxu0 0.0
      %440 = vmatpush2.msra.mxu0 0.0
      %441 = vmatprep.subr.mxu0 0.0
      %442 = vmatpush2.msra.mxu0 0.0
      %443 = vmatprep.subr.mxu0 0.0
      %444 = vmatpush2.msra.mxu0 0.0
      %445 = vmatprep.subr.mxu0 0.0
      %446 = vmatpush2.msra.mxu0 0.0
      %447 = vmatprep.subr.mxu0 0.0
      %448 = vmatpush2.msra.mxu0 0.0
      %449 = vmatprep.subr.mxu0 0.0
      %450 = vmatpush2.msra.mxu0 0.0
      %451 = vmatprep.subr.mxu0 0.0
      %452 = vmatpush2.msra.mxu0 0.0
      %453 = vmatprep.mubr.f32.mxu0 0.0
      %v454 = vand.u32 %v217, 4294901760
      %455 = vmatmul.mubr.f32.gmra.mxu0 %v454
      %v456 = vpop.f32.mrf.mxu0
      %v457 = vadd.f32 %v306, %v456
      %v458 = vpop.f32.mrf.mxu0
      %459 = vdwg.mxu0
      %460 = vmatprep.subr.mxu0 0.0
      %v461 = vand.u32 %v215, 4294901760
      %v462 = vsub.f32 %v215, %v461
      %463 = vmatpush1.msra.mxu0 %v462
      %464 = vmatprep.subr.mxu0 0.0
      %v465 = vand.u32 %v214, 4294901760
      %v466 = vsub.f32 %v214, %v465
      %467 = vmatpush1.msra.mxu0 %v466
      %468 = vmatprep.subr.mxu0 0.0
      %v469 = vand.u32 %v213, 4294901760
      %v470 = vsub.f32 %v213, %v469
      %471 = vmatpush1.msra.mxu0 %v470
      %472 = vmatprep.subr.mxu0 0.0
      %v473 = vand.u32 %v212, 4294901760
      %v474 = vsub.f32 %v212, %v473
      %475 = vmatpush1.msra.mxu0 %v474
      %476 = vmatprep.subr.mxu0 0.0
      %v477 = vand.u32 %v211, 4294901760
      %v478 = vsub.f32 %v211, %v477
      %479 = vmatpush1.msra.mxu0 %v478
      %480 = vmatprep.subr.mxu0 0.0
      %v481 = vand.u32 %v210, 4294901760
      %v482 = vsub.f32 %v210, %v481
      %483 = vmatpush1.msra.mxu0 %v482
      %484 = vmatprep.subr.mxu0 0.0
      %v485 = vand.u32 %v209, 4294901760
      %v486 = vsub.f32 %v209, %v485
      %487 = vmatpush1.msra.mxu0 %v486
      %488 = vmatprep.subr.mxu0 0.0
      %v489 = vand.u32 %v208, 4294901760
      %v490 = vsub.f32 %v208, %v489
      %491 = vmatpush1.msra.mxu0 %v490
      %492 = vmatprep.subr.mxu0 0.0
      %v493 = vand.u32 %v207, 4294901760
      %v494 = vsub.f32 %v207, %v493
      %495 = vmatpush1.msra.mxu0 %v494
      %496 = vmatprep.subr.mxu0 0.0
      %v497 = vand.u32 %v206, 4294901760
      %v498 = vsub.f32 %v206, %v497
      %499 = vmatpush1.msra.mxu0 %v498
      %500 = vmatprep.subr.mxu0 0.0
      %v501 = vand.u32 %v205, 4294901760
      %v502 = vsub.f32 %v205, %v501
      %503 = vmatpush1.msra.mxu0 %v502
      %504 = vmatprep.subr.mxu0 0.0
      %v505 = vand.u32 %v204, 4294901760
      %v506 = vsub.f32 %v204, %v505
      %507 = vmatpush1.msra.mxu0 %v506
      %508 = vmatprep.subr.mxu0 0.0
      %v509 = vand.u32 %v203, 4294901760
      %v510 = vsub.f32 %v203, %v509
      %511 = vmatpush1.msra.mxu0 %v510
      %512 = vmatprep.subr.mxu0 0.0
      %v513 = vand.u32 %v202, 4294901760
      %v514 = vsub.f32 %v202, %v513
      %515 = vmatpush1.msra.mxu0 %v514
      %516 = vmatprep.subr.mxu0 0.0
      %v517 = vand.u32 %v201, 4294901760
      %v518 = vsub.f32 %v201, %v517
      %519 = vmatpush1.msra.mxu0 %v518
      %520 = vmatprep.subr.mxu0 0.0
      %v521 = vand.u32 %v200, 4294901760
      %v522 = vsub.f32 %v200, %v521
      %523 = vmatpush1.msra.mxu0 %v522
      %524 = vmatprep.subr.mxu0 0.0
      %525 = vmatpush2.msra.mxu0 0.0
      %526 = vmatprep.subr.mxu0 0.0
      %527 = vmatpush2.msra.mxu0 0.0
      %528 = vmatprep.subr.mxu0 0.0
      %529 = vmatpush2.msra.mxu0 0.0
      %530 = vmatprep.subr.mxu0 0.0
      %531 = vmatpush2.msra.mxu0 0.0
      %532 = vmatprep.subr.mxu0 0.0
      %533 = vmatpush2.msra.mxu0 0.0
      %534 = vmatprep.subr.mxu0 0.0
      %535 = vmatpush2.msra.mxu0 0.0
      %536 = vmatprep.subr.mxu0 0.0
      %537 = vmatpush2.msra.mxu0 0.0
      %538 = vmatprep.subr.mxu0 0.0
      %539 = vmatpush2.msra.mxu0 0.0
      %540 = vmatprep.subr.mxu0 0.0
      %541 = vmatpush2.msra.mxu0 0.0
      %542 = vmatprep.subr.mxu0 0.0
      %543 = vmatpush2.msra.mxu0 0.0
      %544 = vmatprep.subr.mxu0 0.0
      %545 = vmatpush2.msra.mxu0 0.0
      %546 = vmatprep.subr.mxu0 0.0
      %547 = vmatpush2.msra.mxu0 0.0
      %548 = vmatprep.subr.mxu0 0.0
      %549 = vmatpush2.msra.mxu0 0.0
      %550 = vmatprep.subr.mxu0 0.0
      %551 = vmatpush2.msra.mxu0 0.0
      %552 = vmatprep.subr.mxu0 0.0
      %553 = vmatpush2.msra.mxu0 0.0
      %554 = vmatprep.subr.mxu0 0.0
      %555 = vmatpush2.msra.mxu0 0.0
      %556 = vmatprep.mubr.f32.mxu0 0.0
      %v557 = vand.u32 %v217, 4294901760
      %v558 = vsub.f32 %v217, %v557
      %559 = vmatmul.mubr.f32.gmra.mxu0 %v558
      %v560 = vpop.f32.mrf.mxu0
      %v561 = vadd.f32 %v457, %v560
      %v562 = vpop.f32.mrf.mxu0
      %563 = vdwg.mxu0
      %564 = vmatprep.subr.mxu0 0.0
      %v565 = vand.u32 %v215, 4294901760
      %566 = vmatpush1.msra.mxu0 %v565
      %567 = vmatprep.subr.mxu0 0.0
      %v568 = vand.u32 %v214, 4294901760
      %569 = vmatpush1.msra.mxu0 %v568
      %570 = vmatprep.subr.mxu0 0.0
      %v571 = vand.u32 %v213, 4294901760
      %572 = vmatpush1.msra.mxu0 %v571
      %573 = vmatprep.subr.mxu0 0.0
      %v574 = vand.u32 %v212, 4294901760
      %575 = vmatpush1.msra.mxu0 %v574
      %576 = vmatprep.subr.mxu0 0.0
      %v577 = vand.u32 %v211, 4294901760
      %578 = vmatpush1.msra.mxu0 %v577
      %579 = vmatprep.subr.mxu0 0.0
      %v580 = vand.u32 %v210, 4294901760
      %581 = vmatpush1.msra.mxu0 %v580
      %582 = vmatprep.subr.mxu0 0.0
      %v583 = vand.u32 %v209, 4294901760
      %584 = vmatpush1.msra.mxu0 %v583
      %585 = vmatprep.subr.mxu0 0.0
      %v586 = vand.u32 %v208, 4294901760
      %587 = vmatpush1.msra.mxu0 %v586
      %588 = vmatprep.subr.mxu0 0.0
      %v589 = vand.u32 %v207, 4294901760
      %590 = vmatpush1.msra.mxu0 %v589
      %591 = vmatprep.subr.mxu0 0.0
      %v592 = vand.u32 %v206, 4294901760
      %593 = vmatpush1.msra.mxu0 %v592
      %594 = vmatprep.subr.mxu0 0.0
      %v595 = vand.u32 %v205, 4294901760
      %596 = vmatpush1.msra.mxu0 %v595
      %597 = vmatprep.subr.mxu0 0.0
      %v598 = vand.u32 %v204, 4294901760
      %599 = vmatpush1.msra.mxu0 %v598
      %600 = vmatprep.subr.mxu0 0.0
      %v601 = vand.u32 %v203, 4294901760
      %602 = vmatpush1.msra.mxu0 %v601
      %603 = vmatprep.subr.mxu0 0.0
      %v604 = vand.u32 %v202, 4294901760
      %605 = vmatpush1.msra.mxu0 %v604
      %606 = vmatprep.subr.mxu0 0.0
      %v607 = vand.u32 %v201, 4294901760
      %608 = vmatpush1.msra.mxu0 %v607
      %609 = vmatprep.subr.mxu0 0.0
      %v610 = vand.u32 %v200, 4294901760
      %611 = vmatpush1.msra.mxu0 %v610
      %612 = vmatprep.subr.mxu0 0.0
      %613 = vmatpush2.msra.mxu0 0.0
      %614 = vmatprep.subr.mxu0 0.0
      %615 = vmatpush2.msra.mxu0 0.0
      %616 = vmatprep.subr.mxu0 0.0
      %617 = vmatpush2.msra.mxu0 0.0
      %618 = vmatprep.subr.mxu0 0.0
      %619 = vmatpush2.msra.mxu0 0.0
      %620 = vmatprep.subr.mxu0 0.0
      %621 = vmatpush2.msra.mxu0 0.0
      %622 = vmatprep.subr.mxu0 0.0
      %623 = vmatpush2.msra.mxu0 0.0
      %624 = vmatprep.subr.mxu0 0.0
      %625 = vmatpush2.msra.mxu0 0.0
      %626 = vmatprep.subr.mxu0 0.0
      %627 = vmatpush2.msra.mxu0 0.0
      %628 = vmatprep.subr.mxu0 0.0
      %629 = vmatpush2.msra.mxu0 0.0
      %630 = vmatprep.subr.mxu0 0.0
      %631 = vmatpush2.msra.mxu0 0.0
      %632 = vmatprep.subr.mxu0 0.0
      %633 = vmatpush2.msra.mxu0 0.0
      %634 = vmatprep.subr.mxu0 0.0
      %635 = vmatpush2.msra.mxu0 0.0
      %636 = vmatprep.subr.mxu0 0.0
      %637 = vmatpush2.msra.mxu0 0.0
      %638 = vmatprep.subr.mxu0 0.0
      %639 = vmatpush2.msra.mxu0 0.0
      %640 = vmatprep.subr.mxu0 0.0
      %641 = vmatpush2.msra.mxu0 0.0
      %642 = vmatprep.subr.mxu0 0.0
      %643 = vmatpush2.msra.mxu0 0.0
      %644 = vmatprep.mubr.f32.mxu0 0.0
      %v645 = vand.u32 %v217, 4294901760
      %v646 = vsub.f32 %v217, %v645
      %v647 = vand.u32 %v646, 4294901760
      %648 = vmatmul.mubr.f32.gmra.mxu0 %v647
      %v649 = vpop.f32.mrf.mxu0
      %v650 = vadd.f32 %v561, %v649
      %v651 = vpop.f32.mrf.mxu0
      %652 = vdwg.mxu0
      %653 = vmatprep.subr.mxu0 0.0
      %v654 = vand.u32 %v215, 4294901760
      %v655 = vsub.f32 %v215, %v654
      %v656 = vand.u32 %v655, 4294901760
      %657 = vmatpush1.msra.mxu0 %v656
      %658 = vmatprep.subr.mxu0 0.0
      %v659 = vand.u32 %v214, 4294901760
      %v660 = vsub.f32 %v214, %v659
      %v661 = vand.u32 %v660, 4294901760
      %662 = vmatpush1.msra.mxu0 %v661
      %663 = vmatprep.subr.mxu0 0.0
      %v664 = vand.u32 %v213, 4294901760
      %v665 = vsub.f32 %v213, %v664
      %v666 = vand.u32 %v665, 4294901760
      %667 = vmatpush1.msra.mxu0 %v666
      %668 = vmatprep.subr.mxu0 0.0
      %v669 = vand.u32 %v212, 4294901760
      %v670 = vsub.f32 %v212, %v669
      %v671 = vand.u32 %v670, 4294901760
      %672 = vmatpush1.msra.mxu0 %v671
      %673 = vmatprep.subr.mxu0 0.0
      %v674 = vand.u32 %v211, 4294901760
      %v675 = vsub.f32 %v211, %v674
      %v676 = vand.u32 %v675, 4294901760
      %677 = vmatpush1.msra.mxu0 %v676
      %678 = vmatprep.subr.mxu0 0.0
      %v679 = vand.u32 %v210, 4294901760
      %v680 = vsub.f32 %v210, %v679
      %v681 = vand.u32 %v680, 4294901760
      %682 = vmatpush1.msra.mxu0 %v681
      %683 = vmatprep.subr.mxu0 0.0
      %v684 = vand.u32 %v209, 4294901760
      %v685 = vsub.f32 %v209, %v684
      %v686 = vand.u32 %v685, 4294901760
      %687 = vmatpush1.msra.mxu0 %v686
      %688 = vmatprep.subr.mxu0 0.0
      %v689 = vand.u32 %v208, 4294901760
      %v690 = vsub.f32 %v208, %v689
      %v691 = vand.u32 %v690, 4294901760
      %692 = vmatpush1.msra.mxu0 %v691
      %693 = vmatprep.subr.mxu0 0.0
      %v694 = vand.u32 %v207, 4294901760
      %v695 = vsub.f32 %v207, %v694
      %v696 = vand.u32 %v695, 4294901760
      %697 = vmatpush1.msra.mxu0 %v696
      %698 = vmatprep.subr.mxu0 0.0
      %v699 = vand.u32 %v206, 4294901760
      %v700 = vsub.f32 %v206, %v699
      %v701 = vand.u32 %v700, 4294901760
      %702 = vmatpush1.msra.mxu0 %v701
      %703 = vmatprep.subr.mxu0 0.0
      %v704 = vand.u32 %v205, 4294901760
      %v705 = vsub.f32 %v205, %v704
      %v706 = vand.u32 %v705, 4294901760
      %707 = vmatpush1.msra.mxu0 %v706
      %708 = vmatprep.subr.mxu0 0.0
      %v709 = vand.u32 %v204, 4294901760
      %v710 = vsub.f32 %v204, %v709
      %v711 = vand.u32 %v710, 4294901760
      %712 = vmatpush1.msra.mxu0 %v711
      %713 = vmatprep.subr.mxu0 0.0
      %v714 = vand.u32 %v203, 4294901760
      %v715 = vsub.f32 %v203, %v714
      %v716 = vand.u32 %v715, 4294901760
      %717 = vmatpush1.msra.mxu0 %v716
      %718 = vmatprep.subr.mxu0 0.0
      %v719 = vand.u32 %v202, 4294901760
      %v720 = vsub.f32 %v202, %v719
      %v721 = vand.u32 %v720, 4294901760
      %722 = vmatpush1.msra.mxu0 %v721
      %723 = vmatprep.subr.mxu0 0.0
      %v724 = vand.u32 %v201, 4294901760
      %v725 = vsub.f32 %v201, %v724
      %v726 = vand.u32 %v725, 4294901760
      %727 = vmatpush1.msra.mxu0 %v726
      %728 = vmatprep.subr.mxu0 0.0
      %v729 = vand.u32 %v200, 4294901760
      %v730 = vsub.f32 %v200, %v729
      %v731 = vand.u32 %v730, 4294901760
      %732 = vmatpush1.msra.mxu0 %v731
      %733 = vmatprep.subr.mxu0 0.0
      %734 = vmatpush2.msra.mxu0 0.0
      %735 = vmatprep.subr.mxu0 0.0
      %736 = vmatpush2.msra.mxu0 0.0
      %737 = vmatprep.subr.mxu0 0.0
      %738 = vmatpush2.msra.mxu0 0.0
      %739 = vmatprep.subr.mxu0 0.0
      %740 = vmatpush2.msra.mxu0 0.0
      %741 = vmatprep.subr.mxu0 0.0
      %742 = vmatpush2.msra.mxu0 0.0
      %743 = vmatprep.subr.mxu0 0.0
      %744 = vmatpush2.msra.mxu0 0.0
      %745 = vmatprep.subr.mxu0 0.0
      %746 = vmatpush2.msra.mxu0 0.0
      %747 = vmatprep.subr.mxu0 0.0
      %748 = vmatpush2.msra.mxu0 0.0
      %749 = vmatprep.subr.mxu0 0.0
      %750 = vmatpush2.msra.mxu0 0.0
      %751 = vmatprep.subr.mxu0 0.0
      %752 = vmatpush2.msra.mxu0 0.0
      %753 = vmatprep.subr.mxu0 0.0
      %754 = vmatpush2.msra.mxu0 0.0
      %755 = vmatprep.subr.mxu0 0.0
      %756 = vmatpush2.msra.mxu0 0.0
      %757 = vmatprep.subr.mxu0 0.0
      %758 = vmatpush2.msra.mxu0 0.0
      %759 = vmatprep.subr.mxu0 0.0
      %760 = vmatpush2.msra.mxu0 0.0
      %761 = vmatprep.subr.mxu0 0.0
      %762 = vmatpush2.msra.mxu0 0.0
      %763 = vmatprep.subr.mxu0 0.0
      %764 = vmatpush2.msra.mxu0 0.0
      %765 = vmatprep.mubr.f32.mxu0 0.0
      %v766 = vand.u32 %v217, 4294901760
      %767 = vmatmul.mubr.f32.gmra.mxu0 %v766
      %v768 = vpop.f32.mrf.mxu0
      %v769 = vadd.f32 %v650, %v768
      %v770 = vpop.f32.mrf.mxu0
      %771 = vdwg.mxu0
      %772 = vmatprep.subr.mxu0 0.0
      %v773 = vand.u32 %v215, 4294901760
      %774 = vmatpush1.msra.mxu0 %v773
      %775 = vmatprep.subr.mxu0 0.0
      %v776 = vand.u32 %v214, 4294901760
      %777 = vmatpush1.msra.mxu0 %v776
      %778 = vmatprep.subr.mxu0 0.0
      %v779 = vand.u32 %v213, 4294901760
      %780 = vmatpush1.msra.mxu0 %v779
      %781 = vmatprep.subr.mxu0 0.0
      %v782 = vand.u32 %v212, 4294901760
      %783 = vmatpush1.msra.mxu0 %v782
      %784 = vmatprep.subr.mxu0 0.0
      %v785 = vand.u32 %v211, 4294901760
      %786 = vmatpush1.msra.mxu0 %v785
      %787 = vmatprep.subr.mxu0 0.0
      %v788 = vand.u32 %v210, 4294901760
      %789 = vmatpush1.msra.mxu0 %v788
      %790 = vmatprep.subr.mxu0 0.0
      %v791 = vand.u32 %v209, 4294901760
      %792 = vmatpush1.msra.mxu0 %v791
      %793 = vmatprep.subr.mxu0 0.0
      %v794 = vand.u32 %v208, 4294901760
      %795 = vmatpush1.msra.mxu0 %v794
      %796 = vmatprep.subr.mxu0 0.0
      %v797 = vand.u32 %v207, 4294901760
      %798 = vmatpush1.msra.mxu0 %v797
      %799 = vmatprep.subr.mxu0 0.0
      %v800 = vand.u32 %v206, 4294901760
      %801 = vmatpush1.msra.mxu0 %v800
      %802 = vmatprep.subr.mxu0 0.0
      %v803 = vand.u32 %v205, 4294901760
      %804 = vmatpush1.msra.mxu0 %v803
      %805 = vmatprep.subr.mxu0 0.0
      %v806 = vand.u32 %v204, 4294901760
      %807 = vmatpush1.msra.mxu0 %v806
      %808 = vmatprep.subr.mxu0 0.0
      %v809 = vand.u32 %v203, 4294901760
      %810 = vmatpush1.msra.mxu0 %v809
      %811 = vmatprep.subr.mxu0 0.0
      %v812 = vand.u32 %v202, 4294901760
      %813 = vmatpush1.msra.mxu0 %v812
      %814 = vmatprep.subr.mxu0 0.0
      %v815 = vand.u32 %v201, 4294901760
      %816 = vmatpush1.msra.mxu0 %v815
      %817 = vmatprep.subr.mxu0 0.0
      %v818 = vand.u32 %v200, 4294901760
      %819 = vmatpush1.msra.mxu0 %v818
      %820 = vmatprep.subr.mxu0 0.0
      %821 = vmatpush2.msra.mxu0 0.0
      %822 = vmatprep.subr.mxu0 0.0
      %823 = vmatpush2.msra.mxu0 0.0
      %824 = vmatprep.subr.mxu0 0.0
      %825 = vmatpush2.msra.mxu0 0.0
      %826 = vmatprep.subr.mxu0 0.0
      %827 = vmatpush2.msra.mxu0 0.0
      %828 = vmatprep.subr.mxu0 0.0
      %829 = vmatpush2.msra.mxu0 0.0
      %830 = vmatprep.subr.mxu0 0.0
      %831 = vmatpush2.msra.mxu0 0.0
      %832 = vmatprep.subr.mxu0 0.0
      %833 = vmatpush2.msra.mxu0 0.0
      %834 = vmatprep.subr.mxu0 0.0
      %835 = vmatpush2.msra.mxu0 0.0
      %836 = vmatprep.subr.mxu0 0.0
      %837 = vmatpush2.msra.mxu0 0.0
      %838 = vmatprep.subr.mxu0 0.0
      %839 = vmatpush2.msra.mxu0 0.0
      %840 = vmatprep.subr.mxu0 0.0
      %841 = vmatpush2.msra.mxu0 0.0
      %842 = vmatprep.subr.mxu0 0.0
      %843 = vmatpush2.msra.mxu0 0.0
      %844 = vmatprep.subr.mxu0 0.0
      %845 = vmatpush2.msra.mxu0 0.0
      %846 = vmatprep.subr.mxu0 0.0
      %847 = vmatpush2.msra.mxu0 0.0
      %848 = vmatprep.subr.mxu0 0.0
      %849 = vmatpush2.msra.mxu0 0.0
      %850 = vmatprep.subr.mxu0 0.0
      %851 = vmatpush2.msra.mxu0 0.0
      %852 = vmatprep.mubr.f32.mxu0 0.0
      %v853 = vand.u32 %v217, 4294901760
      %854 = vmatmul.mubr.f32.gmra.mxu0 %v853
      %v855 = vpop.f32.mrf.mxu0
      %v856 = vadd.f32 %v769, %v855
      %v857 = vpop.f32.mrf.mxu0
      %858 = vdwg.mxu0
      %s859 = scalar_lea.vmem %s192, 4
      %v860 = vld [vmem:[%s859] sm:$0xf]
      %861 = vmatprep.subr.mxu0 0.0
      %v862 = vand.u32 %v215, 4294901760
      %863 = vmatpush1.msra.mxu0 %v862
      %864 = vmatprep.subr.mxu0 0.0
      %v865 = vand.u32 %v214, 4294901760
      %866 = vmatpush1.msra.mxu0 %v865
      %867 = vmatprep.subr.mxu0 0.0
      %v868 = vand.u32 %v213, 4294901760
      %869 = vmatpush1.msra.mxu0 %v868
      %870 = vmatprep.subr.mxu0 0.0
      %v871 = vand.u32 %v212, 4294901760
      %872 = vmatpush1.msra.mxu0 %v871
      %873 = vmatprep.subr.mxu0 0.0
      %v874 = vand.u32 %v211, 4294901760
      %875 = vmatpush1.msra.mxu0 %v874
      %876 = vmatprep.subr.mxu0 0.0
      %v877 = vand.u32 %v210, 4294901760
      %878 = vmatpush1.msra.mxu0 %v877
      %879 = vmatprep.subr.mxu0 0.0
      %v880 = vand.u32 %v209, 4294901760
      %881 = vmatpush1.msra.mxu0 %v880
      %882 = vmatprep.subr.mxu0 0.0
      %v883 = vand.u32 %v208, 4294901760
      %884 = vmatpush1.msra.mxu0 %v883
      %885 = vmatprep.subr.mxu0 0.0
      %v886 = vand.u32 %v207, 4294901760
      %887 = vmatpush1.msra.mxu0 %v886
      %888 = vmatprep.subr.mxu0 0.0
      %v889 = vand.u32 %v206, 4294901760
      %890 = vmatpush1.msra.mxu0 %v889
      %891 = vmatprep.subr.mxu0 0.0
      %v892 = vand.u32 %v205, 4294901760
      %893 = vmatpush1.msra.mxu0 %v892
      %894 = vmatprep.subr.mxu0 0.0
      %v895 = vand.u32 %v204, 4294901760
      %896 = vmatpush1.msra.mxu0 %v895
      %897 = vmatprep.subr.mxu0 0.0
      %v898 = vand.u32 %v203, 4294901760
      %899 = vmatpush1.msra.mxu0 %v898
      %900 = vmatprep.subr.mxu0 0.0
      %v901 = vand.u32 %v202, 4294901760
      %902 = vmatpush1.msra.mxu0 %v901
      %903 = vmatprep.subr.mxu0 0.0
      %v904 = vand.u32 %v201, 4294901760
      %905 = vmatpush1.msra.mxu0 %v904
      %906 = vmatprep.subr.mxu0 0.0
      %v907 = vand.u32 %v200, 4294901760
      %908 = vmatpush1.msra.mxu0 %v907
      %909 = vmatprep.subr.mxu0 0.0
      %910 = vmatpush2.msra.mxu0 0.0
      %911 = vmatprep.subr.mxu0 0.0
      %912 = vmatpush2.msra.mxu0 0.0
      %913 = vmatprep.subr.mxu0 0.0
      %914 = vmatpush2.msra.mxu0 0.0
      %915 = vmatprep.subr.mxu0 0.0
      %916 = vmatpush2.msra.mxu0 0.0
      %917 = vmatprep.subr.mxu0 0.0
      %918 = vmatpush2.msra.mxu0 0.0
      %919 = vmatprep.subr.mxu0 0.0
      %920 = vmatpush2.msra.mxu0 0.0
      %921 = vmatprep.subr.mxu0 0.0
      %922 = vmatpush2.msra.mxu0 0.0
      %923 = vmatprep.subr.mxu0 0.0
      %924 = vmatpush2.msra.mxu0 0.0
      %925 = vmatprep.subr.mxu0 0.0
      %926 = vmatpush2.msra.mxu0 0.0
      %927 = vmatprep.subr.mxu0 0.0
      %928 = vmatpush2.msra.mxu0 0.0
      %929 = vmatprep.subr.mxu0 0.0
      %930 = vmatpush2.msra.mxu0 0.0
      %931 = vmatprep.subr.mxu0 0.0
      %932 = vmatpush2.msra.mxu0 0.0
      %933 = vmatprep.subr.mxu0 0.0
      %934 = vmatpush2.msra.mxu0 0.0
      %935 = vmatprep.subr.mxu0 0.0
      %936 = vmatpush2.msra.mxu0 0.0
      %937 = vmatprep.subr.mxu0 0.0
      %938 = vmatpush2.msra.mxu0 0.0
      %939 = vmatprep.subr.mxu0 0.0
      %940 = vmatpush2.msra.mxu0 0.0
      %941 = vmatprep.mubr.f32.mxu0 0.0
      %v942 = vand.u32 %v860, 4294901760
      %v943 = vsub.f32 %v860, %v942
      %v944 = vand.u32 %v943, 4294901760
      %v945 = vsub.f32 %v943, %v944
      %v946 = vand.u32 %v945, 4294901760
      %947 = vmatmul.mubr.f32.gmra.mxu0 %v946
      %v948 = vpop.f32.mrf.mxu0
      %v949 = vadd.f32 0.0, %v948
      %v950 = vpop.f32.mrf.mxu0
      %951 = vdwg.mxu0
      %952 = vmatprep.subr.mxu0 0.0
      %v953 = vand.u32 %v215, 4294901760
      %v954 = vsub.f32 %v215, %v953
      %v955 = vand.u32 %v954, 4294901760
      %v956 = vsub.f32 %v954, %v955
      %v957 = vand.u32 %v956, 4294901760
      %958 = vmatpush1.msra.mxu0 %v957
      %959 = vmatprep.subr.mxu0 0.0
      %v960 = vand.u32 %v214, 4294901760
      %v961 = vsub.f32 %v214, %v960
      %v962 = vand.u32 %v961, 4294901760
      %v963 = vsub.f32 %v961, %v962
      %v964 = vand.u32 %v963, 4294901760
      %965 = vmatpush1.msra.mxu0 %v964
      %966 = vmatprep.subr.mxu0 0.0
      %v967 = vand.u32 %v213, 4294901760
      %v968 = vsub.f32 %v213, %v967
      %v969 = vand.u32 %v968, 4294901760
      %v970 = vsub.f32 %v968, %v969
      %v971 = vand.u32 %v970, 4294901760
      %972 = vmatpush1.msra.mxu0 %v971
      %973 = vmatprep.subr.mxu0 0.0
      %v974 = vand.u32 %v212, 4294901760
      %v975 = vsub.f32 %v212, %v974
      %v976 = vand.u32 %v975, 4294901760
      %v977 = vsub.f32 %v975, %v976
      %v978 = vand.u32 %v977, 4294901760
      %979 = vmatpush1.msra.mxu0 %v978
      %980 = vmatprep.subr.mxu0 0.0
      %v981 = vand.u32 %v211, 4294901760
      %v982 = vsub.f32 %v211, %v981
      %v983 = vand.u32 %v982, 4294901760
      %v984 = vsub.f32 %v982, %v983
      %v985 = vand.u32 %v984, 4294901760
      %986 = vmatpush1.msra.mxu0 %v985
      %987 = vmatprep.subr.mxu0 0.0
      %v988 = vand.u32 %v210, 4294901760
      %v989 = vsub.f32 %v210, %v988
      %v990 = vand.u32 %v989, 4294901760
      %v991 = vsub.f32 %v989, %v990
      %v992 = vand.u32 %v991, 4294901760
      %993 = vmatpush1.msra.mxu0 %v992
      %994 = vmatprep.subr.mxu0 0.0
      %v995 = vand.u32 %v209, 4294901760
      %v996 = vsub.f32 %v209, %v995
      %v997 = vand.u32 %v996, 4294901760
      %v998 = vsub.f32 %v996, %v997
      %v999 = vand.u32 %v998, 4294901760
      %1000 = vmatpush1.msra.mxu0 %v999
      %1001 = vmatprep.subr.mxu0 0.0
      %v1002 = vand.u32 %v208, 4294901760
      %v1003 = vsub.f32 %v208, %v1002
      %v1004 = vand.u32 %v1003, 4294901760
      %v1005 = vsub.f32 %v1003, %v1004
      %v1006 = vand.u32 %v1005, 4294901760
      %1007 = vmatpush1.msra.mxu0 %v1006
      %1008 = vmatprep.subr.mxu0 0.0
      %v1009 = vand.u32 %v207, 4294901760
      %v1010 = vsub.f32 %v207, %v1009
      %v1011 = vand.u32 %v1010, 4294901760
      %v1012 = vsub.f32 %v1010, %v1011
      %v1013 = vand.u32 %v1012, 4294901760
      %1014 = vmatpush1.msra.mxu0 %v1013
      %1015 = vmatprep.subr.mxu0 0.0
      %v1016 = vand.u32 %v206, 4294901760
      %v1017 = vsub.f32 %v206, %v1016
      %v1018 = vand.u32 %v1017, 4294901760
      %v1019 = vsub.f32 %v1017, %v1018
      %v1020 = vand.u32 %v1019, 4294901760
      %1021 = vmatpush1.msra.mxu0 %v1020
      %1022 = vmatprep.subr.mxu0 0.0
      %v1023 = vand.u32 %v205, 4294901760
      %v1024 = vsub.f32 %v205, %v1023
      %v1025 = vand.u32 %v1024, 4294901760
      %v1026 = vsub.f32 %v1024, %v1025
      %v1027 = vand.u32 %v1026, 4294901760
      %1028 = vmatpush1.msra.mxu0 %v1027
      %1029 = vmatprep.subr.mxu0 0.0
      %v1030 = vand.u32 %v204, 4294901760
      %v1031 = vsub.f32 %v204, %v1030
      %v1032 = vand.u32 %v1031, 4294901760
      %v1033 = vsub.f32 %v1031, %v1032
      %v1034 = vand.u32 %v1033, 4294901760
      %1035 = vmatpush1.msra.mxu0 %v1034
      %1036 = vmatprep.subr.mxu0 0.0
      %v1037 = vand.u32 %v203, 4294901760
      %v1038 = vsub.f32 %v203, %v1037
      %v1039 = vand.u32 %v1038, 4294901760
      %v1040 = vsub.f32 %v1038, %v1039
      %v1041 = vand.u32 %v1040, 4294901760
      %1042 = vmatpush1.msra.mxu0 %v1041
      %1043 = vmatprep.subr.mxu0 0.0
      %v1044 = vand.u32 %v202, 4294901760
      %v1045 = vsub.f32 %v202, %v1044
      %v1046 = vand.u32 %v1045, 4294901760
      %v1047 = vsub.f32 %v1045, %v1046
      %v1048 = vand.u32 %v1047, 4294901760
      %1049 = vmatpush1.msra.mxu0 %v1048
      %1050 = vmatprep.subr.mxu0 0.0
      %v1051 = vand.u32 %v201, 4294901760
      %v1052 = vsub.f32 %v201, %v1051
      %v1053 = vand.u32 %v1052, 4294901760
      %v1054 = vsub.f32 %v1052, %v1053
      %v1055 = vand.u32 %v1054, 4294901760
      %1056 = vmatpush1.msra.mxu0 %v1055
      %1057 = vmatprep.subr.mxu0 0.0
      %v1058 = vand.u32 %v200, 4294901760
      %v1059 = vsub.f32 %v200, %v1058
      %v1060 = vand.u32 %v1059, 4294901760
      %v1061 = vsub.f32 %v1059, %v1060
      %v1062 = vand.u32 %v1061, 4294901760
      %1063 = vmatpush1.msra.mxu0 %v1062
      %1064 = vmatprep.subr.mxu0 0.0
      %1065 = vmatpush2.msra.mxu0 0.0
      %1066 = vmatprep.subr.mxu0 0.0
      %1067 = vmatpush2.msra.mxu0 0.0
      %1068 = vmatprep.subr.mxu0 0.0
      %1069 = vmatpush2.msra.mxu0 0.0
      %1070 = vmatprep.subr.mxu0 0.0
      %1071 = vmatpush2.msra.mxu0 0.0
      %1072 = vmatprep.subr.mxu0 0.0
      %1073 = vmatpush2.msra.mxu0 0.0
      %1074 = vmatprep.subr.mxu0 0.0
      %1075 = vmatpush2.msra.mxu0 0.0
      %1076 = vmatprep.subr.mxu0 0.0
      %1077 = vmatpush2.msra.mxu0 0.0
      %1078 = vmatprep.subr.mxu0 0.0
      %1079 = vmatpush2.msra.mxu0 0.0
      %1080 = vmatprep.subr.mxu0 0.0
      %1081 = vmatpush2.msra.mxu0 0.0
      %1082 = vmatprep.subr.mxu0 0.0
      %1083 = vmatpush2.msra.mxu0 0.0
      %1084 = vmatprep.subr.mxu0 0.0
      %1085 = vmatpush2.msra.mxu0 0.0
      %1086 = vmatprep.subr.mxu0 0.0
      %1087 = vmatpush2.msra.mxu0 0.0
      %1088 = vmatprep.subr.mxu0 0.0
      %1089 = vmatpush2.msra.mxu0 0.0
      %1090 = vmatprep.subr.mxu0 0.0
      %1091 = vmatpush2.msra.mxu0 0.0
      %1092 = vmatprep.subr.mxu0 0.0
      %1093 = vmatpush2.msra.mxu0 0.0
      %1094 = vmatprep.subr.mxu0 0.0
      %1095 = vmatpush2.msra.mxu0 0.0
      %1096 = vmatprep.mubr.f32.mxu0 0.0
      %v1097 = vand.u32 %v860, 4294901760
      %1098 = vmatmul.mubr.f32.gmra.mxu0 %v1097
      %v1099 = vpop.f32.mrf.mxu0
      %v1100 = vadd.f32 %v949, %v1099
      %v1101 = vpop.f32.mrf.mxu0
      %1102 = vdwg.mxu0
      %1103 = vmatprep.subr.mxu0 0.0
      %v1104 = vand.u32 %v215, 4294901760
      %v1105 = vsub.f32 %v215, %v1104
      %1106 = vmatpush1.msra.mxu0 %v1105
      %1107 = vmatprep.subr.mxu0 0.0
      %v1108 = vand.u32 %v214, 4294901760
      %v1109 = vsub.f32 %v214, %v1108
      %1110 = vmatpush1.msra.mxu0 %v1109
      %1111 = vmatprep.subr.mxu0 0.0
      %v1112 = vand.u32 %v213, 4294901760
      %v1113 = vsub.f32 %v213, %v1112
      %1114 = vmatpush1.msra.mxu0 %v1113
      %1115 = vmatprep.subr.mxu0 0.0
      %v1116 = vand.u32 %v212, 4294901760
      %v1117 = vsub.f32 %v212, %v1116
      %1118 = vmatpush1.msra.mxu0 %v1117
      %1119 = vmatprep.subr.mxu0 0.0
      %v1120 = vand.u32 %v211, 4294901760
      %v1121 = vsub.f32 %v211, %v1120
      %1122 = vmatpush1.msra.mxu0 %v1121
      %1123 = vmatprep.subr.mxu0 0.0
      %v1124 = vand.u32 %v210, 4294901760
      %v1125 = vsub.f32 %v210, %v1124
      %1126 = vmatpush1.msra.mxu0 %v1125
      %1127 = vmatprep.subr.mxu0 0.0
      %v1128 = vand.u32 %v209, 4294901760
      %v1129 = vsub.f32 %v209, %v1128
      %1130 = vmatpush1.msra.mxu0 %v1129
      %1131 = vmatprep.subr.mxu0 0.0
      %v1132 = vand.u32 %v208, 4294901760
      %v1133 = vsub.f32 %v208, %v1132
      %1134 = vmatpush1.msra.mxu0 %v1133
      %1135 = vmatprep.subr.mxu0 0.0
      %v1136 = vand.u32 %v207, 4294901760
      %v1137 = vsub.f32 %v207, %v1136
      %1138 = vmatpush1.msra.mxu0 %v1137
      %1139 = vmatprep.subr.mxu0 0.0
      %v1140 = vand.u32 %v206, 4294901760
      %v1141 = vsub.f32 %v206, %v1140
      %1142 = vmatpush1.msra.mxu0 %v1141
      %1143 = vmatprep.subr.mxu0 0.0
      %v1144 = vand.u32 %v205, 4294901760
      %v1145 = vsub.f32 %v205, %v1144
      %1146 = vmatpush1.msra.mxu0 %v1145
      %1147 = vmatprep.subr.mxu0 0.0
      %v1148 = vand.u32 %v204, 4294901760
      %v1149 = vsub.f32 %v204, %v1148
      %1150 = vmatpush1.msra.mxu0 %v1149
      %1151 = vmatprep.subr.mxu0 0.0
      %v1152 = vand.u32 %v203, 4294901760
      %v1153 = vsub.f32 %v203, %v1152
      %1154 = vmatpush1.msra.mxu0 %v1153
      %1155 = vmatprep.subr.mxu0 0.0
      %v1156 = vand.u32 %v202, 4294901760
      %v1157 = vsub.f32 %v202, %v1156
      %1158 = vmatpush1.msra.mxu0 %v1157
      %1159 = vmatprep.subr.mxu0 0.0
      %v1160 = vand.u32 %v201, 4294901760
      %v1161 = vsub.f32 %v201, %v1160
      %1162 = vmatpush1.msra.mxu0 %v1161
      %1163 = vmatprep.subr.mxu0 0.0
      %v1164 = vand.u32 %v200, 4294901760
      %v1165 = vsub.f32 %v200, %v1164
      %1166 = vmatpush1.msra.mxu0 %v1165
      %1167 = vmatprep.subr.mxu0 0.0
      %1168 = vmatpush2.msra.mxu0 0.0
      %1169 = vmatprep.subr.mxu0 0.0
      %1170 = vmatpush2.msra.mxu0 0.0
      %1171 = vmatprep.subr.mxu0 0.0
      %1172 = vmatpush2.msra.mxu0 0.0
      %1173 = vmatprep.subr.mxu0 0.0
      %1174 = vmatpush2.msra.mxu0 0.0
      %1175 = vmatprep.subr.mxu0 0.0
      %1176 = vmatpush2.msra.mxu0 0.0
      %1177 = vmatprep.subr.mxu0 0.0
      %1178 = vmatpush2.msra.mxu0 0.0
      %1179 = vmatprep.subr.mxu0 0.0
      %1180 = vmatpush2.msra.mxu0 0.0
      %1181 = vmatprep.subr.mxu0 0.0
      %1182 = vmatpush2.msra.mxu0 0.0
      %1183 = vmatprep.subr.mxu0 0.0
      %1184 = vmatpush2.msra.mxu0 0.0
      %1185 = vmatprep.subr.mxu0 0.0
      %1186 = vmatpush2.msra.mxu0 0.0
      %1187 = vmatprep.subr.mxu0 0.0
      %1188 = vmatpush2.msra.mxu0 0.0
      %1189 = vmatprep.subr.mxu0 0.0
      %1190 = vmatpush2.msra.mxu0 0.0
      %1191 = vmatprep.subr.mxu0 0.0
      %1192 = vmatpush2.msra.mxu0 0.0
      %1193 = vmatprep.subr.mxu0 0.0
      %1194 = vmatpush2.msra.mxu0 0.0
      %1195 = vmatprep.subr.mxu0 0.0
      %1196 = vmatpush2.msra.mxu0 0.0
      %1197 = vmatprep.subr.mxu0 0.0
      %1198 = vmatpush2.msra.mxu0 0.0
      %1199 = vmatprep.mubr.f32.mxu0 0.0
      %v1200 = vand.u32 %v860, 4294901760
      %v1201 = vsub.f32 %v860, %v1200
      %1202 = vmatmul.mubr.f32.gmra.mxu0 %v1201
      %v1203 = vpop.f32.mrf.mxu0
      %v1204 = vadd.f32 %v1100, %v1203
      %v1205 = vpop.f32.mrf.mxu0
      %1206 = vdwg.mxu0
      %1207 = vmatprep.subr.mxu0 0.0
      %v1208 = vand.u32 %v215, 4294901760
      %1209 = vmatpush1.msra.mxu0 %v1208
      %1210 = vmatprep.subr.mxu0 0.0
      %v1211 = vand.u32 %v214, 4294901760
      %1212 = vmatpush1.msra.mxu0 %v1211
      %1213 = vmatprep.subr.mxu0 0.0
      %v1214 = vand.u32 %v213, 4294901760
      %1215 = vmatpush1.msra.mxu0 %v1214
      %1216 = vmatprep.subr.mxu0 0.0
      %v1217 = vand.u32 %v212, 4294901760
      %1218 = vmatpush1.msra.mxu0 %v1217
      %1219 = vmatprep.subr.mxu0 0.0
      %v1220 = vand.u32 %v211, 4294901760
      %1221 = vmatpush1.msra.mxu0 %v1220
      %1222 = vmatprep.subr.mxu0 0.0
      %v1223 = vand.u32 %v210, 4294901760
      %1224 = vmatpush1.msra.mxu0 %v1223
      %1225 = vmatprep.subr.mxu0 0.0
      %v1226 = vand.u32 %v209, 4294901760
      %1227 = vmatpush1.msra.mxu0 %v1226
      %1228 = vmatprep.subr.mxu0 0.0
      %v1229 = vand.u32 %v208, 4294901760
      %1230 = vmatpush1.msra.mxu0 %v1229
      %1231 = vmatprep.subr.mxu0 0.0
      %v1232 = vand.u32 %v207, 4294901760
      %1233 = vmatpush1.msra.mxu0 %v1232
      %1234 = vmatprep.subr.mxu0 0.0
      %v1235 = vand.u32 %v206, 4294901760
      %1236 = vmatpush1.msra.mxu0 %v1235
      %1237 = vmatprep.subr.mxu0 0.0
      %v1238 = vand.u32 %v205, 4294901760
      %1239 = vmatpush1.msra.mxu0 %v1238
      %1240 = vmatprep.subr.mxu0 0.0
      %v1241 = vand.u32 %v204, 4294901760
      %1242 = vmatpush1.msra.mxu0 %v1241
      %1243 = vmatprep.subr.mxu0 0.0
      %v1244 = vand.u32 %v203, 4294901760
      %1245 = vmatpush1.msra.mxu0 %v1244
      %1246 = vmatprep.subr.mxu0 0.0
      %v1247 = vand.u32 %v202, 4294901760
      %1248 = vmatpush1.msra.mxu0 %v1247
      %1249 = vmatprep.subr.mxu0 0.0
      %v1250 = vand.u32 %v201, 4294901760
      %1251 = vmatpush1.msra.mxu0 %v1250
      %1252 = vmatprep.subr.mxu0 0.0
      %v1253 = vand.u32 %v200, 4294901760
      %1254 = vmatpush1.msra.mxu0 %v1253
      %1255 = vmatprep.subr.mxu0 0.0
      %1256 = vmatpush2.msra.mxu0 0.0
      %1257 = vmatprep.subr.mxu0 0.0
      %1258 = vmatpush2.msra.mxu0 0.0
      %1259 = vmatprep.subr.mxu0 0.0
      %1260 = vmatpush2.msra.mxu0 0.0
      %1261 = vmatprep.subr.mxu0 0.0
      %1262 = vmatpush2.msra.mxu0 0.0
      %1263 = vmatprep.subr.mxu0 0.0
      %1264 = vmatpush2.msra.mxu0 0.0
      %1265 = vmatprep.subr.mxu0 0.0
      %1266 = vmatpush2.msra.mxu0 0.0
      %1267 = vmatprep.subr.mxu0 0.0
      %1268 = vmatpush2.msra.mxu0 0.0
      %1269 = vmatprep.subr.mxu0 0.0
      %1270 = vmatpush2.msra.mxu0 0.0
      %1271 = vmatprep.subr.mxu0 0.0
      %1272 = vmatpush2.msra.mxu0 0.0
      %1273 = vmatprep.subr.mxu0 0.0
      %1274 = vmatpush2.msra.mxu0 0.0
      %1275 = vmatprep.subr.mxu0 0.0
      %1276 = vmatpush2.msra.mxu0 0.0
      %1277 = vmatprep.subr.mxu0 0.0
      %1278 = vmatpush2.msra.mxu0 0.0
      %1279 = vmatprep.subr.mxu0 0.0
      %1280 = vmatpush2.msra.mxu0 0.0
      %1281 = vmatprep.subr.mxu0 0.0
      %1282 = vmatpush2.msra.mxu0 0.0
      %1283 = vmatprep.subr.mxu0 0.0
      %1284 = vmatpush2.msra.mxu0 0.0
      %1285 = vmatprep.subr.mxu0 0.0
      %1286 = vmatpush2.msra.mxu0 0.0
      %1287 = vmatprep.mubr.f32.mxu0 0.0
      %v1288 = vand.u32 %v860, 4294901760
      %v1289 = vsub.f32 %v860, %v1288
      %v1290 = vand.u32 %v1289, 4294901760
      %1291 = vmatmul.mubr.f32.gmra.mxu0 %v1290
      %v1292 = vpop.f32.mrf.mxu0
      %v1293 = vadd.f32 %v1204, %v1292
      %v1294 = vpop.f32.mrf.mxu0
      %1295 = vdwg.mxu0
      %1296 = vmatprep.subr.mxu0 0.0
      %v1297 = vand.u32 %v215, 4294901760
      %v1298 = vsub.f32 %v215, %v1297
      %v1299 = vand.u32 %v1298, 4294901760
      %1300 = vmatpush1.msra.mxu0 %v1299
      %1301 = vmatprep.subr.mxu0 0.0
      %v1302 = vand.u32 %v214, 4294901760
      %v1303 = vsub.f32 %v214, %v1302
      %v1304 = vand.u32 %v1303, 4294901760
      %1305 = vmatpush1.msra.mxu0 %v1304
      %1306 = vmatprep.subr.mxu0 0.0
      %v1307 = vand.u32 %v213, 4294901760
      %v1308 = vsub.f32 %v213, %v1307
      %v1309 = vand.u32 %v1308, 4294901760
      %1310 = vmatpush1.msra.mxu0 %v1309
      %1311 = vmatprep.subr.mxu0 0.0
      %v1312 = vand.u32 %v212, 4294901760
      %v1313 = vsub.f32 %v212, %v1312
      %v1314 = vand.u32 %v1313, 4294901760
      %1315 = vmatpush1.msra.mxu0 %v1314
      %1316 = vmatprep.subr.mxu0 0.0
      %v1317 = vand.u32 %v211, 4294901760
      %v1318 = vsub.f32 %v211, %v1317
      %v1319 = vand.u32 %v1318, 4294901760
      %1320 = vmatpush1.msra.mxu0 %v1319
      %1321 = vmatprep.subr.mxu0 0.0
      %v1322 = vand.u32 %v210, 4294901760
      %v1323 = vsub.f32 %v210, %v1322
      %v1324 = vand.u32 %v1323, 4294901760
      %1325 = vmatpush1.msra.mxu0 %v1324
      %1326 = vmatprep.subr.mxu0 0.0
      %v1327 = vand.u32 %v209, 4294901760
      %v1328 = vsub.f32 %v209, %v1327
      %v1329 = vand.u32 %v1328, 4294901760
      %1330 = vmatpush1.msra.mxu0 %v1329
      %1331 = vmatprep.subr.mxu0 0.0
      %v1332 = vand.u32 %v208, 4294901760
      %v1333 = vsub.f32 %v208, %v1332
      %v1334 = vand.u32 %v1333, 4294901760
      %1335 = vmatpush1.msra.mxu0 %v1334
      %1336 = vmatprep.subr.mxu0 0.0
      %v1337 = vand.u32 %v207, 4294901760
      %v1338 = vsub.f32 %v207, %v1337
      %v1339 = vand.u32 %v1338, 4294901760
      %1340 = vmatpush1.msra.mxu0 %v1339
      %1341 = vmatprep.subr.mxu0 0.0
      %v1342 = vand.u32 %v206, 4294901760
      %v1343 = vsub.f32 %v206, %v1342
      %v1344 = vand.u32 %v1343, 4294901760
      %1345 = vmatpush1.msra.mxu0 %v1344
      %1346 = vmatprep.subr.mxu0 0.0
      %v1347 = vand.u32 %v205, 4294901760
      %v1348 = vsub.f32 %v205, %v1347
      %v1349 = vand.u32 %v1348, 4294901760
      %1350 = vmatpush1.msra.mxu0 %v1349
      %1351 = vmatprep.subr.mxu0 0.0
      %v1352 = vand.u32 %v204, 4294901760
      %v1353 = vsub.f32 %v204, %v1352
      %v1354 = vand.u32 %v1353, 4294901760
      %1355 = vmatpush1.msra.mxu0 %v1354
      %1356 = vmatprep.subr.mxu0 0.0
      %v1357 = vand.u32 %v203, 4294901760
      %v1358 = vsub.f32 %v203, %v1357
      %v1359 = vand.u32 %v1358, 4294901760
      %1360 = vmatpush1.msra.mxu0 %v1359
      %1361 = vmatprep.subr.mxu0 0.0
      %v1362 = vand.u32 %v202, 4294901760
      %v1363 = vsub.f32 %v202, %v1362
      %v1364 = vand.u32 %v1363, 4294901760
      %1365 = vmatpush1.msra.mxu0 %v1364
      %1366 = vmatprep.subr.mxu0 0.0
      %v1367 = vand.u32 %v201, 4294901760
      %v1368 = vsub.f32 %v201, %v1367
      %v1369 = vand.u32 %v1368, 4294901760
      %1370 = vmatpush1.msra.mxu0 %v1369
      %1371 = vmatprep.subr.mxu0 0.0
      %v1372 = vand.u32 %v200, 4294901760
      %v1373 = vsub.f32 %v200, %v1372
      %v1374 = vand.u32 %v1373, 4294901760
      %1375 = vmatpush1.msra.mxu0 %v1374
      %1376 = vmatprep.subr.mxu0 0.0
      %1377 = vmatpush2.msra.mxu0 0.0
      %1378 = vmatprep.subr.mxu0 0.0
      %1379 = vmatpush2.msra.mxu0 0.0
      %1380 = vmatprep.subr.mxu0 0.0
      %1381 = vmatpush2.msra.mxu0 0.0
      %1382 = vmatprep.subr.mxu0 0.0
      %1383 = vmatpush2.msra.mxu0 0.0
      %1384 = vmatprep.subr.mxu0 0.0
      %1385 = vmatpush2.msra.mxu0 0.0
      %1386 = vmatprep.subr.mxu0 0.0
      %1387 = vmatpush2.msra.mxu0 0.0
      %1388 = vmatprep.subr.mxu0 0.0
      %1389 = vmatpush2.msra.mxu0 0.0
      %1390 = vmatprep.subr.mxu0 0.0
      %1391 = vmatpush2.msra.mxu0 0.0
      %1392 = vmatprep.subr.mxu0 0.0
      %1393 = vmatpush2.msra.mxu0 0.0
      %1394 = vmatprep.subr.mxu0 0.0
      %1395 = vmatpush2.msra.mxu0 0.0
      %1396 = vmatprep.subr.mxu0 0.0
      %1397 = vmatpush2.msra.mxu0 0.0
      %1398 = vmatprep.subr.mxu0 0.0
      %1399 = vmatpush2.msra.mxu0 0.0
      %1400 = vmatprep.subr.mxu0 0.0
      %1401 = vmatpush2.msra.mxu0 0.0
      %1402 = vmatprep.subr.mxu0 0.0
      %1403 = vmatpush2.msra.mxu0 0.0
      %1404 = vmatprep.subr.mxu0 0.0
      %1405 = vmatpush2.msra.mxu0 0.0
      %1406 = vmatprep.subr.mxu0 0.0
      %1407 = vmatpush2.msra.mxu0 0.0
      %1408 = vmatprep.mubr.f32.mxu0 0.0
      %v1409 = vand.u32 %v860, 4294901760
      %1410 = vmatmul.mubr.f32.gmra.mxu0 %v1409
      %v1411 = vpop.f32.mrf.mxu0
      %v1412 = vadd.f32 %v1293, %v1411
      %v1413 = vpop.f32.mrf.mxu0
      %1414 = vdwg.mxu0
      %1415 = vmatprep.subr.mxu0 0.0
      %v1416 = vand.u32 %v215, 4294901760
      %1417 = vmatpush1.msra.mxu0 %v1416
      %1418 = vmatprep.subr.mxu0 0.0
      %v1419 = vand.u32 %v214, 4294901760
      %1420 = vmatpush1.msra.mxu0 %v1419
      %1421 = vmatprep.subr.mxu0 0.0
      %v1422 = vand.u32 %v213, 4294901760
      %1423 = vmatpush1.msra.mxu0 %v1422
      %1424 = vmatprep.subr.mxu0 0.0
      %v1425 = vand.u32 %v212, 4294901760
      %1426 = vmatpush1.msra.mxu0 %v1425
      %1427 = vmatprep.subr.mxu0 0.0
      %v1428 = vand.u32 %v211, 4294901760
      %1429 = vmatpush1.msra.mxu0 %v1428
      %1430 = vmatprep.subr.mxu0 0.0
      %v1431 = vand.u32 %v210, 4294901760
      %1432 = vmatpush1.msra.mxu0 %v1431
      %1433 = vmatprep.subr.mxu0 0.0
      %v1434 = vand.u32 %v209, 4294901760
      %1435 = vmatpush1.msra.mxu0 %v1434
      %1436 = vmatprep.subr.mxu0 0.0
      %v1437 = vand.u32 %v208, 4294901760
      %1438 = vmatpush1.msra.mxu0 %v1437
      %1439 = vmatprep.subr.mxu0 0.0
      %v1440 = vand.u32 %v207, 4294901760
      %1441 = vmatpush1.msra.mxu0 %v1440
      %1442 = vmatprep.subr.mxu0 0.0
      %v1443 = vand.u32 %v206, 4294901760
      %1444 = vmatpush1.msra.mxu0 %v1443
      %1445 = vmatprep.subr.mxu0 0.0
      %v1446 = vand.u32 %v205, 4294901760
      %1447 = vmatpush1.msra.mxu0 %v1446
      %1448 = vmatprep.subr.mxu0 0.0
      %v1449 = vand.u32 %v204, 4294901760
      %1450 = vmatpush1.msra.mxu0 %v1449
      %1451 = vmatprep.subr.mxu0 0.0
      %v1452 = vand.u32 %v203, 4294901760
      %1453 = vmatpush1.msra.mxu0 %v1452
      %1454 = vmatprep.subr.mxu0 0.0
      %v1455 = vand.u32 %v202, 4294901760
      %1456 = vmatpush1.msra.mxu0 %v1455
      %1457 = vmatprep.subr.mxu0 0.0
      %v1458 = vand.u32 %v201, 4294901760
      %1459 = vmatpush1.msra.mxu0 %v1458
      %1460 = vmatprep.subr.mxu0 0.0
      %v1461 = vand.u32 %v200, 4294901760
      %1462 = vmatpush1.msra.mxu0 %v1461
      %1463 = vmatprep.subr.mxu0 0.0
      %1464 = vmatpush2.msra.mxu0 0.0
      %1465 = vmatprep.subr.mxu0 0.0
      %1466 = vmatpush2.msra.mxu0 0.0
      %1467 = vmatprep.subr.mxu0 0.0
      %1468 = vmatpush2.msra.mxu0 0.0
      %1469 = vmatprep.subr.mxu0 0.0
      %1470 = vmatpush2.msra.mxu0 0.0
      %1471 = vmatprep.subr.mxu0 0.0
      %1472 = vmatpush2.msra.mxu0 0.0
      %1473 = vmatprep.subr.mxu0 0.0
      %1474 = vmatpush2.msra.mxu0 0.0
      %1475 = vmatprep.subr.mxu0 0.0
      %1476 = vmatpush2.msra.mxu0 0.0
      %1477 = vmatprep.subr.mxu0 0.0
      %1478 = vmatpush2.msra.mxu0 0.0
      %1479 = vmatprep.subr.mxu0 0.0
      %1480 = vmatpush2.msra.mxu0 0.0
      %1481 = vmatprep.subr.mxu0 0.0
      %1482 = vmatpush2.msra.mxu0 0.0
      %1483 = vmatprep.subr.mxu0 0.0
      %1484 = vmatpush2.msra.mxu0 0.0
      %1485 = vmatprep.subr.mxu0 0.0
      %1486 = vmatpush2.msra.mxu0 0.0
      %1487 = vmatprep.subr.mxu0 0.0
      %1488 = vmatpush2.msra.mxu0 0.0
      %1489 = vmatprep.subr.mxu0 0.0
      %1490 = vmatpush2.msra.mxu0 0.0
      %1491 = vmatprep.subr.mxu0 0.0
      %1492 = vmatpush2.msra.mxu0 0.0
      %1493 = vmatprep.subr.mxu0 0.0
      %1494 = vmatpush2.msra.mxu0 0.0
      %1495 = vmatprep.mubr.f32.mxu0 0.0
      %v1496 = vand.u32 %v860, 4294901760
      %1497 = vmatmul.mubr.f32.gmra.mxu0 %v1496
      %v1498 = vpop.f32.mrf.mxu0
      %v1499 = vadd.f32 %v1412, %v1498
      %v1500 = vpop.f32.mrf.mxu0
      %1501 = vdwg.mxu0
      %s1502 = scalar_lea.vmem %s192, 8
      %v1503 = vld [vmem:[%s1502] sm:$0xf]
      %1504 = vmatprep.subr.mxu0 0.0
      %v1505 = vand.u32 %v215, 4294901760
      %1506 = vmatpush1.msra.mxu0 %v1505
      %1507 = vmatprep.subr.mxu0 0.0
      %v1508 = vand.u32 %v214, 4294901760
      %1509 = vmatpush1.msra.mxu0 %v1508
      %1510 = vmatprep.subr.mxu0 0.0
      %v1511 = vand.u32 %v213, 4294901760
      %1512 = vmatpush1.msra.mxu0 %v1511
      %1513 = vmatprep.subr.mxu0 0.0
      %v1514 = vand.u32 %v212, 4294901760
      %1515 = vmatpush1.msra.mxu0 %v1514
      %1516 = vmatprep.subr.mxu0 0.0
      %v1517 = vand.u32 %v211, 4294901760
      %1518 = vmatpush1.msra.mxu0 %v1517
      %1519 = vmatprep.subr.mxu0 0.0
      %v1520 = vand.u32 %v210, 4294901760
      %1521 = vmatpush1.msra.mxu0 %v1520
      %1522 = vmatprep.subr.mxu0 0.0
      %v1523 = vand.u32 %v209, 4294901760
      %1524 = vmatpush1.msra.mxu0 %v1523
      %1525 = vmatprep.subr.mxu0 0.0
      %v1526 = vand.u32 %v208, 4294901760
      %1527 = vmatpush1.msra.mxu0 %v1526
      %1528 = vmatprep.subr.mxu0 0.0
      %v1529 = vand.u32 %v207, 4294901760
      %1530 = vmatpush1.msra.mxu0 %v1529
      %1531 = vmatprep.subr.mxu0 0.0
      %v1532 = vand.u32 %v206, 4294901760
      %1533 = vmatpush1.msra.mxu0 %v1532
      %1534 = vmatprep.subr.mxu0 0.0
      %v1535 = vand.u32 %v205, 4294901760
      %1536 = vmatpush1.msra.mxu0 %v1535
      %1537 = vmatprep.subr.mxu0 0.0
      %v1538 = vand.u32 %v204, 4294901760
      %1539 = vmatpush1.msra.mxu0 %v1538
      %1540 = vmatprep.subr.mxu0 0.0
      %v1541 = vand.u32 %v203, 4294901760
      %1542 = vmatpush1.msra.mxu0 %v1541
      %1543 = vmatprep.subr.mxu0 0.0
      %v1544 = vand.u32 %v202, 4294901760
      %1545 = vmatpush1.msra.mxu0 %v1544
      %1546 = vmatprep.subr.mxu0 0.0
      %v1547 = vand.u32 %v201, 4294901760
      %1548 = vmatpush1.msra.mxu0 %v1547
      %1549 = vmatprep.subr.mxu0 0.0
      %v1550 = vand.u32 %v200, 4294901760
      %1551 = vmatpush1.msra.mxu0 %v1550
      %1552 = vmatprep.subr.mxu0 0.0
      %1553 = vmatpush2.msra.mxu0 0.0
      %1554 = vmatprep.subr.mxu0 0.0
      %1555 = vmatpush2.msra.mxu0 0.0
      %1556 = vmatprep.subr.mxu0 0.0
      %1557 = vmatpush2.msra.mxu0 0.0
      %1558 = vmatprep.subr.mxu0 0.0
      %1559 = vmatpush2.msra.mxu0 0.0
      %1560 = vmatprep.subr.mxu0 0.0
      %1561 = vmatpush2.msra.mxu0 0.0
      %1562 = vmatprep.subr.mxu0 0.0
      %1563 = vmatpush2.msra.mxu0 0.0
      %1564 = vmatprep.subr.mxu0 0.0
      %1565 = vmatpush2.msra.mxu0 0.0
      %1566 = vmatprep.subr.mxu0 0.0
      %1567 = vmatpush2.msra.mxu0 0.0
      %1568 = vmatprep.subr.mxu0 0.0
      %1569 = vmatpush2.msra.mxu0 0.0
      %1570 = vmatprep.subr.mxu0 0.0
      %1571 = vmatpush2.msra.mxu0 0.0
      %1572 = vmatprep.subr.mxu0 0.0
      %1573 = vmatpush2.msra.mxu0 0.0
      %1574 = vmatprep.subr.mxu0 0.0
      %1575 = vmatpush2.msra.mxu0 0.0
      %1576 = vmatprep.subr.mxu0 0.0
      %1577 = vmatpush2.msra.mxu0 0.0
      %1578 = vmatprep.subr.mxu0 0.0
      %1579 = vmatpush2.msra.mxu0 0.0
      %1580 = vmatprep.subr.mxu0 0.0
      %1581 = vmatpush2.msra.mxu0 0.0
      %1582 = vmatprep.subr.mxu0 0.0
      %1583 = vmatpush2.msra.mxu0 0.0
      %1584 = vmatprep.mubr.f32.mxu0 0.0
      %v1585 = vand.u32 %v1503, 4294901760
      %v1586 = vsub.f32 %v1503, %v1585
      %v1587 = vand.u32 %v1586, 4294901760
      %v1588 = vsub.f32 %v1586, %v1587
      %v1589 = vand.u32 %v1588, 4294901760
      %1590 = vmatmul.mubr.f32.gmra.mxu0 %v1589
      %v1591 = vpop.f32.mrf.mxu0
      %v1592 = vadd.f32 0.0, %v1591
      %v1593 = vpop.f32.mrf.mxu0
      %1594 = vdwg.mxu0
      %1595 = vmatprep.subr.mxu0 0.0
      %v1596 = vand.u32 %v215, 4294901760
      %v1597 = vsub.f32 %v215, %v1596
      %v1598 = vand.u32 %v1597, 4294901760
      %v1599 = vsub.f32 %v1597, %v1598
      %v1600 = vand.u32 %v1599, 4294901760
      %1601 = vmatpush1.msra.mxu0 %v1600
      %1602 = vmatprep.subr.mxu0 0.0
      %v1603 = vand.u32 %v214, 4294901760
      %v1604 = vsub.f32 %v214, %v1603
      %v1605 = vand.u32 %v1604, 4294901760
      %v1606 = vsub.f32 %v1604, %v1605
      %v1607 = vand.u32 %v1606, 4294901760
      %1608 = vmatpush1.msra.mxu0 %v1607
      %1609 = vmatprep.subr.mxu0 0.0
      %v1610 = vand.u32 %v213, 4294901760
      %v1611 = vsub.f32 %v213, %v1610
      %v1612 = vand.u32 %v1611, 4294901760
      %v1613 = vsub.f32 %v1611, %v1612
      %v1614 = vand.u32 %v1613, 4294901760
      %1615 = vmatpush1.msra.mxu0 %v1614
      %1616 = vmatprep.subr.mxu0 0.0
      %v1617 = vand.u32 %v212, 4294901760
      %v1618 = vsub.f32 %v212, %v1617
      %v1619 = vand.u32 %v1618, 4294901760
      %v1620 = vsub.f32 %v1618, %v1619
      %v1621 = vand.u32 %v1620, 4294901760
      %1622 = vmatpush1.msra.mxu0 %v1621
      %1623 = vmatprep.subr.mxu0 0.0
      %v1624 = vand.u32 %v211, 4294901760
      %v1625 = vsub.f32 %v211, %v1624
      %v1626 = vand.u32 %v1625, 4294901760
      %v1627 = vsub.f32 %v1625, %v1626
      %v1628 = vand.u32 %v1627, 4294901760
      %1629 = vmatpush1.msra.mxu0 %v1628
      %1630 = vmatprep.subr.mxu0 0.0
      %v1631 = vand.u32 %v210, 4294901760
      %v1632 = vsub.f32 %v210, %v1631
      %v1633 = vand.u32 %v1632, 4294901760
      %v1634 = vsub.f32 %v1632, %v1633
      %v1635 = vand.u32 %v1634, 4294901760
      %1636 = vmatpush1.msra.mxu0 %v1635
      %1637 = vmatprep.subr.mxu0 0.0
      %v1638 = vand.u32 %v209, 4294901760
      %v1639 = vsub.f32 %v209, %v1638
      %v1640 = vand.u32 %v1639, 4294901760
      %v1641 = vsub.f32 %v1639, %v1640
      %v1642 = vand.u32 %v1641, 4294901760
      %1643 = vmatpush1.msra.mxu0 %v1642
      %1644 = vmatprep.subr.mxu0 0.0
      %v1645 = vand.u32 %v208, 4294901760
      %v1646 = vsub.f32 %v208, %v1645
      %v1647 = vand.u32 %v1646, 4294901760
      %v1648 = vsub.f32 %v1646, %v1647
      %v1649 = vand.u32 %v1648, 4294901760
      %1650 = vmatpush1.msra.mxu0 %v1649
      %1651 = vmatprep.subr.mxu0 0.0
      %v1652 = vand.u32 %v207, 4294901760
      %v1653 = vsub.f32 %v207, %v1652
      %v1654 = vand.u32 %v1653, 4294901760
      %v1655 = vsub.f32 %v1653, %v1654
      %v1656 = vand.u32 %v1655, 4294901760
      %1657 = vmatpush1.msra.mxu0 %v1656
      %1658 = vmatprep.subr.mxu0 0.0
      %v1659 = vand.u32 %v206, 4294901760
      %v1660 = vsub.f32 %v206, %v1659
      %v1661 = vand.u32 %v1660, 4294901760
      %v1662 = vsub.f32 %v1660, %v1661
      %v1663 = vand.u32 %v1662, 4294901760
      %1664 = vmatpush1.msra.mxu0 %v1663
      %1665 = vmatprep.subr.mxu0 0.0
      %v1666 = vand.u32 %v205, 4294901760
      %v1667 = vsub.f32 %v205, %v1666
      %v1668 = vand.u32 %v1667, 4294901760
      %v1669 = vsub.f32 %v1667, %v1668
      %v1670 = vand.u32 %v1669, 4294901760
      %1671 = vmatpush1.msra.mxu0 %v1670
      %1672 = vmatprep.subr.mxu0 0.0
      %v1673 = vand.u32 %v204, 4294901760
      %v1674 = vsub.f32 %v204, %v1673
      %v1675 = vand.u32 %v1674, 4294901760
      %v1676 = vsub.f32 %v1674, %v1675
      %v1677 = vand.u32 %v1676, 4294901760
      %1678 = vmatpush1.msra.mxu0 %v1677
      %1679 = vmatprep.subr.mxu0 0.0
      %v1680 = vand.u32 %v203, 4294901760
      %v1681 = vsub.f32 %v203, %v1680
      %v1682 = vand.u32 %v1681, 4294901760
      %v1683 = vsub.f32 %v1681, %v1682
      %v1684 = vand.u32 %v1683, 4294901760
      %1685 = vmatpush1.msra.mxu0 %v1684
      %1686 = vmatprep.subr.mxu0 0.0
      %v1687 = vand.u32 %v202, 4294901760
      %v1688 = vsub.f32 %v202, %v1687
      %v1689 = vand.u32 %v1688, 4294901760
      %v1690 = vsub.f32 %v1688, %v1689
      %v1691 = vand.u32 %v1690, 4294901760
      %1692 = vmatpush1.msra.mxu0 %v1691
      %1693 = vmatprep.subr.mxu0 0.0
      %v1694 = vand.u32 %v201, 4294901760
      %v1695 = vsub.f32 %v201, %v1694
      %v1696 = vand.u32 %v1695, 4294901760
      %v1697 = vsub.f32 %v1695, %v1696
      %v1698 = vand.u32 %v1697, 4294901760
      %1699 = vmatpush1.msra.mxu0 %v1698
      %1700 = vmatprep.subr.mxu0 0.0
      %v1701 = vand.u32 %v200, 4294901760
      %v1702 = vsub.f32 %v200, %v1701
      %v1703 = vand.u32 %v1702, 4294901760
      %v1704 = vsub.f32 %v1702, %v1703
      %v1705 = vand.u32 %v1704, 4294901760
      %1706 = vmatpush1.msra.mxu0 %v1705
      %1707 = vmatprep.subr.mxu0 0.0
      %1708 = vmatpush2.msra.mxu0 0.0
      %1709 = vmatprep.subr.mxu0 0.0
      %1710 = vmatpush2.msra.mxu0 0.0
      %1711 = vmatprep.subr.mxu0 0.0
      %1712 = vmatpush2.msra.mxu0 0.0
      %1713 = vmatprep.subr.mxu0 0.0
      %1714 = vmatpush2.msra.mxu0 0.0
      %1715 = vmatprep.subr.mxu0 0.0
      %1716 = vmatpush2.msra.mxu0 0.0
      %1717 = vmatprep.subr.mxu0 0.0
      %1718 = vmatpush2.msra.mxu0 0.0
      %1719 = vmatprep.subr.mxu0 0.0
      %1720 = vmatpush2.msra.mxu0 0.0
      %1721 = vmatprep.subr.mxu0 0.0
      %1722 = vmatpush2.msra.mxu0 0.0
      %1723 = vmatprep.subr.mxu0 0.0
      %1724 = vmatpush2.msra.mxu0 0.0
      %1725 = vmatprep.subr.mxu0 0.0
      %1726 = vmatpush2.msra.mxu0 0.0
      %1727 = vmatprep.subr.mxu0 0.0
      %1728 = vmatpush2.msra.mxu0 0.0
      %1729 = vmatprep.subr.mxu0 0.0
      %1730 = vmatpush2.msra.mxu0 0.0
      %1731 = vmatprep.subr.mxu0 0.0
      %1732 = vmatpush2.msra.mxu0 0.0
      %1733 = vmatprep.subr.mxu0 0.0
      %1734 = vmatpush2.msra.mxu0 0.0
      %1735 = vmatprep.subr.mxu0 0.0
      %1736 = vmatpush2.msra.mxu0 0.0
      %1737 = vmatprep.subr.mxu0 0.0
      %1738 = vmatpush2.msra.mxu0 0.0
      %1739 = vmatprep.mubr.f32.mxu0 0.0
      %v1740 = vand.u32 %v1503, 4294901760
      %1741 = vmatmul.mubr.f32.gmra.mxu0 %v1740
      %v1742 = vpop.f32.mrf.mxu0
      %v1743 = vadd.f32 %v1592, %v1742
      %v1744 = vpop.f32.mrf.mxu0
      %1745 = vdwg.mxu0
      %1746 = vmatprep.subr.mxu0 0.0
      %v1747 = vand.u32 %v215, 4294901760
      %v1748 = vsub.f32 %v215, %v1747
      %1749 = vmatpush1.msra.mxu0 %v1748
      %1750 = vmatprep.subr.mxu0 0.0
      %v1751 = vand.u32 %v214, 4294901760
      %v1752 = vsub.f32 %v214, %v1751
      %1753 = vmatpush1.msra.mxu0 %v1752
      %1754 = vmatprep.subr.mxu0 0.0
      %v1755 = vand.u32 %v213, 4294901760
      %v1756 = vsub.f32 %v213, %v1755
      %1757 = vmatpush1.msra.mxu0 %v1756
      %1758 = vmatprep.subr.mxu0 0.0
      %v1759 = vand.u32 %v212, 4294901760
      %v1760 = vsub.f32 %v212, %v1759
      %1761 = vmatpush1.msra.mxu0 %v1760
      %1762 = vmatprep.subr.mxu0 0.0
      %v1763 = vand.u32 %v211, 4294901760
      %v1764 = vsub.f32 %v211, %v1763
      %1765 = vmatpush1.msra.mxu0 %v1764
      %1766 = vmatprep.subr.mxu0 0.0
      %v1767 = vand.u32 %v210, 4294901760
      %v1768 = vsub.f32 %v210, %v1767
      %1769 = vmatpush1.msra.mxu0 %v1768
      %1770 = vmatprep.subr.mxu0 0.0
      %v1771 = vand.u32 %v209, 4294901760
      %v1772 = vsub.f32 %v209, %v1771
      %1773 = vmatpush1.msra.mxu0 %v1772
      %1774 = vmatprep.subr.mxu0 0.0
      %v1775 = vand.u32 %v208, 4294901760
      %v1776 = vsub.f32 %v208, %v1775
      %1777 = vmatpush1.msra.mxu0 %v1776
      %1778 = vmatprep.subr.mxu0 0.0
      %v1779 = vand.u32 %v207, 4294901760
      %v1780 = vsub.f32 %v207, %v1779
      %1781 = vmatpush1.msra.mxu0 %v1780
      %1782 = vmatprep.subr.mxu0 0.0
      %v1783 = vand.u32 %v206, 4294901760
      %v1784 = vsub.f32 %v206, %v1783
      %1785 = vmatpush1.msra.mxu0 %v1784
      %1786 = vmatprep.subr.mxu0 0.0
      %v1787 = vand.u32 %v205, 4294901760
      %v1788 = vsub.f32 %v205, %v1787
      %1789 = vmatpush1.msra.mxu0 %v1788
      %1790 = vmatprep.subr.mxu0 0.0
      %v1791 = vand.u32 %v204, 4294901760
      %v1792 = vsub.f32 %v204, %v1791
      %1793 = vmatpush1.msra.mxu0 %v1792
      %1794 = vmatprep.subr.mxu0 0.0
      %v1795 = vand.u32 %v203, 4294901760
      %v1796 = vsub.f32 %v203, %v1795
      %1797 = vmatpush1.msra.mxu0 %v1796
      %1798 = vmatprep.subr.mxu0 0.0
      %v1799 = vand.u32 %v202, 4294901760
      %v1800 = vsub.f32 %v202, %v1799
      %1801 = vmatpush1.msra.mxu0 %v1800
      %1802 = vmatprep.subr.mxu0 0.0
      %v1803 = vand.u32 %v201, 4294901760
      %v1804 = vsub.f32 %v201, %v1803
      %1805 = vmatpush1.msra.mxu0 %v1804
      %1806 = vmatprep.subr.mxu0 0.0
      %v1807 = vand.u32 %v200, 4294901760
      %v1808 = vsub.f32 %v200, %v1807
      %1809 = vmatpush1.msra.mxu0 %v1808
      %1810 = vmatprep.subr.mxu0 0.0
      %1811 = vmatpush2.msra.mxu0 0.0
      %1812 = vmatprep.subr.mxu0 0.0
      %1813 = vmatpush2.msra.mxu0 0.0
      %1814 = vmatprep.subr.mxu0 0.0
      %1815 = vmatpush2.msra.mxu0 0.0
      %1816 = vmatprep.subr.mxu0 0.0
      %1817 = vmatpush2.msra.mxu0 0.0
      %1818 = vmatprep.subr.mxu0 0.0
      %1819 = vmatpush2.msra.mxu0 0.0
      %1820 = vmatprep.subr.mxu0 0.0
      %1821 = vmatpush2.msra.mxu0 0.0
      %1822 = vmatprep.subr.mxu0 0.0
      %1823 = vmatpush2.msra.mxu0 0.0
      %1824 = vmatprep.subr.mxu0 0.0
      %1825 = vmatpush2.msra.mxu0 0.0
      %1826 = vmatprep.subr.mxu0 0.0
      %1827 = vmatpush2.msra.mxu0 0.0
      %1828 = vmatprep.subr.mxu0 0.0
      %1829 = vmatpush2.msra.mxu0 0.0
      %1830 = vmatprep.subr.mxu0 0.0
      %1831 = vmatpush2.msra.mxu0 0.0
      %1832 = vmatprep.subr.mxu0 0.0
      %1833 = vmatpush2.msra.mxu0 0.0
      %1834 = vmatprep.subr.mxu0 0.0
      %1835 = vmatpush2.msra.mxu0 0.0
      %1836 = vmatprep.subr.mxu0 0.0
      %1837 = vmatpush2.msra.mxu0 0.0
      %1838 = vmatprep.subr.mxu0 0.0
      %1839 = vmatpush2.msra.mxu0 0.0
      %1840 = vmatprep.subr.mxu0 0.0
      %1841 = vmatpush2.msra.mxu0 0.0
      %1842 = vmatprep.mubr.f32.mxu0 0.0
      %v1843 = vand.u32 %v1503, 4294901760
      %v1844 = vsub.f32 %v1503, %v1843
      %1845 = vmatmul.mubr.f32.gmra.mxu0 %v1844
      %v1846 = vpop.f32.mrf.mxu0
      %v1847 = vadd.f32 %v1743, %v1846
      %v1848 = vpop.f32.mrf.mxu0
      %1849 = vdwg.mxu0
      %1850 = vmatprep.subr.mxu0 0.0
      %v1851 = vand.u32 %v215, 4294901760
      %1852 = vmatpush1.msra.mxu0 %v1851
      %1853 = vmatprep.subr.mxu0 0.0
      %v1854 = vand.u32 %v214, 4294901760
      %1855 = vmatpush1.msra.mxu0 %v1854
      %1856 = vmatprep.subr.mxu0 0.0
      %v1857 = vand.u32 %v213, 4294901760
      %1858 = vmatpush1.msra.mxu0 %v1857
      %1859 = vmatprep.subr.mxu0 0.0
      %v1860 = vand.u32 %v212, 4294901760
      %1861 = vmatpush1.msra.mxu0 %v1860
      %1862 = vmatprep.subr.mxu0 0.0
      %v1863 = vand.u32 %v211, 4294901760
      %1864 = vmatpush1.msra.mxu0 %v1863
      %1865 = vmatprep.subr.mxu0 0.0
      %v1866 = vand.u32 %v210, 4294901760
      %1867 = vmatpush1.msra.mxu0 %v1866
      %1868 = vmatprep.subr.mxu0 0.0
      %v1869 = vand.u32 %v209, 4294901760
      %1870 = vmatpush1.msra.mxu0 %v1869
      %1871 = vmatprep.subr.mxu0 0.0
      %v1872 = vand.u32 %v208, 4294901760
      %1873 = vmatpush1.msra.mxu0 %v1872
      %1874 = vmatprep.subr.mxu0 0.0
      %v1875 = vand.u32 %v207, 4294901760
      %1876 = vmatpush1.msra.mxu0 %v1875
      %1877 = vmatprep.subr.mxu0 0.0
      %v1878 = vand.u32 %v206, 4294901760
      %1879 = vmatpush1.msra.mxu0 %v1878
      %1880 = vmatprep.subr.mxu0 0.0
      %v1881 = vand.u32 %v205, 4294901760
      %1882 = vmatpush1.msra.mxu0 %v1881
      %1883 = vmatprep.subr.mxu0 0.0
      %v1884 = vand.u32 %v204, 4294901760
      %1885 = vmatpush1.msra.mxu0 %v1884
      %1886 = vmatprep.subr.mxu0 0.0
      %v1887 = vand.u32 %v203, 4294901760
      %1888 = vmatpush1.msra.mxu0 %v1887
      %1889 = vmatprep.subr.mxu0 0.0
      %v1890 = vand.u32 %v202, 4294901760
      %1891 = vmatpush1.msra.mxu0 %v1890
      %1892 = vmatprep.subr.mxu0 0.0
      %v1893 = vand.u32 %v201, 4294901760
      %1894 = vmatpush1.msra.mxu0 %v1893
      %1895 = vmatprep.subr.mxu0 0.0
      %v1896 = vand.u32 %v200, 4294901760
      %1897 = vmatpush1.msra.mxu0 %v1896
      %1898 = vmatprep.subr.mxu0 0.0
      %1899 = vmatpush2.msra.mxu0 0.0
      %1900 = vmatprep.subr.mxu0 0.0
      %1901 = vmatpush2.msra.mxu0 0.0
      %1902 = vmatprep.subr.mxu0 0.0
      %1903 = vmatpush2.msra.mxu0 0.0
      %1904 = vmatprep.subr.mxu0 0.0
      %1905 = vmatpush2.msra.mxu0 0.0
      %1906 = vmatprep.subr.mxu0 0.0
      %1907 = vmatpush2.msra.mxu0 0.0
      %1908 = vmatprep.subr.mxu0 0.0
      %1909 = vmatpush2.msra.mxu0 0.0
      %1910 = vmatprep.subr.mxu0 0.0
      %1911 = vmatpush2.msra.mxu0 0.0
      %1912 = vmatprep.subr.mxu0 0.0
      %1913 = vmatpush2.msra.mxu0 0.0
      %1914 = vmatprep.subr.mxu0 0.0
      %1915 = vmatpush2.msra.mxu0 0.0
      %1916 = vmatprep.subr.mxu0 0.0
      %1917 = vmatpush2.msra.mxu0 0.0
      %1918 = vmatprep.subr.mxu0 0.0
      %1919 = vmatpush2.msra.mxu0 0.0
      %1920 = vmatprep.subr.mxu0 0.0
      %1921 = vmatpush2.msra.mxu0 0.0
      %1922 = vmatprep.subr.mxu0 0.0
      %1923 = vmatpush2.msra.mxu0 0.0
      %1924 = vmatprep.subr.mxu0 0.0
      %1925 = vmatpush2.msra.mxu0 0.0
      %1926 = vmatprep.subr.mxu0 0.0
      %1927 = vmatpush2.msra.mxu0 0.0
      %1928 = vmatprep.subr.mxu0 0.0
      %1929 = vmatpush2.msra.mxu0 0.0
      %1930 = vmatprep.mubr.f32.mxu0 0.0
      %v1931 = vand.u32 %v1503, 4294901760
      %v1932 = vsub.f32 %v1503, %v1931
      %v1933 = vand.u32 %v1932, 4294901760
      %1934 = vmatmul.mubr.f32.gmra.mxu0 %v1933
      %v1935 = vpop.f32.mrf.mxu0
      %v1936 = vadd.f32 %v1847, %v1935
      %v1937 = vpop.f32.mrf.mxu0
      %1938 = vdwg.mxu0
      %1939 = vmatprep.subr.mxu0 0.0
      %v1940 = vand.u32 %v215, 4294901760
      %v1941 = vsub.f32 %v215, %v1940
      %v1942 = vand.u32 %v1941, 4294901760
      %1943 = vmatpush1.msra.mxu0 %v1942
      %1944 = vmatprep.subr.mxu0 0.0
      %v1945 = vand.u32 %v214, 4294901760
      %v1946 = vsub.f32 %v214, %v1945
      %v1947 = vand.u32 %v1946, 4294901760
      %1948 = vmatpush1.msra.mxu0 %v1947
      %1949 = vmatprep.subr.mxu0 0.0
      %v1950 = vand.u32 %v213, 4294901760
      %v1951 = vsub.f32 %v213, %v1950
      %v1952 = vand.u32 %v1951, 4294901760
      %1953 = vmatpush1.msra.mxu0 %v1952
      %1954 = vmatprep.subr.mxu0 0.0
      %v1955 = vand.u32 %v212, 4294901760
      %v1956 = vsub.f32 %v212, %v1955
      %v1957 = vand.u32 %v1956, 4294901760
      %1958 = vmatpush1.msra.mxu0 %v1957
      %1959 = vmatprep.subr.mxu0 0.0
      %v1960 = vand.u32 %v211, 4294901760
      %v1961 = vsub.f32 %v211, %v1960
      %v1962 = vand.u32 %v1961, 4294901760
      %1963 = vmatpush1.msra.mxu0 %v1962
      %1964 = vmatprep.subr.mxu0 0.0
      %v1965 = vand.u32 %v210, 4294901760
      %v1966 = vsub.f32 %v210, %v1965
      %v1967 = vand.u32 %v1966, 4294901760
      %1968 = vmatpush1.msra.mxu0 %v1967
      %1969 = vmatprep.subr.mxu0 0.0
      %v1970 = vand.u32 %v209, 4294901760
      %v1971 = vsub.f32 %v209, %v1970
      %v1972 = vand.u32 %v1971, 4294901760
      %1973 = vmatpush1.msra.mxu0 %v1972
      %1974 = vmatprep.subr.mxu0 0.0
      %v1975 = vand.u32 %v208, 4294901760
      %v1976 = vsub.f32 %v208, %v1975
      %v1977 = vand.u32 %v1976, 4294901760
      %1978 = vmatpush1.msra.mxu0 %v1977
      %1979 = vmatprep.subr.mxu0 0.0
      %v1980 = vand.u32 %v207, 4294901760
      %v1981 = vsub.f32 %v207, %v1980
      %v1982 = vand.u32 %v1981, 4294901760
      %1983 = vmatpush1.msra.mxu0 %v1982
      %1984 = vmatprep.subr.mxu0 0.0
      %v1985 = vand.u32 %v206, 4294901760
      %v1986 = vsub.f32 %v206, %v1985
      %v1987 = vand.u32 %v1986, 4294901760
      %1988 = vmatpush1.msra.mxu0 %v1987
      %1989 = vmatprep.subr.mxu0 0.0
      %v1990 = vand.u32 %v205, 4294901760
      %v1991 = vsub.f32 %v205, %v1990
      %v1992 = vand.u32 %v1991, 4294901760
      %1993 = vmatpush1.msra.mxu0 %v1992
      %1994 = vmatprep.subr.mxu0 0.0
      %v1995 = vand.u32 %v204, 4294901760
      %v1996 = vsub.f32 %v204, %v1995
      %v1997 = vand.u32 %v1996, 4294901760
      %1998 = vmatpush1.msra.mxu0 %v1997
      %1999 = vmatprep.subr.mxu0 0.0
      %v2000 = vand.u32 %v203, 4294901760
      %v2001 = vsub.f32 %v203, %v2000
      %v2002 = vand.u32 %v2001, 4294901760
      %2003 = vmatpush1.msra.mxu0 %v2002
      %2004 = vmatprep.subr.mxu0 0.0
      %v2005 = vand.u32 %v202, 4294901760
      %v2006 = vsub.f32 %v202, %v2005
      %v2007 = vand.u32 %v2006, 4294901760
      %2008 = vmatpush1.msra.mxu0 %v2007
      %2009 = vmatprep.subr.mxu0 0.0
      %v2010 = vand.u32 %v201, 4294901760
      %v2011 = vsub.f32 %v201, %v2010
      %v2012 = vand.u32 %v2011, 4294901760
      %2013 = vmatpush1.msra.mxu0 %v2012
      %2014 = vmatprep.subr.mxu0 0.0
      %v2015 = vand.u32 %v200, 4294901760
      %v2016 = vsub.f32 %v200, %v2015
      %v2017 = vand.u32 %v2016, 4294901760
      %2018 = vmatpush1.msra.mxu0 %v2017
      %2019 = vmatprep.subr.mxu0 0.0
      %2020 = vmatpush2.msra.mxu0 0.0
      %2021 = vmatprep.subr.mxu0 0.0
      %2022 = vmatpush2.msra.mxu0 0.0
      %2023 = vmatprep.subr.mxu0 0.0
      %2024 = vmatpush2.msra.mxu0 0.0
      %2025 = vmatprep.subr.mxu0 0.0
      %2026 = vmatpush2.msra.mxu0 0.0
      %2027 = vmatprep.subr.mxu0 0.0
      %2028 = vmatpush2.msra.mxu0 0.0
      %2029 = vmatprep.subr.mxu0 0.0
      %2030 = vmatpush2.msra.mxu0 0.0
      %2031 = vmatprep.subr.mxu0 0.0
      %2032 = vmatpush2.msra.mxu0 0.0
      %2033 = vmatprep.subr.mxu0 0.0
      %2034 = vmatpush2.msra.mxu0 0.0
      %2035 = vmatprep.subr.mxu0 0.0
      %2036 = vmatpush2.msra.mxu0 0.0
      %2037 = vmatprep.subr.mxu0 0.0
      %2038 = vmatpush2.msra.mxu0 0.0
      %2039 = vmatprep.subr.mxu0 0.0
      %2040 = vmatpush2.msra.mxu0 0.0
      %2041 = vmatprep.subr.mxu0 0.0
      %2042 = vmatpush2.msra.mxu0 0.0
      %2043 = vmatprep.subr.mxu0 0.0
      %2044 = vmatpush2.msra.mxu0 0.0
      %2045 = vmatprep.subr.mxu0 0.0
      %2046 = vmatpush2.msra.mxu0 0.0
      %2047 = vmatprep.subr.mxu0 0.0
      %2048 = vmatpush2.msra.mxu0 0.0
      %2049 = vmatprep.subr.mxu0 0.0
      %2050 = vmatpush2.msra.mxu0 0.0
      %2051 = vmatprep.mubr.f32.mxu0 0.0
      %v2052 = vand.u32 %v1503, 4294901760
      %2053 = vmatmul.mubr.f32.gmra.mxu0 %v2052
      %v2054 = vpop.f32.mrf.mxu0
      %v2055 = vadd.f32 %v1936, %v2054
      %v2056 = vpop.f32.mrf.mxu0
      %2057 = vdwg.mxu0
      %2058 = vmatprep.subr.mxu0 0.0
      %v2059 = vand.u32 %v215, 4294901760
      %2060 = vmatpush1.msra.mxu0 %v2059
      %2061 = vmatprep.subr.mxu0 0.0
      %v2062 = vand.u32 %v214, 4294901760
      %2063 = vmatpush1.msra.mxu0 %v2062
      %2064 = vmatprep.subr.mxu0 0.0
      %v2065 = vand.u32 %v213, 4294901760
      %2066 = vmatpush1.msra.mxu0 %v2065
      %2067 = vmatprep.subr.mxu0 0.0
      %v2068 = vand.u32 %v212, 4294901760
      %2069 = vmatpush1.msra.mxu0 %v2068
      %2070 = vmatprep.subr.mxu0 0.0
      %v2071 = vand.u32 %v211, 4294901760
      %2072 = vmatpush1.msra.mxu0 %v2071
      %2073 = vmatprep.subr.mxu0 0.0
      %v2074 = vand.u32 %v210, 4294901760
      %2075 = vmatpush1.msra.mxu0 %v2074
      %2076 = vmatprep.subr.mxu0 0.0
      %v2077 = vand.u32 %v209, 4294901760
      %2078 = vmatpush1.msra.mxu0 %v2077
      %2079 = vmatprep.subr.mxu0 0.0
      %v2080 = vand.u32 %v208, 4294901760
      %2081 = vmatpush1.msra.mxu0 %v2080
      %2082 = vmatprep.subr.mxu0 0.0
      %v2083 = vand.u32 %v207, 4294901760
      %2084 = vmatpush1.msra.mxu0 %v2083
      %2085 = vmatprep.subr.mxu0 0.0
      %v2086 = vand.u32 %v206, 4294901760
      %2087 = vmatpush1.msra.mxu0 %v2086
      %2088 = vmatprep.subr.mxu0 0.0
      %v2089 = vand.u32 %v205, 4294901760
      %2090 = vmatpush1.msra.mxu0 %v2089
      %2091 = vmatprep.subr.mxu0 0.0
      %v2092 = vand.u32 %v204, 4294901760
      %2093 = vmatpush1.msra.mxu0 %v2092
      %2094 = vmatprep.subr.mxu0 0.0
      %v2095 = vand.u32 %v203, 4294901760
      %2096 = vmatpush1.msra.mxu0 %v2095
      %2097 = vmatprep.subr.mxu0 0.0
      %v2098 = vand.u32 %v202, 4294901760
      %2099 = vmatpush1.msra.mxu0 %v2098
      %2100 = vmatprep.subr.mxu0 0.0
      %v2101 = vand.u32 %v201, 4294901760
      %2102 = vmatpush1.msra.mxu0 %v2101
      %2103 = vmatprep.subr.mxu0 0.0
      %v2104 = vand.u32 %v200, 4294901760
      %2105 = vmatpush1.msra.mxu0 %v2104
      %2106 = vmatprep.subr.mxu0 0.0
      %2107 = vmatpush2.msra.mxu0 0.0
      %2108 = vmatprep.subr.mxu0 0.0
      %2109 = vmatpush2.msra.mxu0 0.0
      %2110 = vmatprep.subr.mxu0 0.0
      %2111 = vmatpush2.msra.mxu0 0.0
      %2112 = vmatprep.subr.mxu0 0.0
      %2113 = vmatpush2.msra.mxu0 0.0
      %2114 = vmatprep.subr.mxu0 0.0
      %2115 = vmatpush2.msra.mxu0 0.0
      %2116 = vmatprep.subr.mxu0 0.0
      %2117 = vmatpush2.msra.mxu0 0.0
      %2118 = vmatprep.subr.mxu0 0.0
      %2119 = vmatpush2.msra.mxu0 0.0
      %2120 = vmatprep.subr.mxu0 0.0
      %2121 = vmatpush2.msra.mxu0 0.0
      %2122 = vmatprep.subr.mxu0 0.0
      %2123 = vmatpush2.msra.mxu0 0.0
      %2124 = vmatprep.subr.mxu0 0.0
      %2125 = vmatpush2.msra.mxu0 0.0
      %2126 = vmatprep.subr.mxu0 0.0
      %2127 = vmatpush2.msra.mxu0 0.0
      %2128 = vmatprep.subr.mxu0 0.0
      %2129 = vmatpush2.msra.mxu0 0.0
      %2130 = vmatprep.subr.mxu0 0.0
      %2131 = vmatpush2.msra.mxu0 0.0
      %2132 = vmatprep.subr.mxu0 0.0
      %2133 = vmatpush2.msra.mxu0 0.0
      %2134 = vmatprep.subr.mxu0 0.0
      %2135 = vmatpush2.msra.mxu0 0.0
      %2136 = vmatprep.subr.mxu0 0.0
      %2137 = vmatpush2.msra.mxu0 0.0
      %2138 = vmatprep.mubr.f32.mxu0 0.0
      %v2139 = vand.u32 %v1503, 4294901760
      %2140 = vmatmul.mubr.f32.gmra.mxu0 %v2139
      %v2141 = vpop.f32.mrf.mxu0
      %v2142 = vadd.f32 %v2055, %v2141
      %v2143 = vpop.f32.mrf.mxu0
      %2144 = vdwg.mxu0
      %s2145 = scalar_lea.vmem %s192, 12
      %v2146 = vld [vmem:[%s2145] sm:$0xf]
      %2147 = vmatprep.subr.mxu0 0.0
      %v2148 = vand.u32 %v215, 4294901760
      %2149 = vmatpush1.msra.mxu0 %v2148
      %2150 = vmatprep.subr.mxu0 0.0
      %v2151 = vand.u32 %v214, 4294901760
      %2152 = vmatpush1.msra.mxu0 %v2151
      %2153 = vmatprep.subr.mxu0 0.0
      %v2154 = vand.u32 %v213, 4294901760
      %2155 = vmatpush1.msra.mxu0 %v2154
      %2156 = vmatprep.subr.mxu0 0.0
      %v2157 = vand.u32 %v212, 4294901760
      %2158 = vmatpush1.msra.mxu0 %v2157
      %2159 = vmatprep.subr.mxu0 0.0
      %v2160 = vand.u32 %v211, 4294901760
      %2161 = vmatpush1.msra.mxu0 %v2160
      %2162 = vmatprep.subr.mxu0 0.0
      %v2163 = vand.u32 %v210, 4294901760
      %2164 = vmatpush1.msra.mxu0 %v2163
      %2165 = vmatprep.subr.mxu0 0.0
      %v2166 = vand.u32 %v209, 4294901760
      %2167 = vmatpush1.msra.mxu0 %v2166
      %2168 = vmatprep.subr.mxu0 0.0
      %v2169 = vand.u32 %v208, 4294901760
      %2170 = vmatpush1.msra.mxu0 %v2169
      %2171 = vmatprep.subr.mxu0 0.0
      %v2172 = vand.u32 %v207, 4294901760
      %2173 = vmatpush1.msra.mxu0 %v2172
      %2174 = vmatprep.subr.mxu0 0.0
      %v2175 = vand.u32 %v206, 4294901760
      %2176 = vmatpush1.msra.mxu0 %v2175
      %2177 = vmatprep.subr.mxu0 0.0
      %v2178 = vand.u32 %v205, 4294901760
      %2179 = vmatpush1.msra.mxu0 %v2178
      %2180 = vmatprep.subr.mxu0 0.0
      %v2181 = vand.u32 %v204, 4294901760
      %2182 = vmatpush1.msra.mxu0 %v2181
      %2183 = vmatprep.subr.mxu0 0.0
      %v2184 = vand.u32 %v203, 4294901760
      %2185 = vmatpush1.msra.mxu0 %v2184
      %2186 = vmatprep.subr.mxu0 0.0
      %v2187 = vand.u32 %v202, 4294901760
      %2188 = vmatpush1.msra.mxu0 %v2187
      %2189 = vmatprep.subr.mxu0 0.0
      %v2190 = vand.u32 %v201, 4294901760
      %2191 = vmatpush1.msra.mxu0 %v2190
      %2192 = vmatprep.subr.mxu0 0.0
      %v2193 = vand.u32 %v200, 4294901760
      %2194 = vmatpush1.msra.mxu0 %v2193
      %2195 = vmatprep.subr.mxu0 0.0
      %2196 = vmatpush2.msra.mxu0 0.0
      %2197 = vmatprep.subr.mxu0 0.0
      %2198 = vmatpush2.msra.mxu0 0.0
      %2199 = vmatprep.subr.mxu0 0.0
      %2200 = vmatpush2.msra.mxu0 0.0
      %2201 = vmatprep.subr.mxu0 0.0
      %2202 = vmatpush2.msra.mxu0 0.0
      %2203 = vmatprep.subr.mxu0 0.0
      %2204 = vmatpush2.msra.mxu0 0.0
      %2205 = vmatprep.subr.mxu0 0.0
      %2206 = vmatpush2.msra.mxu0 0.0
      %2207 = vmatprep.subr.mxu0 0.0
      %2208 = vmatpush2.msra.mxu0 0.0
      %2209 = vmatprep.subr.mxu0 0.0
      %2210 = vmatpush2.msra.mxu0 0.0
      %2211 = vmatprep.subr.mxu0 0.0
      %2212 = vmatpush2.msra.mxu0 0.0
      %2213 = vmatprep.subr.mxu0 0.0
      %2214 = vmatpush2.msra.mxu0 0.0
      %2215 = vmatprep.subr.mxu0 0.0
      %2216 = vmatpush2.msra.mxu0 0.0
      %2217 = vmatprep.subr.mxu0 0.0
      %2218 = vmatpush2.msra.mxu0 0.0
      %2219 = vmatprep.subr.mxu0 0.0
      %2220 = vmatpush2.msra.mxu0 0.0
      %2221 = vmatprep.subr.mxu0 0.0
      %2222 = vmatpush2.msra.mxu0 0.0
      %2223 = vmatprep.subr.mxu0 0.0
      %2224 = vmatpush2.msra.mxu0 0.0
      %2225 = vmatprep.subr.mxu0 0.0
      %2226 = vmatpush2.msra.mxu0 0.0
      %2227 = vmatprep.mubr.f32.mxu0 0.0
      %v2228 = vand.u32 %v2146, 4294901760
      %v2229 = vsub.f32 %v2146, %v2228
      %v2230 = vand.u32 %v2229, 4294901760
      %v2231 = vsub.f32 %v2229, %v2230
      %v2232 = vand.u32 %v2231, 4294901760
      %2233 = vmatmul.mubr.f32.gmra.mxu0 %v2232
      %v2234 = vpop.f32.mrf.mxu0
      %v2235 = vadd.f32 0.0, %v2234
      %v2236 = vpop.f32.mrf.mxu0
      %2237 = vdwg.mxu0
      %2238 = vmatprep.subr.mxu0 0.0
      %v2239 = vand.u32 %v215, 4294901760
      %v2240 = vsub.f32 %v215, %v2239
      %v2241 = vand.u32 %v2240, 4294901760
      %v2242 = vsub.f32 %v2240, %v2241
      %v2243 = vand.u32 %v2242, 4294901760
      %2244 = vmatpush1.msra.mxu0 %v2243
      %2245 = vmatprep.subr.mxu0 0.0
      %v2246 = vand.u32 %v214, 4294901760
      %v2247 = vsub.f32 %v214, %v2246
      %v2248 = vand.u32 %v2247, 4294901760
      %v2249 = vsub.f32 %v2247, %v2248
      %v2250 = vand.u32 %v2249, 4294901760
      %2251 = vmatpush1.msra.mxu0 %v2250
      %2252 = vmatprep.subr.mxu0 0.0
      %v2253 = vand.u32 %v213, 4294901760
      %v2254 = vsub.f32 %v213, %v2253
      %v2255 = vand.u32 %v2254, 4294901760
      %v2256 = vsub.f32 %v2254, %v2255
      %v2257 = vand.u32 %v2256, 4294901760
      %2258 = vmatpush1.msra.mxu0 %v2257
      %2259 = vmatprep.subr.mxu0 0.0
      %v2260 = vand.u32 %v212, 4294901760
      %v2261 = vsub.f32 %v212, %v2260
      %v2262 = vand.u32 %v2261, 4294901760
      %v2263 = vsub.f32 %v2261, %v2262
      %v2264 = vand.u32 %v2263, 4294901760
      %2265 = vmatpush1.msra.mxu0 %v2264
      %2266 = vmatprep.subr.mxu0 0.0
      %v2267 = vand.u32 %v211, 4294901760
      %v2268 = vsub.f32 %v211, %v2267
      %v2269 = vand.u32 %v2268, 4294901760
      %v2270 = vsub.f32 %v2268, %v2269
      %v2271 = vand.u32 %v2270, 4294901760
      %2272 = vmatpush1.msra.mxu0 %v2271
      %2273 = vmatprep.subr.mxu0 0.0
      %v2274 = vand.u32 %v210, 4294901760
      %v2275 = vsub.f32 %v210, %v2274
      %v2276 = vand.u32 %v2275, 4294901760
      %v2277 = vsub.f32 %v2275, %v2276
      %v2278 = vand.u32 %v2277, 4294901760
      %2279 = vmatpush1.msra.mxu0 %v2278
      %2280 = vmatprep.subr.mxu0 0.0
      %v2281 = vand.u32 %v209, 4294901760
      %v2282 = vsub.f32 %v209, %v2281
      %v2283 = vand.u32 %v2282, 4294901760
      %v2284 = vsub.f32 %v2282, %v2283
      %v2285 = vand.u32 %v2284, 4294901760
      %2286 = vmatpush1.msra.mxu0 %v2285
      %2287 = vmatprep.subr.mxu0 0.0
      %v2288 = vand.u32 %v208, 4294901760
      %v2289 = vsub.f32 %v208, %v2288
      %v2290 = vand.u32 %v2289, 4294901760
      %v2291 = vsub.f32 %v2289, %v2290
      %v2292 = vand.u32 %v2291, 4294901760
      %2293 = vmatpush1.msra.mxu0 %v2292
      %2294 = vmatprep.subr.mxu0 0.0
      %v2295 = vand.u32 %v207, 4294901760
      %v2296 = vsub.f32 %v207, %v2295
      %v2297 = vand.u32 %v2296, 4294901760
      %v2298 = vsub.f32 %v2296, %v2297
      %v2299 = vand.u32 %v2298, 4294901760
      %2300 = vmatpush1.msra.mxu0 %v2299
      %2301 = vmatprep.subr.mxu0 0.0
      %v2302 = vand.u32 %v206, 4294901760
      %v2303 = vsub.f32 %v206, %v2302
      %v2304 = vand.u32 %v2303, 4294901760
      %v2305 = vsub.f32 %v2303, %v2304
      %v2306 = vand.u32 %v2305, 4294901760
      %2307 = vmatpush1.msra.mxu0 %v2306
      %2308 = vmatprep.subr.mxu0 0.0
      %v2309 = vand.u32 %v205, 4294901760
      %v2310 = vsub.f32 %v205, %v2309
      %v2311 = vand.u32 %v2310, 4294901760
      %v2312 = vsub.f32 %v2310, %v2311
      %v2313 = vand.u32 %v2312, 4294901760
      %2314 = vmatpush1.msra.mxu0 %v2313
      %2315 = vmatprep.subr.mxu0 0.0
      %v2316 = vand.u32 %v204, 4294901760
      %v2317 = vsub.f32 %v204, %v2316
      %v2318 = vand.u32 %v2317, 4294901760
      %v2319 = vsub.f32 %v2317, %v2318
      %v2320 = vand.u32 %v2319, 4294901760
      %2321 = vmatpush1.msra.mxu0 %v2320
      %2322 = vmatprep.subr.mxu0 0.0
      %v2323 = vand.u32 %v203, 4294901760
      %v2324 = vsub.f32 %v203, %v2323
      %v2325 = vand.u32 %v2324, 4294901760
      %v2326 = vsub.f32 %v2324, %v2325
      %v2327 = vand.u32 %v2326, 4294901760
      %2328 = vmatpush1.msra.mxu0 %v2327
      %2329 = vmatprep.subr.mxu0 0.0
      %v2330 = vand.u32 %v202, 4294901760
      %v2331 = vsub.f32 %v202, %v2330
      %v2332 = vand.u32 %v2331, 4294901760
      %v2333 = vsub.f32 %v2331, %v2332
      %v2334 = vand.u32 %v2333, 4294901760
      %2335 = vmatpush1.msra.mxu0 %v2334
      %2336 = vmatprep.subr.mxu0 0.0
      %v2337 = vand.u32 %v201, 4294901760
      %v2338 = vsub.f32 %v201, %v2337
      %v2339 = vand.u32 %v2338, 4294901760
      %v2340 = vsub.f32 %v2338, %v2339
      %v2341 = vand.u32 %v2340, 4294901760
      %2342 = vmatpush1.msra.mxu0 %v2341
      %2343 = vmatprep.subr.mxu0 0.0
      %v2344 = vand.u32 %v200, 4294901760
      %v2345 = vsub.f32 %v200, %v2344
      %v2346 = vand.u32 %v2345, 4294901760
      %v2347 = vsub.f32 %v2345, %v2346
      %v2348 = vand.u32 %v2347, 4294901760
      %2349 = vmatpush1.msra.mxu0 %v2348
      %2350 = vmatprep.subr.mxu0 0.0
      %2351 = vmatpush2.msra.mxu0 0.0
      %2352 = vmatprep.subr.mxu0 0.0
      %2353 = vmatpush2.msra.mxu0 0.0
      %2354 = vmatprep.subr.mxu0 0.0
      %2355 = vmatpush2.msra.mxu0 0.0
      %2356 = vmatprep.subr.mxu0 0.0
      %2357 = vmatpush2.msra.mxu0 0.0
      %2358 = vmatprep.subr.mxu0 0.0
      %2359 = vmatpush2.msra.mxu0 0.0
      %2360 = vmatprep.subr.mxu0 0.0
      %2361 = vmatpush2.msra.mxu0 0.0
      %2362 = vmatprep.subr.mxu0 0.0
      %2363 = vmatpush2.msra.mxu0 0.0
      %2364 = vmatprep.subr.mxu0 0.0
      %2365 = vmatpush2.msra.mxu0 0.0
      %2366 = vmatprep.subr.mxu0 0.0
      %2367 = vmatpush2.msra.mxu0 0.0
      %2368 = vmatprep.subr.mxu0 0.0
      %2369 = vmatpush2.msra.mxu0 0.0
      %2370 = vmatprep.subr.mxu0 0.0
      %2371 = vmatpush2.msra.mxu0 0.0
      %2372 = vmatprep.subr.mxu0 0.0
      %2373 = vmatpush2.msra.mxu0 0.0
      %2374 = vmatprep.subr.mxu0 0.0
      %2375 = vmatpush2.msra.mxu0 0.0
      %2376 = vmatprep.subr.mxu0 0.0
      %2377 = vmatpush2.msra.mxu0 0.0
      %2378 = vmatprep.subr.mxu0 0.0
      %2379 = vmatpush2.msra.mxu0 0.0
      %2380 = vmatprep.subr.mxu0 0.0
      %2381 = vmatpush2.msra.mxu0 0.0
      %2382 = vmatprep.mubr.f32.mxu0 0.0
      %v2383 = vand.u32 %v2146, 4294901760
      %2384 = vmatmul.mubr.f32.gmra.mxu0 %v2383
      %v2385 = vpop.f32.mrf.mxu0
      %v2386 = vadd.f32 %v2235, %v2385
      %v2387 = vpop.f32.mrf.mxu0
      %2388 = vdwg.mxu0
      %2389 = vmatprep.subr.mxu0 0.0
      %v2390 = vand.u32 %v215, 4294901760
      %v2391 = vsub.f32 %v215, %v2390
      %2392 = vmatpush1.msra.mxu0 %v2391
      %2393 = vmatprep.subr.mxu0 0.0
      %v2394 = vand.u32 %v214, 4294901760
      %v2395 = vsub.f32 %v214, %v2394
      %2396 = vmatpush1.msra.mxu0 %v2395
      %2397 = vmatprep.subr.mxu0 0.0
      %v2398 = vand.u32 %v213, 4294901760
      %v2399 = vsub.f32 %v213, %v2398
      %2400 = vmatpush1.msra.mxu0 %v2399
      %2401 = vmatprep.subr.mxu0 0.0
      %v2402 = vand.u32 %v212, 4294901760
      %v2403 = vsub.f32 %v212, %v2402
      %2404 = vmatpush1.msra.mxu0 %v2403
      %2405 = vmatprep.subr.mxu0 0.0
      %v2406 = vand.u32 %v211, 4294901760
      %v2407 = vsub.f32 %v211, %v2406
      %2408 = vmatpush1.msra.mxu0 %v2407
      %2409 = vmatprep.subr.mxu0 0.0
      %v2410 = vand.u32 %v210, 4294901760
      %v2411 = vsub.f32 %v210, %v2410
      %2412 = vmatpush1.msra.mxu0 %v2411
      %2413 = vmatprep.subr.mxu0 0.0
      %v2414 = vand.u32 %v209, 4294901760
      %v2415 = vsub.f32 %v209, %v2414
      %2416 = vmatpush1.msra.mxu0 %v2415
      %2417 = vmatprep.subr.mxu0 0.0
      %v2418 = vand.u32 %v208, 4294901760
      %v2419 = vsub.f32 %v208, %v2418
      %2420 = vmatpush1.msra.mxu0 %v2419
      %2421 = vmatprep.subr.mxu0 0.0
      %v2422 = vand.u32 %v207, 4294901760
      %v2423 = vsub.f32 %v207, %v2422
      %2424 = vmatpush1.msra.mxu0 %v2423
      %2425 = vmatprep.subr.mxu0 0.0
      %v2426 = vand.u32 %v206, 4294901760
      %v2427 = vsub.f32 %v206, %v2426
      %2428 = vmatpush1.msra.mxu0 %v2427
      %2429 = vmatprep.subr.mxu0 0.0
      %v2430 = vand.u32 %v205, 4294901760
      %v2431 = vsub.f32 %v205, %v2430
      %2432 = vmatpush1.msra.mxu0 %v2431
      %2433 = vmatprep.subr.mxu0 0.0
      %v2434 = vand.u32 %v204, 4294901760
      %v2435 = vsub.f32 %v204, %v2434
      %2436 = vmatpush1.msra.mxu0 %v2435
      %2437 = vmatprep.subr.mxu0 0.0
      %v2438 = vand.u32 %v203, 4294901760
      %v2439 = vsub.f32 %v203, %v2438
      %2440 = vmatpush1.msra.mxu0 %v2439
      %2441 = vmatprep.subr.mxu0 0.0
      %v2442 = vand.u32 %v202, 4294901760
      %v2443 = vsub.f32 %v202, %v2442
      %2444 = vmatpush1.msra.mxu0 %v2443
      %2445 = vmatprep.subr.mxu0 0.0
      %v2446 = vand.u32 %v201, 4294901760
      %v2447 = vsub.f32 %v201, %v2446
      %2448 = vmatpush1.msra.mxu0 %v2447
      %2449 = vmatprep.subr.mxu0 0.0
      %v2450 = vand.u32 %v200, 4294901760
      %v2451 = vsub.f32 %v200, %v2450
      %2452 = vmatpush1.msra.mxu0 %v2451
      %2453 = vmatprep.subr.mxu0 0.0
      %2454 = vmatpush2.msra.mxu0 0.0
      %2455 = vmatprep.subr.mxu0 0.0
      %2456 = vmatpush2.msra.mxu0 0.0
      %2457 = vmatprep.subr.mxu0 0.0
      %2458 = vmatpush2.msra.mxu0 0.0
      %2459 = vmatprep.subr.mxu0 0.0
      %2460 = vmatpush2.msra.mxu0 0.0
      %2461 = vmatprep.subr.mxu0 0.0
      %2462 = vmatpush2.msra.mxu0 0.0
      %2463 = vmatprep.subr.mxu0 0.0
      %2464 = vmatpush2.msra.mxu0 0.0
      %2465 = vmatprep.subr.mxu0 0.0
      %2466 = vmatpush2.msra.mxu0 0.0
      %2467 = vmatprep.subr.mxu0 0.0
      %2468 = vmatpush2.msra.mxu0 0.0
      %2469 = vmatprep.subr.mxu0 0.0
      %2470 = vmatpush2.msra.mxu0 0.0
      %2471 = vmatprep.subr.mxu0 0.0
      %2472 = vmatpush2.msra.mxu0 0.0
      %2473 = vmatprep.subr.mxu0 0.0
      %2474 = vmatpush2.msra.mxu0 0.0
      %2475 = vmatprep.subr.mxu0 0.0
      %2476 = vmatpush2.msra.mxu0 0.0
      %2477 = vmatprep.subr.mxu0 0.0
      %2478 = vmatpush2.msra.mxu0 0.0
      %2479 = vmatprep.subr.mxu0 0.0
      %2480 = vmatpush2.msra.mxu0 0.0
      %2481 = vmatprep.subr.mxu0 0.0
      %2482 = vmatpush2.msra.mxu0 0.0
      %2483 = vmatprep.subr.mxu0 0.0
      %2484 = vmatpush2.msra.mxu0 0.0
      %2485 = vmatprep.mubr.f32.mxu0 0.0
      %v2486 = vand.u32 %v2146, 4294901760
      %v2487 = vsub.f32 %v2146, %v2486
      %2488 = vmatmul.mubr.f32.gmra.mxu0 %v2487
      %v2489 = vpop.f32.mrf.mxu0
      %v2490 = vadd.f32 %v2386, %v2489
      %v2491 = vpop.f32.mrf.mxu0
      %2492 = vdwg.mxu0
      %2493 = vmatprep.subr.mxu0 0.0
      %v2494 = vand.u32 %v215, 4294901760
      %2495 = vmatpush1.msra.mxu0 %v2494
      %2496 = vmatprep.subr.mxu0 0.0
      %v2497 = vand.u32 %v214, 4294901760
      %2498 = vmatpush1.msra.mxu0 %v2497
      %2499 = vmatprep.subr.mxu0 0.0
      %v2500 = vand.u32 %v213, 4294901760
      %2501 = vmatpush1.msra.mxu0 %v2500
      %2502 = vmatprep.subr.mxu0 0.0
      %v2503 = vand.u32 %v212, 4294901760
      %2504 = vmatpush1.msra.mxu0 %v2503
      %2505 = vmatprep.subr.mxu0 0.0
      %v2506 = vand.u32 %v211, 4294901760
      %2507 = vmatpush1.msra.mxu0 %v2506
      %2508 = vmatprep.subr.mxu0 0.0
      %v2509 = vand.u32 %v210, 4294901760
      %2510 = vmatpush1.msra.mxu0 %v2509
      %2511 = vmatprep.subr.mxu0 0.0
      %v2512 = vand.u32 %v209, 4294901760
      %2513 = vmatpush1.msra.mxu0 %v2512
      %2514 = vmatprep.subr.mxu0 0.0
      %v2515 = vand.u32 %v208, 4294901760
      %2516 = vmatpush1.msra.mxu0 %v2515
      %2517 = vmatprep.subr.mxu0 0.0
      %v2518 = vand.u32 %v207, 4294901760
      %2519 = vmatpush1.msra.mxu0 %v2518
      %2520 = vmatprep.subr.mxu0 0.0
      %v2521 = vand.u32 %v206, 4294901760
      %2522 = vmatpush1.msra.mxu0 %v2521
      %2523 = vmatprep.subr.mxu0 0.0
      %v2524 = vand.u32 %v205, 4294901760
      %2525 = vmatpush1.msra.mxu0 %v2524
      %2526 = vmatprep.subr.mxu0 0.0
      %v2527 = vand.u32 %v204, 4294901760
      %2528 = vmatpush1.msra.mxu0 %v2527
      %2529 = vmatprep.subr.mxu0 0.0
      %v2530 = vand.u32 %v203, 4294901760
      %2531 = vmatpush1.msra.mxu0 %v2530
      %2532 = vmatprep.subr.mxu0 0.0
      %v2533 = vand.u32 %v202, 4294901760
      %2534 = vmatpush1.msra.mxu0 %v2533
      %2535 = vmatprep.subr.mxu0 0.0
      %v2536 = vand.u32 %v201, 4294901760
      %2537 = vmatpush1.msra.mxu0 %v2536
      %2538 = vmatprep.subr.mxu0 0.0
      %v2539 = vand.u32 %v200, 4294901760
      %2540 = vmatpush1.msra.mxu0 %v2539
      %2541 = vmatprep.subr.mxu0 0.0
      %2542 = vmatpush2.msra.mxu0 0.0
      %2543 = vmatprep.subr.mxu0 0.0
      %2544 = vmatpush2.msra.mxu0 0.0
      %2545 = vmatprep.subr.mxu0 0.0
      %2546 = vmatpush2.msra.mxu0 0.0
      %2547 = vmatprep.subr.mxu0 0.0
      %2548 = vmatpush2.msra.mxu0 0.0
      %2549 = vmatprep.subr.mxu0 0.0
      %2550 = vmatpush2.msra.mxu0 0.0
      %2551 = vmatprep.subr.mxu0 0.0
      %2552 = vmatpush2.msra.mxu0 0.0
      %2553 = vmatprep.subr.mxu0 0.0
      %2554 = vmatpush2.msra.mxu0 0.0
      %2555 = vmatprep.subr.mxu0 0.0
      %2556 = vmatpush2.msra.mxu0 0.0
      %2557 = vmatprep.subr.mxu0 0.0
      %2558 = vmatpush2.msra.mxu0 0.0
      %2559 = vmatprep.subr.mxu0 0.0
      %2560 = vmatpush2.msra.mxu0 0.0
      %2561 = vmatprep.subr.mxu0 0.0
      %2562 = vmatpush2.msra.mxu0 0.0
      %2563 = vmatprep.subr.mxu0 0.0
      %2564 = vmatpush2.msra.mxu0 0.0
      %2565 = vmatprep.subr.mxu0 0.0
      %2566 = vmatpush2.msra.mxu0 0.0
      %2567 = vmatprep.subr.mxu0 0.0
      %2568 = vmatpush2.msra.mxu0 0.0
      %2569 = vmatprep.subr.mxu0 0.0
      %2570 = vmatpush2.msra.mxu0 0.0
      %2571 = vmatprep.subr.mxu0 0.0
      %2572 = vmatpush2.msra.mxu0 0.0
      %2573 = vmatprep.mubr.f32.mxu0 0.0
      %v2574 = vand.u32 %v2146, 4294901760
      %v2575 = vsub.f32 %v2146, %v2574
      %v2576 = vand.u32 %v2575, 4294901760
      %2577 = vmatmul.mubr.f32.gmra.mxu0 %v2576
      %v2578 = vpop.f32.mrf.mxu0
      %v2579 = vadd.f32 %v2490, %v2578
      %v2580 = vpop.f32.mrf.mxu0
      %2581 = vdwg.mxu0
      %2582 = vmatprep.subr.mxu0 0.0
      %v2583 = vand.u32 %v215, 4294901760
      %v2584 = vsub.f32 %v215, %v2583
      %v2585 = vand.u32 %v2584, 4294901760
      %2586 = vmatpush1.msra.mxu0 %v2585
      %2587 = vmatprep.subr.mxu0 0.0
      %v2588 = vand.u32 %v214, 4294901760
      %v2589 = vsub.f32 %v214, %v2588
      %v2590 = vand.u32 %v2589, 4294901760
      %2591 = vmatpush1.msra.mxu0 %v2590
      %2592 = vmatprep.subr.mxu0 0.0
      %v2593 = vand.u32 %v213, 4294901760
      %v2594 = vsub.f32 %v213, %v2593
      %v2595 = vand.u32 %v2594, 4294901760
      %2596 = vmatpush1.msra.mxu0 %v2595
      %2597 = vmatprep.subr.mxu0 0.0
      %v2598 = vand.u32 %v212, 4294901760
      %v2599 = vsub.f32 %v212, %v2598
      %v2600 = vand.u32 %v2599, 4294901760
      %2601 = vmatpush1.msra.mxu0 %v2600
      %2602 = vmatprep.subr.mxu0 0.0
      %v2603 = vand.u32 %v211, 4294901760
      %v2604 = vsub.f32 %v211, %v2603
      %v2605 = vand.u32 %v2604, 4294901760
      %2606 = vmatpush1.msra.mxu0 %v2605
      %2607 = vmatprep.subr.mxu0 0.0
      %v2608 = vand.u32 %v210, 4294901760
      %v2609 = vsub.f32 %v210, %v2608
      %v2610 = vand.u32 %v2609, 4294901760
      %2611 = vmatpush1.msra.mxu0 %v2610
      %2612 = vmatprep.subr.mxu0 0.0
      %v2613 = vand.u32 %v209, 4294901760
      %v2614 = vsub.f32 %v209, %v2613
      %v2615 = vand.u32 %v2614, 4294901760
      %2616 = vmatpush1.msra.mxu0 %v2615
      %2617 = vmatprep.subr.mxu0 0.0
      %v2618 = vand.u32 %v208, 4294901760
      %v2619 = vsub.f32 %v208, %v2618
      %v2620 = vand.u32 %v2619, 4294901760
      %2621 = vmatpush1.msra.mxu0 %v2620
      %2622 = vmatprep.subr.mxu0 0.0
      %v2623 = vand.u32 %v207, 4294901760
      %v2624 = vsub.f32 %v207, %v2623
      %v2625 = vand.u32 %v2624, 4294901760
      %2626 = vmatpush1.msra.mxu0 %v2625
      %2627 = vmatprep.subr.mxu0 0.0
      %v2628 = vand.u32 %v206, 4294901760
      %v2629 = vsub.f32 %v206, %v2628
      %v2630 = vand.u32 %v2629, 4294901760
      %2631 = vmatpush1.msra.mxu0 %v2630
      %2632 = vmatprep.subr.mxu0 0.0
      %v2633 = vand.u32 %v205, 4294901760
      %v2634 = vsub.f32 %v205, %v2633
      %v2635 = vand.u32 %v2634, 4294901760
      %2636 = vmatpush1.msra.mxu0 %v2635
      %2637 = vmatprep.subr.mxu0 0.0
      %v2638 = vand.u32 %v204, 4294901760
      %v2639 = vsub.f32 %v204, %v2638
      %v2640 = vand.u32 %v2639, 4294901760
      %2641 = vmatpush1.msra.mxu0 %v2640
      %2642 = vmatprep.subr.mxu0 0.0
      %v2643 = vand.u32 %v203, 4294901760
      %v2644 = vsub.f32 %v203, %v2643
      %v2645 = vand.u32 %v2644, 4294901760
      %2646 = vmatpush1.msra.mxu0 %v2645
      %2647 = vmatprep.subr.mxu0 0.0
      %v2648 = vand.u32 %v202, 4294901760
      %v2649 = vsub.f32 %v202, %v2648
      %v2650 = vand.u32 %v2649, 4294901760
      %2651 = vmatpush1.msra.mxu0 %v2650
      %2652 = vmatprep.subr.mxu0 0.0
      %v2653 = vand.u32 %v201, 4294901760
      %v2654 = vsub.f32 %v201, %v2653
      %v2655 = vand.u32 %v2654, 4294901760
      %2656 = vmatpush1.msra.mxu0 %v2655
      %2657 = vmatprep.subr.mxu0 0.0
      %v2658 = vand.u32 %v200, 4294901760
      %v2659 = vsub.f32 %v200, %v2658
      %v2660 = vand.u32 %v2659, 4294901760
      %2661 = vmatpush1.msra.mxu0 %v2660
      %2662 = vmatprep.subr.mxu0 0.0
      %2663 = vmatpush2.msra.mxu0 0.0
      %2664 = vmatprep.subr.mxu0 0.0
      %2665 = vmatpush2.msra.mxu0 0.0
      %2666 = vmatprep.subr.mxu0 0.0
      %2667 = vmatpush2.msra.mxu0 0.0
      %2668 = vmatprep.subr.mxu0 0.0
      %2669 = vmatpush2.msra.mxu0 0.0
      %2670 = vmatprep.subr.mxu0 0.0
      %2671 = vmatpush2.msra.mxu0 0.0
      %2672 = vmatprep.subr.mxu0 0.0
      %2673 = vmatpush2.msra.mxu0 0.0
      %2674 = vmatprep.subr.mxu0 0.0
      %2675 = vmatpush2.msra.mxu0 0.0
      %2676 = vmatprep.subr.mxu0 0.0
      %2677 = vmatpush2.msra.mxu0 0.0
      %2678 = vmatprep.subr.mxu0 0.0
      %2679 = vmatpush2.msra.mxu0 0.0
      %2680 = vmatprep.subr.mxu0 0.0
      %2681 = vmatpush2.msra.mxu0 0.0
      %2682 = vmatprep.subr.mxu0 0.0
      %2683 = vmatpush2.msra.mxu0 0.0
      %2684 = vmatprep.subr.mxu0 0.0
      %2685 = vmatpush2.msra.mxu0 0.0
      %2686 = vmatprep.subr.mxu0 0.0
      %2687 = vmatpush2.msra.mxu0 0.0
      %2688 = vmatprep.subr.mxu0 0.0
      %2689 = vmatpush2.msra.mxu0 0.0
      %2690 = vmatprep.subr.mxu0 0.0
      %2691 = vmatpush2.msra.mxu0 0.0
      %2692 = vmatprep.subr.mxu0 0.0
      %2693 = vmatpush2.msra.mxu0 0.0
      %2694 = vmatprep.mubr.f32.mxu0 0.0
      %v2695 = vand.u32 %v2146, 4294901760
      %2696 = vmatmul.mubr.f32.gmra.mxu0 %v2695
      %v2697 = vpop.f32.mrf.mxu0
      %v2698 = vadd.f32 %v2579, %v2697
      %v2699 = vpop.f32.mrf.mxu0
      %2700 = vdwg.mxu0
      %2701 = vmatprep.subr.mxu0 0.0
      %v2702 = vand.u32 %v215, 4294901760
      %2703 = vmatpush1.msra.mxu0 %v2702
      %2704 = vmatprep.subr.mxu0 0.0
      %v2705 = vand.u32 %v214, 4294901760
      %2706 = vmatpush1.msra.mxu0 %v2705
      %2707 = vmatprep.subr.mxu0 0.0
      %v2708 = vand.u32 %v213, 4294901760
      %2709 = vmatpush1.msra.mxu0 %v2708
      %2710 = vmatprep.subr.mxu0 0.0
      %v2711 = vand.u32 %v212, 4294901760
      %2712 = vmatpush1.msra.mxu0 %v2711
      %2713 = vmatprep.subr.mxu0 0.0
      %v2714 = vand.u32 %v211, 4294901760
      %2715 = vmatpush1.msra.mxu0 %v2714
      %2716 = vmatprep.subr.mxu0 0.0
      %v2717 = vand.u32 %v210, 4294901760
      %2718 = vmatpush1.msra.mxu0 %v2717
      %2719 = vmatprep.subr.mxu0 0.0
      %v2720 = vand.u32 %v209, 4294901760
      %2721 = vmatpush1.msra.mxu0 %v2720
      %2722 = vmatprep.subr.mxu0 0.0
      %v2723 = vand.u32 %v208, 4294901760
      %2724 = vmatpush1.msra.mxu0 %v2723
      %2725 = vmatprep.subr.mxu0 0.0
      %v2726 = vand.u32 %v207, 4294901760
      %2727 = vmatpush1.msra.mxu0 %v2726
      %2728 = vmatprep.subr.mxu0 0.0
      %v2729 = vand.u32 %v206, 4294901760
      %2730 = vmatpush1.msra.mxu0 %v2729
      %2731 = vmatprep.subr.mxu0 0.0
      %v2732 = vand.u32 %v205, 4294901760
      %2733 = vmatpush1.msra.mxu0 %v2732
      %2734 = vmatprep.subr.mxu0 0.0
      %v2735 = vand.u32 %v204, 4294901760
      %2736 = vmatpush1.msra.mxu0 %v2735
      %2737 = vmatprep.subr.mxu0 0.0
      %v2738 = vand.u32 %v203, 4294901760
      %2739 = vmatpush1.msra.mxu0 %v2738
      %2740 = vmatprep.subr.mxu0 0.0
      %v2741 = vand.u32 %v202, 4294901760
      %2742 = vmatpush1.msra.mxu0 %v2741
      %2743 = vmatprep.subr.mxu0 0.0
      %v2744 = vand.u32 %v201, 4294901760
      %2745 = vmatpush1.msra.mxu0 %v2744
      %2746 = vmatprep.subr.mxu0 0.0
      %v2747 = vand.u32 %v200, 4294901760
      %2748 = vmatpush1.msra.mxu0 %v2747
      %2749 = vmatprep.subr.mxu0 0.0
      %2750 = vmatpush2.msra.mxu0 0.0
      %2751 = vmatprep.subr.mxu0 0.0
      %2752 = vmatpush2.msra.mxu0 0.0
      %2753 = vmatprep.subr.mxu0 0.0
      %2754 = vmatpush2.msra.mxu0 0.0
      %2755 = vmatprep.subr.mxu0 0.0
      %2756 = vmatpush2.msra.mxu0 0.0
      %2757 = vmatprep.subr.mxu0 0.0
      %2758 = vmatpush2.msra.mxu0 0.0
      %2759 = vmatprep.subr.mxu0 0.0
      %2760 = vmatpush2.msra.mxu0 0.0
      %2761 = vmatprep.subr.mxu0 0.0
      %2762 = vmatpush2.msra.mxu0 0.0
      %2763 = vmatprep.subr.mxu0 0.0
      %2764 = vmatpush2.msra.mxu0 0.0
      %2765 = vmatprep.subr.mxu0 0.0
      %2766 = vmatpush2.msra.mxu0 0.0
      %2767 = vmatprep.subr.mxu0 0.0
      %2768 = vmatpush2.msra.mxu0 0.0
      %2769 = vmatprep.subr.mxu0 0.0
      %2770 = vmatpush2.msra.mxu0 0.0
      %2771 = vmatprep.subr.mxu0 0.0
      %2772 = vmatpush2.msra.mxu0 0.0
      %2773 = vmatprep.subr.mxu0 0.0
      %2774 = vmatpush2.msra.mxu0 0.0
      %2775 = vmatprep.subr.mxu0 0.0
      %2776 = vmatpush2.msra.mxu0 0.0
      %2777 = vmatprep.subr.mxu0 0.0
      %2778 = vmatpush2.msra.mxu0 0.0
      %2779 = vmatprep.subr.mxu0 0.0
      %2780 = vmatpush2.msra.mxu0 0.0
      %2781 = vmatprep.mubr.f32.mxu0 0.0
      %v2782 = vand.u32 %v2146, 4294901760
      %2783 = vmatmul.mubr.f32.gmra.mxu0 %v2782
      %v2784 = vpop.f32.mrf.mxu0
      %v2785 = vadd.f32 %v2698, %v2784
      %v2786 = vpop.f32.mrf.mxu0
      %2787 = vdwg.mxu0
      %v2788 = vmax.f32 %v856, %v1499
      %v2789 = vmax.f32 %v2788, %v2142
      %v2790 = vmax.f32 %v2789, %v2785
      %v2791 = vsub.f32 %v856, %v2790
      %v2792 = vmul.f32 %v2791, 1.442695
      %v2793 = vpow.pop %v2792
      %v2794 = vsub.f32 %v1499, %v2790
      %v2795 = vmul.f32 %v2794, 1.442695
      %v2796 = vpow.pop %v2795
      %v2797 = vsub.f32 %v2142, %v2790
      %v2798 = vmul.f32 %v2797, 1.442695
      %v2799 = vpow.pop %v2798
      %v2800 = vsub.f32 %v2785, %v2790
      %v2801 = vmul.f32 %v2800, 1.442695
      %v2802 = vpow.pop %v2801
      %v2803 = vadd.f32 %v2793, %v2796
      %v2804 = vadd.f32 %v2803, %v2799
      %v2805 = vadd.f32 %v2804, %v2802
      %v2806 = vrcp.pop %v2805
      %v2807 = vmul.f32 1.0, %v2806
      %v2808 = vmul.f32 %v2793, %v2807
      %vm2809 = vcmask 31744
      %v2811 = vsel %vm2809, %v2808, 0
      %vm2813 = vcmask 1043456
      %v2815 = vsel %vm2813, %v216, 0
      %2817 = vmatprep.subr.mxu0 0.0
      %2818 = vmatpush1.msra.mxu0 0.0
      %2819 = vmatprep.subr.mxu0 0.0
      %2820 = vmatpush1.msra.mxu0 0.0
      %2821 = vmatprep.subr.mxu0 0.0
      %2822 = vmatpush1.msra.mxu0 0.0
      %2823 = vmatprep.subr.mxu0 0.0
      %2824 = vmatpush1.msra.mxu0 0.0
      %2825 = vmatprep.subr.mxu0 0.0
      %2826 = vmatpush1.msra.mxu0 0.0
      %2827 = vmatprep.subr.mxu0 0.0
      %2828 = vmatpush1.msra.mxu0 0.0
      %2829 = vmatprep.subr.mxu0 0.0
      %2830 = vmatpush1.msra.mxu0 0.0
      %2831 = vmatprep.subr.mxu0 0.0
      %2832 = vmatpush1.msra.mxu0 0.0
      %2833 = vmatprep.subr.mxu0 0.0
      %2834 = vmatpush1.msra.mxu0 0.0
      %2835 = vmatprep.subr.mxu0 0.0
      %2836 = vmatpush1.msra.mxu0 0.0
      %2837 = vmatprep.subr.mxu0 0.0
      %2838 = vmatpush1.msra.mxu0 0.0
      %2839 = vmatprep.subr.mxu0 0.0
      %2840 = vmatpush1.msra.mxu0 0.0
      %2841 = vmatprep.subr.mxu0 0.0
      %2842 = vmatpush1.msra.mxu0 0.0
      %2843 = vmatprep.subr.mxu0 0.0
      %2844 = vmatpush1.msra.mxu0 0.0
      %2845 = vmatprep.subr.mxu0 0.0
      %2846 = vmatpush1.msra.mxu0 0.0
      %2847 = vmatprep.subr.mxu0 0.0
      %v2848 = vand.u32 %v2815, 4294901760
      %2849 = vmatpush1.msra.mxu0 %v2848
      %2850 = vmatprep.subr.mxu0 0.0
      %2851 = vmatpush2.msra.mxu0 0.0
      %2852 = vmatprep.subr.mxu0 0.0
      %2853 = vmatpush2.msra.mxu0 0.0
      %2854 = vmatprep.subr.mxu0 0.0
      %2855 = vmatpush2.msra.mxu0 0.0
      %2856 = vmatprep.subr.mxu0 0.0
      %2857 = vmatpush2.msra.mxu0 0.0
      %2858 = vmatprep.subr.mxu0 0.0
      %2859 = vmatpush2.msra.mxu0 0.0
      %2860 = vmatprep.subr.mxu0 0.0
      %2861 = vmatpush2.msra.mxu0 0.0
      %2862 = vmatprep.subr.mxu0 0.0
      %2863 = vmatpush2.msra.mxu0 0.0
      %2864 = vmatprep.subr.mxu0 0.0
      %2865 = vmatpush2.msra.mxu0 0.0
      %2866 = vmatprep.subr.mxu0 0.0
      %2867 = vmatpush2.msra.mxu0 0.0
      %2868 = vmatprep.subr.mxu0 0.0
      %2869 = vmatpush2.msra.mxu0 0.0
      %2870 = vmatprep.subr.mxu0 0.0
      %2871 = vmatpush2.msra.mxu0 0.0
      %2872 = vmatprep.subr.mxu0 0.0
      %2873 = vmatpush2.msra.mxu0 0.0
      %2874 = vmatprep.subr.mxu0 0.0
      %2875 = vmatpush2.msra.mxu0 0.0
      %2876 = vmatprep.subr.mxu0 0.0
      %2877 = vmatpush2.msra.mxu0 0.0
      %2878 = vmatprep.subr.mxu0 0.0
      %2879 = vmatpush2.msra.mxu0 0.0
      %2880 = vmatprep.subr.mxu0 0.0
      %2881 = vmatpush2.msra.mxu0 0.0
      %2882 = vmatprep.mubr.f32.mxu0 0.0
      %v2883 = vand.u32 %v2811, 4294901760
      %v2884 = vsub.f32 %v2811, %v2883
      %v2885 = vand.u32 %v2884, 4294901760
      %v2886 = vsub.f32 %v2884, %v2885
      %v2887 = vand.u32 %v2886, 4294901760
      %2888 = vmatmul.mubr.f32.gmra.mxu0 %v2887
      %v2889 = vpop.f32.mrf.mxu0
      %v2890 = vadd.f32 0.0, %v2889
      %v2891 = vpop.f32.mrf.mxu0
      %2892 = vdwg.mxu0
      %2893 = vmatprep.subr.mxu0 0.0
      %2894 = vmatpush1.msra.mxu0 0.0
      %2895 = vmatprep.subr.mxu0 0.0
      %2896 = vmatpush1.msra.mxu0 0.0
      %2897 = vmatprep.subr.mxu0 0.0
      %2898 = vmatpush1.msra.mxu0 0.0
      %2899 = vmatprep.subr.mxu0 0.0
      %2900 = vmatpush1.msra.mxu0 0.0
      %2901 = vmatprep.subr.mxu0 0.0
      %2902 = vmatpush1.msra.mxu0 0.0
      %2903 = vmatprep.subr.mxu0 0.0
      %2904 = vmatpush1.msra.mxu0 0.0
      %2905 = vmatprep.subr.mxu0 0.0
      %2906 = vmatpush1.msra.mxu0 0.0
      %2907 = vmatprep.subr.mxu0 0.0
      %2908 = vmatpush1.msra.mxu0 0.0
      %2909 = vmatprep.subr.mxu0 0.0
      %2910 = vmatpush1.msra.mxu0 0.0
      %2911 = vmatprep.subr.mxu0 0.0
      %2912 = vmatpush1.msra.mxu0 0.0
      %2913 = vmatprep.subr.mxu0 0.0
      %2914 = vmatpush1.msra.mxu0 0.0
      %2915 = vmatprep.subr.mxu0 0.0
      %2916 = vmatpush1.msra.mxu0 0.0
      %2917 = vmatprep.subr.mxu0 0.0
      %2918 = vmatpush1.msra.mxu0 0.0
      %2919 = vmatprep.subr.mxu0 0.0
      %2920 = vmatpush1.msra.mxu0 0.0
      %2921 = vmatprep.subr.mxu0 0.0
      %2922 = vmatpush1.msra.mxu0 0.0
      %2923 = vmatprep.subr.mxu0 0.0
      %v2924 = vand.u32 %v2815, 4294901760
      %v2925 = vsub.f32 %v2815, %v2924
      %v2926 = vand.u32 %v2925, 4294901760
      %v2927 = vsub.f32 %v2925, %v2926
      %v2928 = vand.u32 %v2927, 4294901760
      %2929 = vmatpush1.msra.mxu0 %v2928
      %2930 = vmatprep.subr.mxu0 0.0
      %2931 = vmatpush2.msra.mxu0 0.0
      %2932 = vmatprep.subr.mxu0 0.0
      %2933 = vmatpush2.msra.mxu0 0.0
      %2934 = vmatprep.subr.mxu0 0.0
      %2935 = vmatpush2.msra.mxu0 0.0
      %2936 = vmatprep.subr.mxu0 0.0
      %2937 = vmatpush2.msra.mxu0 0.0
      %2938 = vmatprep.subr.mxu0 0.0
      %2939 = vmatpush2.msra.mxu0 0.0
      %2940 = vmatprep.subr.mxu0 0.0
      %2941 = vmatpush2.msra.mxu0 0.0
      %2942 = vmatprep.subr.mxu0 0.0
      %2943 = vmatpush2.msra.mxu0 0.0
      %2944 = vmatprep.subr.mxu0 0.0
      %2945 = vmatpush2.msra.mxu0 0.0
      %2946 = vmatprep.subr.mxu0 0.0
      %2947 = vmatpush2.msra.mxu0 0.0
      %2948 = vmatprep.subr.mxu0 0.0
      %2949 = vmatpush2.msra.mxu0 0.0
      %2950 = vmatprep.subr.mxu0 0.0
      %2951 = vmatpush2.msra.mxu0 0.0
      %2952 = vmatprep.subr.mxu0 0.0
      %2953 = vmatpush2.msra.mxu0 0.0
      %2954 = vmatprep.subr.mxu0 0.0
      %2955 = vmatpush2.msra.mxu0 0.0
      %2956 = vmatprep.subr.mxu0 0.0
      %2957 = vmatpush2.msra.mxu0 0.0
      %2958 = vmatprep.subr.mxu0 0.0
      %2959 = vmatpush2.msra.mxu0 0.0
      %2960 = vmatprep.subr.mxu0 0.0
      %2961 = vmatpush2.msra.mxu0 0.0
      %2962 = vmatprep.mubr.f32.mxu0 0.0
      %v2963 = vand.u32 %v2811, 4294901760
      %2964 = vmatmul.mubr.f32.gmra.mxu0 %v2963
      %v2965 = vpop.f32.mrf.mxu0
      %v2966 = vadd.f32 %v2890, %v2965
      %v2967 = vpop.f32.mrf.mxu0
      %2968 = vdwg.mxu0
      %2969 = vmatprep.subr.mxu0 0.0
      %2970 = vmatpush1.msra.mxu0 0.0
      %2971 = vmatprep.subr.mxu0 0.0
      %2972 = vmatpush1.msra.mxu0 0.0
      %2973 = vmatprep.subr.mxu0 0.0
      %2974 = vmatpush1.msra.mxu0 0.0
      %2975 = vmatprep.subr.mxu0 0.0
      %2976 = vmatpush1.msra.mxu0 0.0
      %2977 = vmatprep.subr.mxu0 0.0
      %2978 = vmatpush1.msra.mxu0 0.0
      %2979 = vmatprep.subr.mxu0 0.0
      %2980 = vmatpush1.msra.mxu0 0.0
      %2981 = vmatprep.subr.mxu0 0.0
      %2982 = vmatpush1.msra.mxu0 0.0
      %2983 = vmatprep.subr.mxu0 0.0
      %2984 = vmatpush1.msra.mxu0 0.0
      %2985 = vmatprep.subr.mxu0 0.0
      %2986 = vmatpush1.msra.mxu0 0.0
      %2987 = vmatprep.subr.mxu0 0.0
      %2988 = vmatpush1.msra.mxu0 0.0
      %2989 = vmatprep.subr.mxu0 0.0
      %2990 = vmatpush1.msra.mxu0 0.0
      %2991 = vmatprep.subr.mxu0 0.0
      %2992 = vmatpush1.msra.mxu0 0.0
      %2993 = vmatprep.subr.mxu0 0.0
      %2994 = vmatpush1.msra.mxu0 0.0
      %2995 = vmatprep.subr.mxu0 0.0
      %2996 = vmatpush1.msra.mxu0 0.0
      %2997 = vmatprep.subr.mxu0 0.0
      %2998 = vmatpush1.msra.mxu0 0.0
      %2999 = vmatprep.subr.mxu0 0.0
      %v3000 = vand.u32 %v2815, 4294901760
      %v3001 = vsub.f32 %v2815, %v3000
      %3002 = vmatpush1.msra.mxu0 %v3001
      %3003 = vmatprep.subr.mxu0 0.0
      %3004 = vmatpush2.msra.mxu0 0.0
      %3005 = vmatprep.subr.mxu0 0.0
      %3006 = vmatpush2.msra.mxu0 0.0
      %3007 = vmatprep.subr.mxu0 0.0
      %3008 = vmatpush2.msra.mxu0 0.0
      %3009 = vmatprep.subr.mxu0 0.0
      %3010 = vmatpush2.msra.mxu0 0.0
      %3011 = vmatprep.subr.mxu0 0.0
      %3012 = vmatpush2.msra.mxu0 0.0
      %3013 = vmatprep.subr.mxu0 0.0
      %3014 = vmatpush2.msra.mxu0 0.0
      %3015 = vmatprep.subr.mxu0 0.0
      %3016 = vmatpush2.msra.mxu0 0.0
      %3017 = vmatprep.subr.mxu0 0.0
      %3018 = vmatpush2.msra.mxu0 0.0
      %3019 = vmatprep.subr.mxu0 0.0
      %3020 = vmatpush2.msra.mxu0 0.0
      %3021 = vmatprep.subr.mxu0 0.0
      %3022 = vmatpush2.msra.mxu0 0.0
      %3023 = vmatprep.subr.mxu0 0.0
      %3024 = vmatpush2.msra.mxu0 0.0
      %3025 = vmatprep.subr.mxu0 0.0
      %3026 = vmatpush2.msra.mxu0 0.0
      %3027 = vmatprep.subr.mxu0 0.0
      %3028 = vmatpush2.msra.mxu0 0.0
      %3029 = vmatprep.subr.mxu0 0.0
      %3030 = vmatpush2.msra.mxu0 0.0
      %3031 = vmatprep.subr.mxu0 0.0
      %3032 = vmatpush2.msra.mxu0 0.0
      %3033 = vmatprep.subr.mxu0 0.0
      %3034 = vmatpush2.msra.mxu0 0.0
      %3035 = vmatprep.mubr.f32.mxu0 0.0
      %v3036 = vand.u32 %v2811, 4294901760
      %v3037 = vsub.f32 %v2811, %v3036
      %3038 = vmatmul.mubr.f32.gmra.mxu0 %v3037
      %v3039 = vpop.f32.mrf.mxu0
      %v3040 = vadd.f32 %v2966, %v3039
      %v3041 = vpop.f32.mrf.mxu0
      %3042 = vdwg.mxu0
      %3043 = vmatprep.subr.mxu0 0.0
      %3044 = vmatpush1.msra.mxu0 0.0
      %3045 = vmatprep.subr.mxu0 0.0
      %3046 = vmatpush1.msra.mxu0 0.0
      %3047 = vmatprep.subr.mxu0 0.0
      %3048 = vmatpush1.msra.mxu0 0.0
      %3049 = vmatprep.subr.mxu0 0.0
      %3050 = vmatpush1.msra.mxu0 0.0
      %3051 = vmatprep.subr.mxu0 0.0
      %3052 = vmatpush1.msra.mxu0 0.0
      %3053 = vmatprep.subr.mxu0 0.0
      %3054 = vmatpush1.msra.mxu0 0.0
      %3055 = vmatprep.subr.mxu0 0.0
      %3056 = vmatpush1.msra.mxu0 0.0
      %3057 = vmatprep.subr.mxu0 0.0
      %3058 = vmatpush1.msra.mxu0 0.0
      %3059 = vmatprep.subr.mxu0 0.0
      %3060 = vmatpush1.msra.mxu0 0.0
      %3061 = vmatprep.subr.mxu0 0.0
      %3062 = vmatpush1.msra.mxu0 0.0
      %3063 = vmatprep.subr.mxu0 0.0
      %3064 = vmatpush1.msra.mxu0 0.0
      %3065 = vmatprep.subr.mxu0 0.0
      %3066 = vmatpush1.msra.mxu0 0.0
      %3067 = vmatprep.subr.mxu0 0.0
      %3068 = vmatpush1.msra.mxu0 0.0
      %3069 = vmatprep.subr.mxu0 0.0
      %3070 = vmatpush1.msra.mxu0 0.0
      %3071 = vmatprep.subr.mxu0 0.0
      %3072 = vmatpush1.msra.mxu0 0.0
      %3073 = vmatprep.subr.mxu0 0.0
      %v3074 = vand.u32 %v2815, 4294901760
      %3075 = vmatpush1.msra.mxu0 %v3074
      %3076 = vmatprep.subr.mxu0 0.0
      %3077 = vmatpush2.msra.mxu0 0.0
      %3078 = vmatprep.subr.mxu0 0.0
      %3079 = vmatpush2.msra.mxu0 0.0
      %3080 = vmatprep.subr.mxu0 0.0
      %3081 = vmatpush2.msra.mxu0 0.0
      %3082 = vmatprep.subr.mxu0 0.0
      %3083 = vmatpush2.msra.mxu0 0.0
      %3084 = vmatprep.subr.mxu0 0.0
      %3085 = vmatpush2.msra.mxu0 0.0
      %3086 = vmatprep.subr.mxu0 0.0
      %3087 = vmatpush2.msra.mxu0 0.0
      %3088 = vmatprep.subr.mxu0 0.0
      %3089 = vmatpush2.msra.mxu0 0.0
      %3090 = vmatprep.subr.mxu0 0.0
      %3091 = vmatpush2.msra.mxu0 0.0
      %3092 = vmatprep.subr.mxu0 0.0
      %3093 = vmatpush2.msra.mxu0 0.0
      %3094 = vmatprep.subr.mxu0 0.0
      %3095 = vmatpush2.msra.mxu0 0.0
      %3096 = vmatprep.subr.mxu0 0.0
      %3097 = vmatpush2.msra.mxu0 0.0
      %3098 = vmatprep.subr.mxu0 0.0
      %3099 = vmatpush2.msra.mxu0 0.0
      %3100 = vmatprep.subr.mxu0 0.0
      %3101 = vmatpush2.msra.mxu0 0.0
      %3102 = vmatprep.subr.mxu0 0.0
      %3103 = vmatpush2.msra.mxu0 0.0
      %3104 = vmatprep.subr.mxu0 0.0
      %3105 = vmatpush2.msra.mxu0 0.0
      %3106 = vmatprep.subr.mxu0 0.0
      %3107 = vmatpush2.msra.mxu0 0.0
      %3108 = vmatprep.mubr.f32.mxu0 0.0
      %v3109 = vand.u32 %v2811, 4294901760
      %v3110 = vsub.f32 %v2811, %v3109
      %v3111 = vand.u32 %v3110, 4294901760
      %3112 = vmatmul.mubr.f32.gmra.mxu0 %v3111
      %v3113 = vpop.f32.mrf.mxu0
      %v3114 = vadd.f32 %v3040, %v3113
      %v3115 = vpop.f32.mrf.mxu0
      %3116 = vdwg.mxu0
      %3117 = vmatprep.subr.mxu0 0.0
      %3118 = vmatpush1.msra.mxu0 0.0
      %3119 = vmatprep.subr.mxu0 0.0
      %3120 = vmatpush1.msra.mxu0 0.0
      %3121 = vmatprep.subr.mxu0 0.0
      %3122 = vmatpush1.msra.mxu0 0.0
      %3123 = vmatprep.subr.mxu0 0.0
      %3124 = vmatpush1.msra.mxu0 0.0
      %3125 = vmatprep.subr.mxu0 0.0
      %3126 = vmatpush1.msra.mxu0 0.0
      %3127 = vmatprep.subr.mxu0 0.0
      %3128 = vmatpush1.msra.mxu0 0.0
      %3129 = vmatprep.subr.mxu0 0.0
      %3130 = vmatpush1.msra.mxu0 0.0
      %3131 = vmatprep.subr.mxu0 0.0
      %3132 = vmatpush1.msra.mxu0 0.0
      %3133 = vmatprep.subr.mxu0 0.0
      %3134 = vmatpush1.msra.mxu0 0.0
      %3135 = vmatprep.subr.mxu0 0.0
      %3136 = vmatpush1.msra.mxu0 0.0
      %3137 = vmatprep.subr.mxu0 0.0
      %3138 = vmatpush1.msra.mxu0 0.0
      %3139 = vmatprep.subr.mxu0 0.0
      %3140 = vmatpush1.msra.mxu0 0.0
      %3141 = vmatprep.subr.mxu0 0.0
      %3142 = vmatpush1.msra.mxu0 0.0
      %3143 = vmatprep.subr.mxu0 0.0
      %3144 = vmatpush1.msra.mxu0 0.0
      %3145 = vmatprep.subr.mxu0 0.0
      %3146 = vmatpush1.msra.mxu0 0.0
      %3147 = vmatprep.subr.mxu0 0.0
      %v3148 = vand.u32 %v2815, 4294901760
      %v3149 = vsub.f32 %v2815, %v3148
      %v3150 = vand.u32 %v3149, 4294901760
      %3151 = vmatpush1.msra.mxu0 %v3150
      %3152 = vmatprep.subr.mxu0 0.0
      %3153 = vmatpush2.msra.mxu0 0.0
      %3154 = vmatprep.subr.mxu0 0.0
      %3155 = vmatpush2.msra.mxu0 0.0
      %3156 = vmatprep.subr.mxu0 0.0
      %3157 = vmatpush2.msra.mxu0 0.0
      %3158 = vmatprep.subr.mxu0 0.0
      %3159 = vmatpush2.msra.mxu0 0.0
      %3160 = vmatprep.subr.mxu0 0.0
      %3161 = vmatpush2.msra.mxu0 0.0
      %3162 = vmatprep.subr.mxu0 0.0
      %3163 = vmatpush2.msra.mxu0 0.0
      %3164 = vmatprep.subr.mxu0 0.0
      %3165 = vmatpush2.msra.mxu0 0.0
      %3166 = vmatprep.subr.mxu0 0.0
      %3167 = vmatpush2.msra.mxu0 0.0
      %3168 = vmatprep.subr.mxu0 0.0
      %3169 = vmatpush2.msra.mxu0 0.0
      %3170 = vmatprep.subr.mxu0 0.0
      %3171 = vmatpush2.msra.mxu0 0.0
      %3172 = vmatprep.subr.mxu0 0.0
      %3173 = vmatpush2.msra.mxu0 0.0
      %3174 = vmatprep.subr.mxu0 0.0
      %3175 = vmatpush2.msra.mxu0 0.0
      %3176 = vmatprep.subr.mxu0 0.0
      %3177 = vmatpush2.msra.mxu0 0.0
      %3178 = vmatprep.subr.mxu0 0.0
      %3179 = vmatpush2.msra.mxu0 0.0
      %3180 = vmatprep.subr.mxu0 0.0
      %3181 = vmatpush2.msra.mxu0 0.0
      %3182 = vmatprep.subr.mxu0 0.0
      %3183 = vmatpush2.msra.mxu0 0.0
      %3184 = vmatprep.mubr.f32.mxu0 0.0
      %v3185 = vand.u32 %v2811, 4294901760
      %3186 = vmatmul.mubr.f32.gmra.mxu0 %v3185
      %v3187 = vpop.f32.mrf.mxu0
      %v3188 = vadd.f32 %v3114, %v3187
      %v3189 = vpop.f32.mrf.mxu0
      %3190 = vdwg.mxu0
      %3191 = vmatprep.subr.mxu0 0.0
      %3192 = vmatpush1.msra.mxu0 0.0
      %3193 = vmatprep.subr.mxu0 0.0
      %3194 = vmatpush1.msra.mxu0 0.0
      %3195 = vmatprep.subr.mxu0 0.0
      %3196 = vmatpush1.msra.mxu0 0.0
      %3197 = vmatprep.subr.mxu0 0.0
      %3198 = vmatpush1.msra.mxu0 0.0
      %3199 = vmatprep.subr.mxu0 0.0
      %3200 = vmatpush1.msra.mxu0 0.0
      %3201 = vmatprep.subr.mxu0 0.0
      %3202 = vmatpush1.msra.mxu0 0.0
      %3203 = vmatprep.subr.mxu0 0.0
      %3204 = vmatpush1.msra.mxu0 0.0
      %3205 = vmatprep.subr.mxu0 0.0
      %3206 = vmatpush1.msra.mxu0 0.0
      %3207 = vmatprep.subr.mxu0 0.0
      %3208 = vmatpush1.msra.mxu0 0.0
      %3209 = vmatprep.subr.mxu0 0.0
      %3210 = vmatpush1.msra.mxu0 0.0
      %3211 = vmatprep.subr.mxu0 0.0
      %3212 = vmatpush1.msra.mxu0 0.0
      %3213 = vmatprep.subr.mxu0 0.0
      %3214 = vmatpush1.msra.mxu0 0.0
      %3215 = vmatprep.subr.mxu0 0.0
      %3216 = vmatpush1.msra.mxu0 0.0
      %3217 = vmatprep.subr.mxu0 0.0
      %3218 = vmatpush1.msra.mxu0 0.0
      %3219 = vmatprep.subr.mxu0 0.0
      %3220 = vmatpush1.msra.mxu0 0.0
      %3221 = vmatprep.subr.mxu0 0.0
      %v3222 = vand.u32 %v2815, 4294901760
      %3223 = vmatpush1.msra.mxu0 %v3222
      %3224 = vmatprep.subr.mxu0 0.0
      %3225 = vmatpush2.msra.mxu0 0.0
      %3226 = vmatprep.subr.mxu0 0.0
      %3227 = vmatpush2.msra.mxu0 0.0
      %3228 = vmatprep.subr.mxu0 0.0
      %3229 = vmatpush2.msra.mxu0 0.0
      %3230 = vmatprep.subr.mxu0 0.0
      %3231 = vmatpush2.msra.mxu0 0.0
      %3232 = vmatprep.subr.mxu0 0.0
      %3233 = vmatpush2.msra.mxu0 0.0
      %3234 = vmatprep.subr.mxu0 0.0
      %3235 = vmatpush2.msra.mxu0 0.0
      %3236 = vmatprep.subr.mxu0 0.0
      %3237 = vmatpush2.msra.mxu0 0.0
      %3238 = vmatprep.subr.mxu0 0.0
      %3239 = vmatpush2.msra.mxu0 0.0
      %3240 = vmatprep.subr.mxu0 0.0
      %3241 = vmatpush2.msra.mxu0 0.0
      %3242 = vmatprep.subr.mxu0 0.0
      %3243 = vmatpush2.msra.mxu0 0.0
      %3244 = vmatprep.subr.mxu0 0.0
      %3245 = vmatpush2.msra.mxu0 0.0
      %3246 = vmatprep.subr.mxu0 0.0
      %3247 = vmatpush2.msra.mxu0 0.0
      %3248 = vmatprep.subr.mxu0 0.0
      %3249 = vmatpush2.msra.mxu0 0.0
      %3250 = vmatprep.subr.mxu0 0.0
      %3251 = vmatpush2.msra.mxu0 0.0
      %3252 = vmatprep.subr.mxu0 0.0
      %3253 = vmatpush2.msra.mxu0 0.0
      %3254 = vmatprep.subr.mxu0 0.0
      %3255 = vmatpush2.msra.mxu0 0.0
      %3256 = vmatprep.mubr.f32.mxu0 0.0
      %v3257 = vand.u32 %v2811, 4294901760
      %3258 = vmatmul.mubr.f32.gmra.mxu0 %v3257
      %v3259 = vpop.f32.mrf.mxu0
      %v3260 = vadd.f32 %v3188, %v3259
      %v3261 = vpop.f32.mrf.mxu0
      %3262 = vdwg.mxu0
      %v3263 = vmul.f32 %v217, %v3260
      %v3264 = vadd.f32 %v3263, 0.0
      %v3265 = vmul.f32 %v2796, %v2807
      %v3267 = vsel %vm2809, %v3265, 0
      %3269 = vmatprep.subr.mxu0 0.0
      %3270 = vmatpush1.msra.mxu0 0.0
      %3271 = vmatprep.subr.mxu0 0.0
      %3272 = vmatpush1.msra.mxu0 0.0
      %3273 = vmatprep.subr.mxu0 0.0
      %3274 = vmatpush1.msra.mxu0 0.0
      %3275 = vmatprep.subr.mxu0 0.0
      %3276 = vmatpush1.msra.mxu0 0.0
      %3277 = vmatprep.subr.mxu0 0.0
      %3278 = vmatpush1.msra.mxu0 0.0
      %3279 = vmatprep.subr.mxu0 0.0
      %3280 = vmatpush1.msra.mxu0 0.0
      %3281 = vmatprep.subr.mxu0 0.0
      %3282 = vmatpush1.msra.mxu0 0.0
      %3283 = vmatprep.subr.mxu0 0.0
      %3284 = vmatpush1.msra.mxu0 0.0
      %3285 = vmatprep.subr.mxu0 0.0
      %3286 = vmatpush1.msra.mxu0 0.0
      %3287 = vmatprep.subr.mxu0 0.0
      %3288 = vmatpush1.msra.mxu0 0.0
      %3289 = vmatprep.subr.mxu0 0.0
      %3290 = vmatpush1.msra.mxu0 0.0
      %3291 = vmatprep.subr.mxu0 0.0
      %3292 = vmatpush1.msra.mxu0 0.0
      %3293 = vmatprep.subr.mxu0 0.0
      %3294 = vmatpush1.msra.mxu0 0.0
      %3295 = vmatprep.subr.mxu0 0.0
      %3296 = vmatpush1.msra.mxu0 0.0
      %3297 = vmatprep.subr.mxu0 0.0
      %3298 = vmatpush1.msra.mxu0 0.0
      %3299 = vmatprep.subr.mxu0 0.0
      %v3300 = vand.u32 %v2815, 4294901760
      %3301 = vmatpush1.msra.mxu0 %v3300
      %3302 = vmatprep.subr.mxu0 0.0
      %3303 = vmatpush2.msra.mxu0 0.0
      %3304 = vmatprep.subr.mxu0 0.0
      %3305 = vmatpush2.msra.mxu0 0.0
      %3306 = vmatprep.subr.mxu0 0.0
      %3307 = vmatpush2.msra.mxu0 0.0
      %3308 = vmatprep.subr.mxu0 0.0
      %3309 = vmatpush2.msra.mxu0 0.0
      %3310 = vmatprep.subr.mxu0 0.0
      %3311 = vmatpush2.msra.mxu0 0.0
      %3312 = vmatprep.subr.mxu0 0.0
      %3313 = vmatpush2.msra.mxu0 0.0
      %3314 = vmatprep.subr.mxu0 0.0
      %3315 = vmatpush2.msra.mxu0 0.0
      %3316 = vmatprep.subr.mxu0 0.0
      %3317 = vmatpush2.msra.mxu0 0.0
      %3318 = vmatprep.subr.mxu0 0.0
      %3319 = vmatpush2.msra.mxu0 0.0
      %3320 = vmatprep.subr.mxu0 0.0
      %3321 = vmatpush2.msra.mxu0 0.0
      %3322 = vmatprep.subr.mxu0 0.0
      %3323 = vmatpush2.msra.mxu0 0.0
      %3324 = vmatprep.subr.mxu0 0.0
      %3325 = vmatpush2.msra.mxu0 0.0
      %3326 = vmatprep.subr.mxu0 0.0
      %3327 = vmatpush2.msra.mxu0 0.0
      %3328 = vmatprep.subr.mxu0 0.0
      %3329 = vmatpush2.msra.mxu0 0.0
      %3330 = vmatprep.subr.mxu0 0.0
      %3331 = vmatpush2.msra.mxu0 0.0
      %3332 = vmatprep.subr.mxu0 0.0
      %3333 = vmatpush2.msra.mxu0 0.0
      %3334 = vmatprep.mubr.f32.mxu0 0.0
      %v3335 = vand.u32 %v3267, 4294901760
      %v3336 = vsub.f32 %v3267, %v3335
      %v3337 = vand.u32 %v3336, 4294901760
      %v3338 = vsub.f32 %v3336, %v3337
      %v3339 = vand.u32 %v3338, 4294901760
      %3340 = vmatmul.mubr.f32.gmra.mxu0 %v3339
      %v3341 = vpop.f32.mrf.mxu0
      %v3342 = vadd.f32 0.0, %v3341
      %v3343 = vpop.f32.mrf.mxu0
      %3344 = vdwg.mxu0
      %3345 = vmatprep.subr.mxu0 0.0
      %3346 = vmatpush1.msra.mxu0 0.0
      %3347 = vmatprep.subr.mxu0 0.0
      %3348 = vmatpush1.msra.mxu0 0.0
      %3349 = vmatprep.subr.mxu0 0.0
      %3350 = vmatpush1.msra.mxu0 0.0
      %3351 = vmatprep.subr.mxu0 0.0
      %3352 = vmatpush1.msra.mxu0 0.0
      %3353 = vmatprep.subr.mxu0 0.0
      %3354 = vmatpush1.msra.mxu0 0.0
      %3355 = vmatprep.subr.mxu0 0.0
      %3356 = vmatpush1.msra.mxu0 0.0
      %3357 = vmatprep.subr.mxu0 0.0
      %3358 = vmatpush1.msra.mxu0 0.0
      %3359 = vmatprep.subr.mxu0 0.0
      %3360 = vmatpush1.msra.mxu0 0.0
      %3361 = vmatprep.subr.mxu0 0.0
      %3362 = vmatpush1.msra.mxu0 0.0
      %3363 = vmatprep.subr.mxu0 0.0
      %3364 = vmatpush1.msra.mxu0 0.0
      %3365 = vmatprep.subr.mxu0 0.0
      %3366 = vmatpush1.msra.mxu0 0.0
      %3367 = vmatprep.subr.mxu0 0.0
      %3368 = vmatpush1.msra.mxu0 0.0
      %3369 = vmatprep.subr.mxu0 0.0
      %3370 = vmatpush1.msra.mxu0 0.0
      %3371 = vmatprep.subr.mxu0 0.0
      %3372 = vmatpush1.msra.mxu0 0.0
      %3373 = vmatprep.subr.mxu0 0.0
      %3374 = vmatpush1.msra.mxu0 0.0
      %3375 = vmatprep.subr.mxu0 0.0
      %v3376 = vand.u32 %v2815, 4294901760
      %v3377 = vsub.f32 %v2815, %v3376
      %v3378 = vand.u32 %v3377, 4294901760
      %v3379 = vsub.f32 %v3377, %v3378
      %v3380 = vand.u32 %v3379, 4294901760
      %3381 = vmatpush1.msra.mxu0 %v3380
      %3382 = vmatprep.subr.mxu0 0.0
      %3383 = vmatpush2.msra.mxu0 0.0
      %3384 = vmatprep.subr.mxu0 0.0
      %3385 = vmatpush2.msra.mxu0 0.0
      %3386 = vmatprep.subr.mxu0 0.0
      %3387 = vmatpush2.msra.mxu0 0.0
      %3388 = vmatprep.subr.mxu0 0.0
      %3389 = vmatpush2.msra.mxu0 0.0
      %3390 = vmatprep.subr.mxu0 0.0
      %3391 = vmatpush2.msra.mxu0 0.0
      %3392 = vmatprep.subr.mxu0 0.0
      %3393 = vmatpush2.msra.mxu0 0.0
      %3394 = vmatprep.subr.mxu0 0.0
      %3395 = vmatpush2.msra.mxu0 0.0
      %3396 = vmatprep.subr.mxu0 0.0
      %3397 = vmatpush2.msra.mxu0 0.0
      %3398 = vmatprep.subr.mxu0 0.0
      %3399 = vmatpush2.msra.mxu0 0.0
      %3400 = vmatprep.subr.mxu0 0.0
      %3401 = vmatpush2.msra.mxu0 0.0
      %3402 = vmatprep.subr.mxu0 0.0
      %3403 = vmatpush2.msra.mxu0 0.0
      %3404 = vmatprep.subr.mxu0 0.0
      %3405 = vmatpush2.msra.mxu0 0.0
      %3406 = vmatprep.subr.mxu0 0.0
      %3407 = vmatpush2.msra.mxu0 0.0
      %3408 = vmatprep.subr.mxu0 0.0
      %3409 = vmatpush2.msra.mxu0 0.0
      %3410 = vmatprep.subr.mxu0 0.0
      %3411 = vmatpush2.msra.mxu0 0.0
      %3412 = vmatprep.subr.mxu0 0.0
      %3413 = vmatpush2.msra.mxu0 0.0
      %3414 = vmatprep.mubr.f32.mxu0 0.0
      %v3415 = vand.u32 %v3267, 4294901760
      %3416 = vmatmul.mubr.f32.gmra.mxu0 %v3415
      %v3417 = vpop.f32.mrf.mxu0
      %v3418 = vadd.f32 %v3342, %v3417
      %v3419 = vpop.f32.mrf.mxu0
      %3420 = vdwg.mxu0
      %3421 = vmatprep.subr.mxu0 0.0
      %3422 = vmatpush1.msra.mxu0 0.0
      %3423 = vmatprep.subr.mxu0 0.0
      %3424 = vmatpush1.msra.mxu0 0.0
      %3425 = vmatprep.subr.mxu0 0.0
      %3426 = vmatpush1.msra.mxu0 0.0
      %3427 = vmatprep.subr.mxu0 0.0
      %3428 = vmatpush1.msra.mxu0 0.0
      %3429 = vmatprep.subr.mxu0 0.0
      %3430 = vmatpush1.msra.mxu0 0.0
      %3431 = vmatprep.subr.mxu0 0.0
      %3432 = vmatpush1.msra.mxu0 0.0
      %3433 = vmatprep.subr.mxu0 0.0
      %3434 = vmatpush1.msra.mxu0 0.0
      %3435 = vmatprep.subr.mxu0 0.0
      %3436 = vmatpush1.msra.mxu0 0.0
      %3437 = vmatprep.subr.mxu0 0.0
      %3438 = vmatpush1.msra.mxu0 0.0
      %3439 = vmatprep.subr.mxu0 0.0
      %3440 = vmatpush1.msra.mxu0 0.0
      %3441 = vmatprep.subr.mxu0 0.0
      %3442 = vmatpush1.msra.mxu0 0.0
      %3443 = vmatprep.subr.mxu0 0.0
      %3444 = vmatpush1.msra.mxu0 0.0
      %3445 = vmatprep.subr.mxu0 0.0
      %3446 = vmatpush1.msra.mxu0 0.0
      %3447 = vmatprep.subr.mxu0 0.0
      %3448 = vmatpush1.msra.mxu0 0.0
      %3449 = vmatprep.subr.mxu0 0.0
      %3450 = vmatpush1.msra.mxu0 0.0
      %3451 = vmatprep.subr.mxu0 0.0
      %v3452 = vand.u32 %v2815, 4294901760
      %v3453 = vsub.f32 %v2815, %v3452
      %3454 = vmatpush1.msra.mxu0 %v3453
      %3455 = vmatprep.subr.mxu0 0.0
      %3456 = vmatpush2.msra.mxu0 0.0
      %3457 = vmatprep.subr.mxu0 0.0
      %3458 = vmatpush2.msra.mxu0 0.0
      %3459 = vmatprep.subr.mxu0 0.0
      %3460 = vmatpush2.msra.mxu0 0.0
      %3461 = vmatprep.subr.mxu0 0.0
      %3462 = vmatpush2.msra.mxu0 0.0
      %3463 = vmatprep.subr.mxu0 0.0
      %3464 = vmatpush2.msra.mxu0 0.0
      %3465 = vmatprep.subr.mxu0 0.0
      %3466 = vmatpush2.msra.mxu0 0.0
      %3467 = vmatprep.subr.mxu0 0.0
      %3468 = vmatpush2.msra.mxu0 0.0
      %3469 = vmatprep.subr.mxu0 0.0
      %3470 = vmatpush2.msra.mxu0 0.0
      %3471 = vmatprep.subr.mxu0 0.0
      %3472 = vmatpush2.msra.mxu0 0.0
      %3473 = vmatprep.subr.mxu0 0.0
      %3474 = vmatpush2.msra.mxu0 0.0
      %3475 = vmatprep.subr.mxu0 0.0
      %3476 = vmatpush2.msra.mxu0 0.0
      %3477 = vmatprep.subr.mxu0 0.0
      %3478 = vmatpush2.msra.mxu0 0.0
      %3479 = vmatprep.subr.mxu0 0.0
      %3480 = vmatpush2.msra.mxu0 0.0
      %3481 = vmatprep.subr.mxu0 0.0
      %3482 = vmatpush2.msra.mxu0 0.0
      %3483 = vmatprep.subr.mxu0 0.0
      %3484 = vmatpush2.msra.mxu0 0.0
      %3485 = vmatprep.subr.mxu0 0.0
      %3486 = vmatpush2.msra.mxu0 0.0
      %3487 = vmatprep.mubr.f32.mxu0 0.0
      %v3488 = vand.u32 %v3267, 4294901760
      %v3489 = vsub.f32 %v3267, %v3488
      %3490 = vmatmul.mubr.f32.gmra.mxu0 %v3489
      %v3491 = vpop.f32.mrf.mxu0
      %v3492 = vadd.f32 %v3418, %v3491
      %v3493 = vpop.f32.mrf.mxu0
      %3494 = vdwg.mxu0
      %3495 = vmatprep.subr.mxu0 0.0
      %3496 = vmatpush1.msra.mxu0 0.0
      %3497 = vmatprep.subr.mxu0 0.0
      %3498 = vmatpush1.msra.mxu0 0.0
      %3499 = vmatprep.subr.mxu0 0.0
      %3500 = vmatpush1.msra.mxu0 0.0
      %3501 = vmatprep.subr.mxu0 0.0
      %3502 = vmatpush1.msra.mxu0 0.0
      %3503 = vmatprep.subr.mxu0 0.0
      %3504 = vmatpush1.msra.mxu0 0.0
      %3505 = vmatprep.subr.mxu0 0.0
      %3506 = vmatpush1.msra.mxu0 0.0
      %3507 = vmatprep.subr.mxu0 0.0
      %3508 = vmatpush1.msra.mxu0 0.0
      %3509 = vmatprep.subr.mxu0 0.0
      %3510 = vmatpush1.msra.mxu0 0.0
      %3511 = vmatprep.subr.mxu0 0.0
      %3512 = vmatpush1.msra.mxu0 0.0
      %3513 = vmatprep.subr.mxu0 0.0
      %3514 = vmatpush1.msra.mxu0 0.0
      %3515 = vmatprep.subr.mxu0 0.0
      %3516 = vmatpush1.msra.mxu0 0.0
      %3517 = vmatprep.subr.mxu0 0.0
      %3518 = vmatpush1.msra.mxu0 0.0
      %3519 = vmatprep.subr.mxu0 0.0
      %3520 = vmatpush1.msra.mxu0 0.0
      %3521 = vmatprep.subr.mxu0 0.0
      %3522 = vmatpush1.msra.mxu0 0.0
      %3523 = vmatprep.subr.mxu0 0.0
      %3524 = vmatpush1.msra.mxu0 0.0
      %3525 = vmatprep.subr.mxu0 0.0
      %v3526 = vand.u32 %v2815, 4294901760
      %3527 = vmatpush1.msra.mxu0 %v3526
      %3528 = vmatprep.subr.mxu0 0.0
      %3529 = vmatpush2.msra.mxu0 0.0
      %3530 = vmatprep.subr.mxu0 0.0
      %3531 = vmatpush2.msra.mxu0 0.0
      %3532 = vmatprep.subr.mxu0 0.0
      %3533 = vmatpush2.msra.mxu0 0.0
      %3534 = vmatprep.subr.mxu0 0.0
      %3535 = vmatpush2.msra.mxu0 0.0
      %3536 = vmatprep.subr.mxu0 0.0
      %3537 = vmatpush2.msra.mxu0 0.0
      %3538 = vmatprep.subr.mxu0 0.0
      %3539 = vmatpush2.msra.mxu0 0.0
      %3540 = vmatprep.subr.mxu0 0.0
      %3541 = vmatpush2.msra.mxu0 0.0
      %3542 = vmatprep.subr.mxu0 0.0
      %3543 = vmatpush2.msra.mxu0 0.0
      %3544 = vmatprep.subr.mxu0 0.0
      %3545 = vmatpush2.msra.mxu0 0.0
      %3546 = vmatprep.subr.mxu0 0.0
      %3547 = vmatpush2.msra.mxu0 0.0
      %3548 = vmatprep.subr.mxu0 0.0
      %3549 = vmatpush2.msra.mxu0 0.0
      %3550 = vmatprep.subr.mxu0 0.0
      %3551 = vmatpush2.msra.mxu0 0.0
      %3552 = vmatprep.subr.mxu0 0.0
      %3553 = vmatpush2.msra.mxu0 0.0
      %3554 = vmatprep.subr.mxu0 0.0
      %3555 = vmatpush2.msra.mxu0 0.0
      %3556 = vmatprep.subr.mxu0 0.0
      %3557 = vmatpush2.msra.mxu0 0.0
      %3558 = vmatprep.subr.mxu0 0.0
      %3559 = vmatpush2.msra.mxu0 0.0
      %3560 = vmatprep.mubr.f32.mxu0 0.0
      %v3561 = vand.u32 %v3267, 4294901760
      %v3562 = vsub.f32 %v3267, %v3561
      %v3563 = vand.u32 %v3562, 4294901760
      %3564 = vmatmul.mubr.f32.gmra.mxu0 %v3563
      %v3565 = vpop.f32.mrf.mxu0
      %v3566 = vadd.f32 %v3492, %v3565
      %v3567 = vpop.f32.mrf.mxu0
      %3568 = vdwg.mxu0
      %3569 = vmatprep.subr.mxu0 0.0
      %3570 = vmatpush1.msra.mxu0 0.0
      %3571 = vmatprep.subr.mxu0 0.0
      %3572 = vmatpush1.msra.mxu0 0.0
      %3573 = vmatprep.subr.mxu0 0.0
      %3574 = vmatpush1.msra.mxu0 0.0
      %3575 = vmatprep.subr.mxu0 0.0
      %3576 = vmatpush1.msra.mxu0 0.0
      %3577 = vmatprep.subr.mxu0 0.0
      %3578 = vmatpush1.msra.mxu0 0.0
      %3579 = vmatprep.subr.mxu0 0.0
      %3580 = vmatpush1.msra.mxu0 0.0
      %3581 = vmatprep.subr.mxu0 0.0
      %3582 = vmatpush1.msra.mxu0 0.0
      %3583 = vmatprep.subr.mxu0 0.0
      %3584 = vmatpush1.msra.mxu0 0.0
      %3585 = vmatprep.subr.mxu0 0.0
      %3586 = vmatpush1.msra.mxu0 0.0
      %3587 = vmatprep.subr.mxu0 0.0
      %3588 = vmatpush1.msra.mxu0 0.0
      %3589 = vmatprep.subr.mxu0 0.0
      %3590 = vmatpush1.msra.mxu0 0.0
      %3591 = vmatprep.subr.mxu0 0.0
      %3592 = vmatpush1.msra.mxu0 0.0
      %3593 = vmatprep.subr.mxu0 0.0
      %3594 = vmatpush1.msra.mxu0 0.0
      %3595 = vmatprep.subr.mxu0 0.0
      %3596 = vmatpush1.msra.mxu0 0.0
      %3597 = vmatprep.subr.mxu0 0.0
      %3598 = vmatpush1.msra.mxu0 0.0
      %3599 = vmatprep.subr.mxu0 0.0
      %v3600 = vand.u32 %v2815, 4294901760
      %v3601 = vsub.f32 %v2815, %v3600
      %v3602 = vand.u32 %v3601, 4294901760
      %3603 = vmatpush1.msra.mxu0 %v3602
      %3604 = vmatprep.subr.mxu0 0.0
      %3605 = vmatpush2.msra.mxu0 0.0
      %3606 = vmatprep.subr.mxu0 0.0
      %3607 = vmatpush2.msra.mxu0 0.0
      %3608 = vmatprep.subr.mxu0 0.0
      %3609 = vmatpush2.msra.mxu0 0.0
      %3610 = vmatprep.subr.mxu0 0.0
      %3611 = vmatpush2.msra.mxu0 0.0
      %3612 = vmatprep.subr.mxu0 0.0
      %3613 = vmatpush2.msra.mxu0 0.0
      %3614 = vmatprep.subr.mxu0 0.0
      %3615 = vmatpush2.msra.mxu0 0.0
      %3616 = vmatprep.subr.mxu0 0.0
      %3617 = vmatpush2.msra.mxu0 0.0
      %3618 = vmatprep.subr.mxu0 0.0
      %3619 = vmatpush2.msra.mxu0 0.0
      %3620 = vmatprep.subr.mxu0 0.0
      %3621 = vmatpush2.msra.mxu0 0.0
      %3622 = vmatprep.subr.mxu0 0.0
      %3623 = vmatpush2.msra.mxu0 0.0
      %3624 = vmatprep.subr.mxu0 0.0
      %3625 = vmatpush2.msra.mxu0 0.0
      %3626 = vmatprep.subr.mxu0 0.0
      %3627 = vmatpush2.msra.mxu0 0.0
      %3628 = vmatprep.subr.mxu0 0.0
      %3629 = vmatpush2.msra.mxu0 0.0
      %3630 = vmatprep.subr.mxu0 0.0
      %3631 = vmatpush2.msra.mxu0 0.0
      %3632 = vmatprep.subr.mxu0 0.0
      %3633 = vmatpush2.msra.mxu0 0.0
      %3634 = vmatprep.subr.mxu0 0.0
      %3635 = vmatpush2.msra.mxu0 0.0
      %3636 = vmatprep.mubr.f32.mxu0 0.0
      %v3637 = vand.u32 %v3267, 4294901760
      %3638 = vmatmul.mubr.f32.gmra.mxu0 %v3637
      %v3639 = vpop.f32.mrf.mxu0
      %v3640 = vadd.f32 %v3566, %v3639
      %v3641 = vpop.f32.mrf.mxu0
      %3642 = vdwg.mxu0
      %3643 = vmatprep.subr.mxu0 0.0
      %3644 = vmatpush1.msra.mxu0 0.0
      %3645 = vmatprep.subr.mxu0 0.0
      %3646 = vmatpush1.msra.mxu0 0.0
      %3647 = vmatprep.subr.mxu0 0.0
      %3648 = vmatpush1.msra.mxu0 0.0
      %3649 = vmatprep.subr.mxu0 0.0
      %3650 = vmatpush1.msra.mxu0 0.0
      %3651 = vmatprep.subr.mxu0 0.0
      %3652 = vmatpush1.msra.mxu0 0.0
      %3653 = vmatprep.subr.mxu0 0.0
      %3654 = vmatpush1.msra.mxu0 0.0
      %3655 = vmatprep.subr.mxu0 0.0
      %3656 = vmatpush1.msra.mxu0 0.0
      %3657 = vmatprep.subr.mxu0 0.0
      %3658 = vmatpush1.msra.mxu0 0.0
      %3659 = vmatprep.subr.mxu0 0.0
      %3660 = vmatpush1.msra.mxu0 0.0
      %3661 = vmatprep.subr.mxu0 0.0
      %3662 = vmatpush1.msra.mxu0 0.0
      %3663 = vmatprep.subr.mxu0 0.0
      %3664 = vmatpush1.msra.mxu0 0.0
      %3665 = vmatprep.subr.mxu0 0.0
      %3666 = vmatpush1.msra.mxu0 0.0
      %3667 = vmatprep.subr.mxu0 0.0
      %3668 = vmatpush1.msra.mxu0 0.0
      %3669 = vmatprep.subr.mxu0 0.0
      %3670 = vmatpush1.msra.mxu0 0.0
      %3671 = vmatprep.subr.mxu0 0.0
      %3672 = vmatpush1.msra.mxu0 0.0
      %3673 = vmatprep.subr.mxu0 0.0
      %v3674 = vand.u32 %v2815, 4294901760
      %3675 = vmatpush1.msra.mxu0 %v3674
      %3676 = vmatprep.subr.mxu0 0.0
      %3677 = vmatpush2.msra.mxu0 0.0
      %3678 = vmatprep.subr.mxu0 0.0
      %3679 = vmatpush2.msra.mxu0 0.0
      %3680 = vmatprep.subr.mxu0 0.0
      %3681 = vmatpush2.msra.mxu0 0.0
      %3682 = vmatprep.subr.mxu0 0.0
      %3683 = vmatpush2.msra.mxu0 0.0
      %3684 = vmatprep.subr.mxu0 0.0
      %3685 = vmatpush2.msra.mxu0 0.0
      %3686 = vmatprep.subr.mxu0 0.0
      %3687 = vmatpush2.msra.mxu0 0.0
      %3688 = vmatprep.subr.mxu0 0.0
      %3689 = vmatpush2.msra.mxu0 0.0
      %3690 = vmatprep.subr.mxu0 0.0
      %3691 = vmatpush2.msra.mxu0 0.0
      %3692 = vmatprep.subr.mxu0 0.0
      %3693 = vmatpush2.msra.mxu0 0.0
      %3694 = vmatprep.subr.mxu0 0.0
      %3695 = vmatpush2.msra.mxu0 0.0
      %3696 = vmatprep.subr.mxu0 0.0
      %3697 = vmatpush2.msra.mxu0 0.0
      %3698 = vmatprep.subr.mxu0 0.0
      %3699 = vmatpush2.msra.mxu0 0.0
      %3700 = vmatprep.subr.mxu0 0.0
      %3701 = vmatpush2.msra.mxu0 0.0
      %3702 = vmatprep.subr.mxu0 0.0
      %3703 = vmatpush2.msra.mxu0 0.0
      %3704 = vmatprep.subr.mxu0 0.0
      %3705 = vmatpush2.msra.mxu0 0.0
      %3706 = vmatprep.subr.mxu0 0.0
      %3707 = vmatpush2.msra.mxu0 0.0
      %3708 = vmatprep.mubr.f32.mxu0 0.0
      %v3709 = vand.u32 %v3267, 4294901760
      %3710 = vmatmul.mubr.f32.gmra.mxu0 %v3709
      %v3711 = vpop.f32.mrf.mxu0
      %v3712 = vadd.f32 %v3640, %v3711
      %v3713 = vpop.f32.mrf.mxu0
      %3714 = vdwg.mxu0
      %v3715 = vmul.f32 %v860, %v3712
      %v3716 = vadd.f32 %v3264, %v3715
      %v3717 = vmul.f32 %v2799, %v2807
      %v3719 = vsel %vm2809, %v3717, 0
      %3721 = vmatprep.subr.mxu0 0.0
      %3722 = vmatpush1.msra.mxu0 0.0
      %3723 = vmatprep.subr.mxu0 0.0
      %3724 = vmatpush1.msra.mxu0 0.0
      %3725 = vmatprep.subr.mxu0 0.0
      %3726 = vmatpush1.msra.mxu0 0.0
      %3727 = vmatprep.subr.mxu0 0.0
      %3728 = vmatpush1.msra.mxu0 0.0
      %3729 = vmatprep.subr.mxu0 0.0
      %3730 = vmatpush1.msra.mxu0 0.0
      %3731 = vmatprep.subr.mxu0 0.0
      %3732 = vmatpush1.msra.mxu0 0.0
      %3733 = vmatprep.subr.mxu0 0.0
      %3734 = vmatpush1.msra.mxu0 0.0
      %3735 = vmatprep.subr.mxu0 0.0
      %3736 = vmatpush1.msra.mxu0 0.0
      %3737 = vmatprep.subr.mxu0 0.0
      %3738 = vmatpush1.msra.mxu0 0.0
      %3739 = vmatprep.subr.mxu0 0.0
      %3740 = vmatpush1.msra.mxu0 0.0
      %3741 = vmatprep.subr.mxu0 0.0
      %3742 = vmatpush1.msra.mxu0 0.0
      %3743 = vmatprep.subr.mxu0 0.0
      %3744 = vmatpush1.msra.mxu0 0.0
      %3745 = vmatprep.subr.mxu0 0.0
      %3746 = vmatpush1.msra.mxu0 0.0
      %3747 = vmatprep.subr.mxu0 0.0
      %3748 = vmatpush1.msra.mxu0 0.0
      %3749 = vmatprep.subr.mxu0 0.0
      %3750 = vmatpush1.msra.mxu0 0.0
      %3751 = vmatprep.subr.mxu0 0.0
      %v3752 = vand.u32 %v2815, 4294901760
      %3753 = vmatpush1.msra.mxu0 %v3752
      %3754 = vmatprep.subr.mxu0 0.0
      %3755 = vmatpush2.msra.mxu0 0.0
      %3756 = vmatprep.subr.mxu0 0.0
      %3757 = vmatpush2.msra.mxu0 0.0
      %3758 = vmatprep.subr.mxu0 0.0
      %3759 = vmatpush2.msra.mxu0 0.0
      %3760 = vmatprep.subr.mxu0 0.0
      %3761 = vmatpush2.msra.mxu0 0.0
      %3762 = vmatprep.subr.mxu0 0.0
      %3763 = vmatpush2.msra.mxu0 0.0
      %3764 = vmatprep.subr.mxu0 0.0
      %3765 = vmatpush2.msra.mxu0 0.0
      %3766 = vmatprep.subr.mxu0 0.0
      %3767 = vmatpush2.msra.mxu0 0.0
      %3768 = vmatprep.subr.mxu0 0.0
      %3769 = vmatpush2.msra.mxu0 0.0
      %3770 = vmatprep.subr.mxu0 0.0
      %3771 = vmatpush2.msra.mxu0 0.0
      %3772 = vmatprep.subr.mxu0 0.0
      %3773 = vmatpush2.msra.mxu0 0.0
      %3774 = vmatprep.subr.mxu0 0.0
      %3775 = vmatpush2.msra.mxu0 0.0
      %3776 = vmatprep.subr.mxu0 0.0
      %3777 = vmatpush2.msra.mxu0 0.0
      %3778 = vmatprep.subr.mxu0 0.0
      %3779 = vmatpush2.msra.mxu0 0.0
      %3780 = vmatprep.subr.mxu0 0.0
      %3781 = vmatpush2.msra.mxu0 0.0
      %3782 = vmatprep.subr.mxu0 0.0
      %3783 = vmatpush2.msra.mxu0 0.0
      %3784 = vmatprep.subr.mxu0 0.0
      %3785 = vmatpush2.msra.mxu0 0.0
      %3786 = vmatprep.mubr.f32.mxu0 0.0
      %v3787 = vand.u32 %v3719, 4294901760
      %v3788 = vsub.f32 %v3719, %v3787
      %v3789 = vand.u32 %v3788, 4294901760
      %v3790 = vsub.f32 %v3788, %v3789
      %v3791 = vand.u32 %v3790, 4294901760
      %3792 = vmatmul.mubr.f32.gmra.mxu0 %v3791
      %v3793 = vpop.f32.mrf.mxu0
      %v3794 = vadd.f32 0.0, %v3793
      %v3795 = vpop.f32.mrf.mxu0
      %3796 = vdwg.mxu0
      %3797 = vmatprep.subr.mxu0 0.0
      %3798 = vmatpush1.msra.mxu0 0.0
      %3799 = vmatprep.subr.mxu0 0.0
      %3800 = vmatpush1.msra.mxu0 0.0
      %3801 = vmatprep.subr.mxu0 0.0
      %3802 = vmatpush1.msra.mxu0 0.0
      %3803 = vmatprep.subr.mxu0 0.0
      %3804 = vmatpush1.msra.mxu0 0.0
      %3805 = vmatprep.subr.mxu0 0.0
      %3806 = vmatpush1.msra.mxu0 0.0
      %3807 = vmatprep.subr.mxu0 0.0
      %3808 = vmatpush1.msra.mxu0 0.0
      %3809 = vmatprep.subr.mxu0 0.0
      %3810 = vmatpush1.msra.mxu0 0.0
      %3811 = vmatprep.subr.mxu0 0.0
      %3812 = vmatpush1.msra.mxu0 0.0
      %3813 = vmatprep.subr.mxu0 0.0
      %3814 = vmatpush1.msra.mxu0 0.0
      %3815 = vmatprep.subr.mxu0 0.0
      %3816 = vmatpush1.msra.mxu0 0.0
      %3817 = vmatprep.subr.mxu0 0.0
      %3818 = vmatpush1.msra.mxu0 0.0
      %3819 = vmatprep.subr.mxu0 0.0
      %3820 = vmatpush1.msra.mxu0 0.0
      %3821 = vmatprep.subr.mxu0 0.0
      %3822 = vmatpush1.msra.mxu0 0.0
      %3823 = vmatprep.subr.mxu0 0.0
      %3824 = vmatpush1.msra.mxu0 0.0
      %3825 = vmatprep.subr.mxu0 0.0
      %3826 = vmatpush1.msra.mxu0 0.0
      %3827 = vmatprep.subr.mxu0 0.0
      %v3828 = vand.u32 %v2815, 4294901760
      %v3829 = vsub.f32 %v2815, %v3828
      %v3830 = vand.u32 %v3829, 4294901760
      %v3831 = vsub.f32 %v3829, %v3830
      %v3832 = vand.u32 %v3831, 4294901760
      %3833 = vmatpush1.msra.mxu0 %v3832
      %3834 = vmatprep.subr.mxu0 0.0
      %3835 = vmatpush2.msra.mxu0 0.0
      %3836 = vmatprep.subr.mxu0 0.0
      %3837 = vmatpush2.msra.mxu0 0.0
      %3838 = vmatprep.subr.mxu0 0.0
      %3839 = vmatpush2.msra.mxu0 0.0
      %3840 = vmatprep.subr.mxu0 0.0
      %3841 = vmatpush2.msra.mxu0 0.0
      %3842 = vmatprep.subr.mxu0 0.0
      %3843 = vmatpush2.msra.mxu0 0.0
      %3844 = vmatprep.subr.mxu0 0.0
      %3845 = vmatpush2.msra.mxu0 0.0
      %3846 = vmatprep.subr.mxu0 0.0
      %3847 = vmatpush2.msra.mxu0 0.0
      %3848 = vmatprep.subr.mxu0 0.0
      %3849 = vmatpush2.msra.mxu0 0.0
      %3850 = vmatprep.subr.mxu0 0.0
      %3851 = vmatpush2.msra.mxu0 0.0
      %3852 = vmatprep.subr.mxu0 0.0
      %3853 = vmatpush2.msra.mxu0 0.0
      %3854 = vmatprep.subr.mxu0 0.0
      %3855 = vmatpush2.msra.mxu0 0.0
      %3856 = vmatprep.subr.mxu0 0.0
      %3857 = vmatpush2.msra.mxu0 0.0
      %3858 = vmatprep.subr.mxu0 0.0
      %3859 = vmatpush2.msra.mxu0 0.0
      %3860 = vmatprep.subr.mxu0 0.0
      %3861 = vmatpush2.msra.mxu0 0.0
      %3862 = vmatprep.subr.mxu0 0.0
      %3863 = vmatpush2.msra.mxu0 0.0
      %3864 = vmatprep.subr.mxu0 0.0
      %3865 = vmatpush2.msra.mxu0 0.0
      %3866 = vmatprep.mubr.f32.mxu0 0.0
      %v3867 = vand.u32 %v3719, 4294901760
      %3868 = vmatmul.mubr.f32.gmra.mxu0 %v3867
      %v3869 = vpop.f32.mrf.mxu0
      %v3870 = vadd.f32 %v3794, %v3869
      %v3871 = vpop.f32.mrf.mxu0
      %3872 = vdwg.mxu0
      %3873 = vmatprep.subr.mxu0 0.0
      %3874 = vmatpush1.msra.mxu0 0.0
      %3875 = vmatprep.subr.mxu0 0.0
      %3876 = vmatpush1.msra.mxu0 0.0
      %3877 = vmatprep.subr.mxu0 0.0
      %3878 = vmatpush1.msra.mxu0 0.0
      %3879 = vmatprep.subr.mxu0 0.0
      %3880 = vmatpush1.msra.mxu0 0.0
      %3881 = vmatprep.subr.mxu0 0.0
      %3882 = vmatpush1.msra.mxu0 0.0
      %3883 = vmatprep.subr.mxu0 0.0
      %3884 = vmatpush1.msra.mxu0 0.0
      %3885 = vmatprep.subr.mxu0 0.0
      %3886 = vmatpush1.msra.mxu0 0.0
      %3887 = vmatprep.subr.mxu0 0.0
      %3888 = vmatpush1.msra.mxu0 0.0
      %3889 = vmatprep.subr.mxu0 0.0
      %3890 = vmatpush1.msra.mxu0 0.0
      %3891 = vmatprep.subr.mxu0 0.0
      %3892 = vmatpush1.msra.mxu0 0.0
      %3893 = vmatprep.subr.mxu0 0.0
      %3894 = vmatpush1.msra.mxu0 0.0
      %3895 = vmatprep.subr.mxu0 0.0
      %3896 = vmatpush1.msra.mxu0 0.0
      %3897 = vmatprep.subr.mxu0 0.0
      %3898 = vmatpush1.msra.mxu0 0.0
      %3899 = vmatprep.subr.mxu0 0.0
      %3900 = vmatpush1.msra.mxu0 0.0
      %3901 = vmatprep.subr.mxu0 0.0
      %3902 = vmatpush1.msra.mxu0 0.0
      %3903 = vmatprep.subr.mxu0 0.0
      %v3904 = vand.u32 %v2815, 4294901760
      %v3905 = vsub.f32 %v2815, %v3904
      %3906 = vmatpush1.msra.mxu0 %v3905
      %3907 = vmatprep.subr.mxu0 0.0
      %3908 = vmatpush2.msra.mxu0 0.0
      %3909 = vmatprep.subr.mxu0 0.0
      %3910 = vmatpush2.msra.mxu0 0.0
      %3911 = vmatprep.subr.mxu0 0.0
      %3912 = vmatpush2.msra.mxu0 0.0
      %3913 = vmatprep.subr.mxu0 0.0
      %3914 = vmatpush2.msra.mxu0 0.0
      %3915 = vmatprep.subr.mxu0 0.0
      %3916 = vmatpush2.msra.mxu0 0.0
      %3917 = vmatprep.subr.mxu0 0.0
      %3918 = vmatpush2.msra.mxu0 0.0
      %3919 = vmatprep.subr.mxu0 0.0
      %3920 = vmatpush2.msra.mxu0 0.0
      %3921 = vmatprep.subr.mxu0 0.0
      %3922 = vmatpush2.msra.mxu0 0.0
      %3923 = vmatprep.subr.mxu0 0.0
      %3924 = vmatpush2.msra.mxu0 0.0
      %3925 = vmatprep.subr.mxu0 0.0
      %3926 = vmatpush2.msra.mxu0 0.0
      %3927 = vmatprep.subr.mxu0 0.0
      %3928 = vmatpush2.msra.mxu0 0.0
      %3929 = vmatprep.subr.mxu0 0.0
      %3930 = vmatpush2.msra.mxu0 0.0
      %3931 = vmatprep.subr.mxu0 0.0
      %3932 = vmatpush2.msra.mxu0 0.0
      %3933 = vmatprep.subr.mxu0 0.0
      %3934 = vmatpush2.msra.mxu0 0.0
      %3935 = vmatprep.subr.mxu0 0.0
      %3936 = vmatpush2.msra.mxu0 0.0
      %3937 = vmatprep.subr.mxu0 0.0
      %3938 = vmatpush2.msra.mxu0 0.0
      %3939 = vmatprep.mubr.f32.mxu0 0.0
      %v3940 = vand.u32 %v3719, 4294901760
      %v3941 = vsub.f32 %v3719, %v3940
      %3942 = vmatmul.mubr.f32.gmra.mxu0 %v3941
      %v3943 = vpop.f32.mrf.mxu0
      %v3944 = vadd.f32 %v3870, %v3943
      %v3945 = vpop.f32.mrf.mxu0
      %3946 = vdwg.mxu0
      %3947 = vmatprep.subr.mxu0 0.0
      %3948 = vmatpush1.msra.mxu0 0.0
      %3949 = vmatprep.subr.mxu0 0.0
      %3950 = vmatpush1.msra.mxu0 0.0
      %3951 = vmatprep.subr.mxu0 0.0
      %3952 = vmatpush1.msra.mxu0 0.0
      %3953 = vmatprep.subr.mxu0 0.0
      %3954 = vmatpush1.msra.mxu0 0.0
      %3955 = vmatprep.subr.mxu0 0.0
      %3956 = vmatpush1.msra.mxu0 0.0
      %3957 = vmatprep.subr.mxu0 0.0
      %3958 = vmatpush1.msra.mxu0 0.0
      %3959 = vmatprep.subr.mxu0 0.0
      %3960 = vmatpush1.msra.mxu0 0.0
      %3961 = vmatprep.subr.mxu0 0.0
      %3962 = vmatpush1.msra.mxu0 0.0
      %3963 = vmatprep.subr.mxu0 0.0
      %3964 = vmatpush1.msra.mxu0 0.0
      %3965 = vmatprep.subr.mxu0 0.0
      %3966 = vmatpush1.msra.mxu0 0.0
      %3967 = vmatprep.subr.mxu0 0.0
      %3968 = vmatpush1.msra.mxu0 0.0
      %3969 = vmatprep.subr.mxu0 0.0
      %3970 = vmatpush1.msra.mxu0 0.0
      %3971 = vmatprep.subr.mxu0 0.0
      %3972 = vmatpush1.msra.mxu0 0.0
      %3973 = vmatprep.subr.mxu0 0.0
      %3974 = vmatpush1.msra.mxu0 0.0
      %3975 = vmatprep.subr.mxu0 0.0
      %3976 = vmatpush1.msra.mxu0 0.0
      %3977 = vmatprep.subr.mxu0 0.0
      %v3978 = vand.u32 %v2815, 4294901760
      %3979 = vmatpush1.msra.mxu0 %v3978
      %3980 = vmatprep.subr.mxu0 0.0
      %3981 = vmatpush2.msra.mxu0 0.0
      %3982 = vmatprep.subr.mxu0 0.0
      %3983 = vmatpush2.msra.mxu0 0.0
      %3984 = vmatprep.subr.mxu0 0.0
      %3985 = vmatpush2.msra.mxu0 0.0
      %3986 = vmatprep.subr.mxu0 0.0
      %3987 = vmatpush2.msra.mxu0 0.0
      %3988 = vmatprep.subr.mxu0 0.0
      %3989 = vmatpush2.msra.mxu0 0.0
      %3990 = vmatprep.subr.mxu0 0.0
      %3991 = vmatpush2.msra.mxu0 0.0
      %3992 = vmatprep.subr.mxu0 0.0
      %3993 = vmatpush2.msra.mxu0 0.0
      %3994 = vmatprep.subr.mxu0 0.0
      %3995 = vmatpush2.msra.mxu0 0.0
      %3996 = vmatprep.subr.mxu0 0.0
      %3997 = vmatpush2.msra.mxu0 0.0
      %3998 = vmatprep.subr.mxu0 0.0
      %3999 = vmatpush2.msra.mxu0 0.0
      %4000 = vmatprep.subr.mxu0 0.0
      %4001 = vmatpush2.msra.mxu0 0.0
      %4002 = vmatprep.subr.mxu0 0.0
      %4003 = vmatpush2.msra.mxu0 0.0
      %4004 = vmatprep.subr.mxu0 0.0
      %4005 = vmatpush2.msra.mxu0 0.0
      %4006 = vmatprep.subr.mxu0 0.0
      %4007 = vmatpush2.msra.mxu0 0.0
      %4008 = vmatprep.subr.mxu0 0.0
      %4009 = vmatpush2.msra.mxu0 0.0
      %4010 = vmatprep.subr.mxu0 0.0
      %4011 = vmatpush2.msra.mxu0 0.0
      %4012 = vmatprep.mubr.f32.mxu0 0.0
      %v4013 = vand.u32 %v3719, 4294901760
      %v4014 = vsub.f32 %v3719, %v4013
      %v4015 = vand.u32 %v4014, 4294901760
      %4016 = vmatmul.mubr.f32.gmra.mxu0 %v4015
      %v4017 = vpop.f32.mrf.mxu0
      %v4018 = vadd.f32 %v3944, %v4017
      %v4019 = vpop.f32.mrf.mxu0
      %4020 = vdwg.mxu0
      %4021 = vmatprep.subr.mxu0 0.0
      %4022 = vmatpush1.msra.mxu0 0.0
      %4023 = vmatprep.subr.mxu0 0.0
      %4024 = vmatpush1.msra.mxu0 0.0
      %4025 = vmatprep.subr.mxu0 0.0
      %4026 = vmatpush1.msra.mxu0 0.0
      %4027 = vmatprep.subr.mxu0 0.0
      %4028 = vmatpush1.msra.mxu0 0.0
      %4029 = vmatprep.subr.mxu0 0.0
      %4030 = vmatpush1.msra.mxu0 0.0
      %4031 = vmatprep.subr.mxu0 0.0
      %4032 = vmatpush1.msra.mxu0 0.0
      %4033 = vmatprep.subr.mxu0 0.0
      %4034 = vmatpush1.msra.mxu0 0.0
      %4035 = vmatprep.subr.mxu0 0.0
      %4036 = vmatpush1.msra.mxu0 0.0
      %4037 = vmatprep.subr.mxu0 0.0
      %4038 = vmatpush1.msra.mxu0 0.0
      %4039 = vmatprep.subr.mxu0 0.0
      %4040 = vmatpush1.msra.mxu0 0.0
      %4041 = vmatprep.subr.mxu0 0.0
      %4042 = vmatpush1.msra.mxu0 0.0
      %4043 = vmatprep.subr.mxu0 0.0
      %4044 = vmatpush1.msra.mxu0 0.0
      %4045 = vmatprep.subr.mxu0 0.0
      %4046 = vmatpush1.msra.mxu0 0.0
      %4047 = vmatprep.subr.mxu0 0.0
      %4048 = vmatpush1.msra.mxu0 0.0
      %4049 = vmatprep.subr.mxu0 0.0
      %4050 = vmatpush1.msra.mxu0 0.0
      %4051 = vmatprep.subr.mxu0 0.0
      %v4052 = vand.u32 %v2815, 4294901760
      %v4053 = vsub.f32 %v2815, %v4052
      %v4054 = vand.u32 %v4053, 4294901760
      %4055 = vmatpush1.msra.mxu0 %v4054
      %4056 = vmatprep.subr.mxu0 0.0
      %4057 = vmatpush2.msra.mxu0 0.0
      %4058 = vmatprep.subr.mxu0 0.0
      %4059 = vmatpush2.msra.mxu0 0.0
      %4060 = vmatprep.subr.mxu0 0.0
      %4061 = vmatpush2.msra.mxu0 0.0
      %4062 = vmatprep.subr.mxu0 0.0
      %4063 = vmatpush2.msra.mxu0 0.0
      %4064 = vmatprep.subr.mxu0 0.0
      %4065 = vmatpush2.msra.mxu0 0.0
      %4066 = vmatprep.subr.mxu0 0.0
      %4067 = vmatpush2.msra.mxu0 0.0
      %4068 = vmatprep.subr.mxu0 0.0
      %4069 = vmatpush2.msra.mxu0 0.0
      %4070 = vmatprep.subr.mxu0 0.0
      %4071 = vmatpush2.msra.mxu0 0.0
      %4072 = vmatprep.subr.mxu0 0.0
      %4073 = vmatpush2.msra.mxu0 0.0
      %4074 = vmatprep.subr.mxu0 0.0
      %4075 = vmatpush2.msra.mxu0 0.0
      %4076 = vmatprep.subr.mxu0 0.0
      %4077 = vmatpush2.msra.mxu0 0.0
      %4078 = vmatprep.subr.mxu0 0.0
      %4079 = vmatpush2.msra.mxu0 0.0
      %4080 = vmatprep.subr.mxu0 0.0
      %4081 = vmatpush2.msra.mxu0 0.0
      %4082 = vmatprep.subr.mxu0 0.0
      %4083 = vmatpush2.msra.mxu0 0.0
      %4084 = vmatprep.subr.mxu0 0.0
      %4085 = vmatpush2.msra.mxu0 0.0
      %4086 = vmatprep.subr.mxu0 0.0
      %4087 = vmatpush2.msra.mxu0 0.0
      %4088 = vmatprep.mubr.f32.mxu0 0.0
      %v4089 = vand.u32 %v3719, 4294901760
      %4090 = vmatmul.mubr.f32.gmra.mxu0 %v4089
      %v4091 = vpop.f32.mrf.mxu0
      %v4092 = vadd.f32 %v4018, %v4091
      %v4093 = vpop.f32.mrf.mxu0
      %4094 = vdwg.mxu0
      %4095 = vmatprep.subr.mxu0 0.0
      %4096 = vmatpush1.msra.mxu0 0.0
      %4097 = vmatprep.subr.mxu0 0.0
      %4098 = vmatpush1.msra.mxu0 0.0
      %4099 = vmatprep.subr.mxu0 0.0
      %4100 = vmatpush1.msra.mxu0 0.0
      %4101 = vmatprep.subr.mxu0 0.0
      %4102 = vmatpush1.msra.mxu0 0.0
      %4103 = vmatprep.subr.mxu0 0.0
      %4104 = vmatpush1.msra.mxu0 0.0
      %4105 = vmatprep.subr.mxu0 0.0
      %4106 = vmatpush1.msra.mxu0 0.0
      %4107 = vmatprep.subr.mxu0 0.0
      %4108 = vmatpush1.msra.mxu0 0.0
      %4109 = vmatprep.subr.mxu0 0.0
      %4110 = vmatpush1.msra.mxu0 0.0
      %4111 = vmatprep.subr.mxu0 0.0
      %4112 = vmatpush1.msra.mxu0 0.0
      %4113 = vmatprep.subr.mxu0 0.0
      %4114 = vmatpush1.msra.mxu0 0.0
      %4115 = vmatprep.subr.mxu0 0.0
      %4116 = vmatpush1.msra.mxu0 0.0
      %4117 = vmatprep.subr.mxu0 0.0
      %4118 = vmatpush1.msra.mxu0 0.0
      %4119 = vmatprep.subr.mxu0 0.0
      %4120 = vmatpush1.msra.mxu0 0.0
      %4121 = vmatprep.subr.mxu0 0.0
      %4122 = vmatpush1.msra.mxu0 0.0
      %4123 = vmatprep.subr.mxu0 0.0
      %4124 = vmatpush1.msra.mxu0 0.0
      %4125 = vmatprep.subr.mxu0 0.0
      %v4126 = vand.u32 %v2815, 4294901760
      %4127 = vmatpush1.msra.mxu0 %v4126
      %4128 = vmatprep.subr.mxu0 0.0
      %4129 = vmatpush2.msra.mxu0 0.0
      %4130 = vmatprep.subr.mxu0 0.0
      %4131 = vmatpush2.msra.mxu0 0.0
      %4132 = vmatprep.subr.mxu0 0.0
      %4133 = vmatpush2.msra.mxu0 0.0
      %4134 = vmatprep.subr.mxu0 0.0
      %4135 = vmatpush2.msra.mxu0 0.0
      %4136 = vmatprep.subr.mxu0 0.0
      %4137 = vmatpush2.msra.mxu0 0.0
      %4138 = vmatprep.subr.mxu0 0.0
      %4139 = vmatpush2.msra.mxu0 0.0
      %4140 = vmatprep.subr.mxu0 0.0
      %4141 = vmatpush2.msra.mxu0 0.0
      %4142 = vmatprep.subr.mxu0 0.0
      %4143 = vmatpush2.msra.mxu0 0.0
      %4144 = vmatprep.subr.mxu0 0.0
      %4145 = vmatpush2.msra.mxu0 0.0
      %4146 = vmatprep.subr.mxu0 0.0
      %4147 = vmatpush2.msra.mxu0 0.0
      %4148 = vmatprep.subr.mxu0 0.0
      %4149 = vmatpush2.msra.mxu0 0.0
      %4150 = vmatprep.subr.mxu0 0.0
      %4151 = vmatpush2.msra.mxu0 0.0
      %4152 = vmatprep.subr.mxu0 0.0
      %4153 = vmatpush2.msra.mxu0 0.0
      %4154 = vmatprep.subr.mxu0 0.0
      %4155 = vmatpush2.msra.mxu0 0.0
      %4156 = vmatprep.subr.mxu0 0.0
      %4157 = vmatpush2.msra.mxu0 0.0
      %4158 = vmatprep.subr.mxu0 0.0
      %4159 = vmatpush2.msra.mxu0 0.0
      %4160 = vmatprep.mubr.f32.mxu0 0.0
      %v4161 = vand.u32 %v3719, 4294901760
      %4162 = vmatmul.mubr.f32.gmra.mxu0 %v4161
      %v4163 = vpop.f32.mrf.mxu0
      %v4164 = vadd.f32 %v4092, %v4163
      %v4165 = vpop.f32.mrf.mxu0
      %4166 = vdwg.mxu0
      %v4167 = vmul.f32 %v1503, %v4164
      %v4168 = vadd.f32 %v3716, %v4167
      %v4169 = vmul.f32 %v2802, %v2807
      %v4171 = vsel %vm2809, %v4169, 0
      %4173 = vmatprep.subr.mxu0 0.0
      %4174 = vmatpush1.msra.mxu0 0.0
      %4175 = vmatprep.subr.mxu0 0.0
      %4176 = vmatpush1.msra.mxu0 0.0
      %4177 = vmatprep.subr.mxu0 0.0
      %4178 = vmatpush1.msra.mxu0 0.0
      %4179 = vmatprep.subr.mxu0 0.0
      %4180 = vmatpush1.msra.mxu0 0.0
      %4181 = vmatprep.subr.mxu0 0.0
      %4182 = vmatpush1.msra.mxu0 0.0
      %4183 = vmatprep.subr.mxu0 0.0
      %4184 = vmatpush1.msra.mxu0 0.0
      %4185 = vmatprep.subr.mxu0 0.0
      %4186 = vmatpush1.msra.mxu0 0.0
      %4187 = vmatprep.subr.mxu0 0.0
      %4188 = vmatpush1.msra.mxu0 0.0
      %4189 = vmatprep.subr.mxu0 0.0
      %4190 = vmatpush1.msra.mxu0 0.0
      %4191 = vmatprep.subr.mxu0 0.0
      %4192 = vmatpush1.msra.mxu0 0.0
      %4193 = vmatprep.subr.mxu0 0.0
      %4194 = vmatpush1.msra.mxu0 0.0
      %4195 = vmatprep.subr.mxu0 0.0
      %4196 = vmatpush1.msra.mxu0 0.0
      %4197 = vmatprep.subr.mxu0 0.0
      %4198 = vmatpush1.msra.mxu0 0.0
      %4199 = vmatprep.subr.mxu0 0.0
      %4200 = vmatpush1.msra.mxu0 0.0
      %4201 = vmatprep.subr.mxu0 0.0
      %4202 = vmatpush1.msra.mxu0 0.0
      %4203 = vmatprep.subr.mxu0 0.0
      %v4204 = vand.u32 %v2815, 4294901760
      %4205 = vmatpush1.msra.mxu0 %v4204
      %4206 = vmatprep.subr.mxu0 0.0
      %4207 = vmatpush2.msra.mxu0 0.0
      %4208 = vmatprep.subr.mxu0 0.0
      %4209 = vmatpush2.msra.mxu0 0.0
      %4210 = vmatprep.subr.mxu0 0.0
      %4211 = vmatpush2.msra.mxu0 0.0
      %4212 = vmatprep.subr.mxu0 0.0
      %4213 = vmatpush2.msra.mxu0 0.0
      %4214 = vmatprep.subr.mxu0 0.0
      %4215 = vmatpush2.msra.mxu0 0.0
      %4216 = vmatprep.subr.mxu0 0.0
      %4217 = vmatpush2.msra.mxu0 0.0
      %4218 = vmatprep.subr.mxu0 0.0
      %4219 = vmatpush2.msra.mxu0 0.0
      %4220 = vmatprep.subr.mxu0 0.0
      %4221 = vmatpush2.msra.mxu0 0.0
      %4222 = vmatprep.subr.mxu0 0.0
      %4223 = vmatpush2.msra.mxu0 0.0
      %4224 = vmatprep.subr.mxu0 0.0
      %4225 = vmatpush2.msra.mxu0 0.0
      %4226 = vmatprep.subr.mxu0 0.0
      %4227 = vmatpush2.msra.mxu0 0.0
      %4228 = vmatprep.subr.mxu0 0.0
      %4229 = vmatpush2.msra.mxu0 0.0
      %4230 = vmatprep.subr.mxu0 0.0
      %4231 = vmatpush2.msra.mxu0 0.0
      %4232 = vmatprep.subr.mxu0 0.0
      %4233 = vmatpush2.msra.mxu0 0.0
      %4234 = vmatprep.subr.mxu0 0.0
      %4235 = vmatpush2.msra.mxu0 0.0
      %4236 = vmatprep.subr.mxu0 0.0
      %4237 = vmatpush2.msra.mxu0 0.0
      %4238 = vmatprep.mubr.f32.mxu0 0.0
      %v4239 = vand.u32 %v4171, 4294901760
      %v4240 = vsub.f32 %v4171, %v4239
      %v4241 = vand.u32 %v4240, 4294901760
      %v4242 = vsub.f32 %v4240, %v4241
      %v4243 = vand.u32 %v4242, 4294901760
      %4244 = vmatmul.mubr.f32.gmra.mxu0 %v4243
      %v4245 = vpop.f32.mrf.mxu0
      %v4246 = vadd.f32 0.0, %v4245
      %v4247 = vpop.f32.mrf.mxu0
      %4248 = vdwg.mxu0
      %4249 = vmatprep.subr.mxu0 0.0
      %4250 = vmatpush1.msra.mxu0 0.0
      %4251 = vmatprep.subr.mxu0 0.0
      %4252 = vmatpush1.msra.mxu0 0.0
      %4253 = vmatprep.subr.mxu0 0.0
      %4254 = vmatpush1.msra.mxu0 0.0
      %4255 = vmatprep.subr.mxu0 0.0
      %4256 = vmatpush1.msra.mxu0 0.0
      %4257 = vmatprep.subr.mxu0 0.0
      %4258 = vmatpush1.msra.mxu0 0.0
      %4259 = vmatprep.subr.mxu0 0.0
      %4260 = vmatpush1.msra.mxu0 0.0
      %4261 = vmatprep.subr.mxu0 0.0
      %4262 = vmatpush1.msra.mxu0 0.0
      %4263 = vmatprep.subr.mxu0 0.0
      %4264 = vmatpush1.msra.mxu0 0.0
      %4265 = vmatprep.subr.mxu0 0.0
      %4266 = vmatpush1.msra.mxu0 0.0
      %4267 = vmatprep.subr.mxu0 0.0
      %4268 = vmatpush1.msra.mxu0 0.0
      %4269 = vmatprep.subr.mxu0 0.0
      %4270 = vmatpush1.msra.mxu0 0.0
      %4271 = vmatprep.subr.mxu0 0.0
      %4272 = vmatpush1.msra.mxu0 0.0
      %4273 = vmatprep.subr.mxu0 0.0
      %4274 = vmatpush1.msra.mxu0 0.0
      %4275 = vmatprep.subr.mxu0 0.0
      %4276 = vmatpush1.msra.mxu0 0.0
      %4277 = vmatprep.subr.mxu0 0.0
      %4278 = vmatpush1.msra.mxu0 0.0
      %4279 = vmatprep.subr.mxu0 0.0
      %v4280 = vand.u32 %v2815, 4294901760
      %v4281 = vsub.f32 %v2815, %v4280
      %v4282 = vand.u32 %v4281, 4294901760
      %v4283 = vsub.f32 %v4281, %v4282
      %v4284 = vand.u32 %v4283, 4294901760
      %4285 = vmatpush1.msra.mxu0 %v4284
      %4286 = vmatprep.subr.mxu0 0.0
      %4287 = vmatpush2.msra.mxu0 0.0
      %4288 = vmatprep.subr.mxu0 0.0
      %4289 = vmatpush2.msra.mxu0 0.0
      %4290 = vmatprep.subr.mxu0 0.0
      %4291 = vmatpush2.msra.mxu0 0.0
      %4292 = vmatprep.subr.mxu0 0.0
      %4293 = vmatpush2.msra.mxu0 0.0
      %4294 = vmatprep.subr.mxu0 0.0
      %4295 = vmatpush2.msra.mxu0 0.0
      %4296 = vmatprep.subr.mxu0 0.0
      %4297 = vmatpush2.msra.mxu0 0.0
      %4298 = vmatprep.subr.mxu0 0.0
      %4299 = vmatpush2.msra.mxu0 0.0
      %4300 = vmatprep.subr.mxu0 0.0
      %4301 = vmatpush2.msra.mxu0 0.0
      %4302 = vmatprep.subr.mxu0 0.0
      %4303 = vmatpush2.msra.mxu0 0.0
      %4304 = vmatprep.subr.mxu0 0.0
      %4305 = vmatpush2.msra.mxu0 0.0
      %4306 = vmatprep.subr.mxu0 0.0
      %4307 = vmatpush2.msra.mxu0 0.0
      %4308 = vmatprep.subr.mxu0 0.0
      %4309 = vmatpush2.msra.mxu0 0.0
      %4310 = vmatprep.subr.mxu0 0.0
      %4311 = vmatpush2.msra.mxu0 0.0
      %4312 = vmatprep.subr.mxu0 0.0
      %4313 = vmatpush2.msra.mxu0 0.0
      %4314 = vmatprep.subr.mxu0 0.0
      %4315 = vmatpush2.msra.mxu0 0.0
      %4316 = vmatprep.subr.mxu0 0.0
      %4317 = vmatpush2.msra.mxu0 0.0
      %4318 = vmatprep.mubr.f32.mxu0 0.0
      %v4319 = vand.u32 %v4171, 4294901760
      %4320 = vmatmul.mubr.f32.gmra.mxu0 %v4319
      %v4321 = vpop.f32.mrf.mxu0
      %v4322 = vadd.f32 %v4246, %v4321
      %v4323 = vpop.f32.mrf.mxu0
      %4324 = vdwg.mxu0
      %4325 = vmatprep.subr.mxu0 0.0
      %4326 = vmatpush1.msra.mxu0 0.0
      %4327 = vmatprep.subr.mxu0 0.0
      %4328 = vmatpush1.msra.mxu0 0.0
      %4329 = vmatprep.subr.mxu0 0.0
      %4330 = vmatpush1.msra.mxu0 0.0
      %4331 = vmatprep.subr.mxu0 0.0
      %4332 = vmatpush1.msra.mxu0 0.0
      %4333 = vmatprep.subr.mxu0 0.0
      %4334 = vmatpush1.msra.mxu0 0.0
      %4335 = vmatprep.subr.mxu0 0.0
      %4336 = vmatpush1.msra.mxu0 0.0
      %4337 = vmatprep.subr.mxu0 0.0
      %4338 = vmatpush1.msra.mxu0 0.0
      %4339 = vmatprep.subr.mxu0 0.0
      %4340 = vmatpush1.msra.mxu0 0.0
      %4341 = vmatprep.subr.mxu0 0.0
      %4342 = vmatpush1.msra.mxu0 0.0
      %4343 = vmatprep.subr.mxu0 0.0
      %4344 = vmatpush1.msra.mxu0 0.0
      %4345 = vmatprep.subr.mxu0 0.0
      %4346 = vmatpush1.msra.mxu0 0.0
      %4347 = vmatprep.subr.mxu0 0.0
      %4348 = vmatpush1.msra.mxu0 0.0
      %4349 = vmatprep.subr.mxu0 0.0
      %4350 = vmatpush1.msra.mxu0 0.0
      %4351 = vmatprep.subr.mxu0 0.0
      %4352 = vmatpush1.msra.mxu0 0.0
      %4353 = vmatprep.subr.mxu0 0.0
      %4354 = vmatpush1.msra.mxu0 0.0
      %4355 = vmatprep.subr.mxu0 0.0
      %v4356 = vand.u32 %v2815, 4294901760
      %v4357 = vsub.f32 %v2815, %v4356
      %4358 = vmatpush1.msra.mxu0 %v4357
      %4359 = vmatprep.subr.mxu0 0.0
      %4360 = vmatpush2.msra.mxu0 0.0
      %4361 = vmatprep.subr.mxu0 0.0
      %4362 = vmatpush2.msra.mxu0 0.0
      %4363 = vmatprep.subr.mxu0 0.0
      %4364 = vmatpush2.msra.mxu0 0.0
      %4365 = vmatprep.subr.mxu0 0.0
      %4366 = vmatpush2.msra.mxu0 0.0
      %4367 = vmatprep.subr.mxu0 0.0
      %4368 = vmatpush2.msra.mxu0 0.0
      %4369 = vmatprep.subr.mxu0 0.0
      %4370 = vmatpush2.msra.mxu0 0.0
      %4371 = vmatprep.subr.mxu0 0.0
      %4372 = vmatpush2.msra.mxu0 0.0
      %4373 = vmatprep.subr.mxu0 0.0
      %4374 = vmatpush2.msra.mxu0 0.0
      %4375 = vmatprep.subr.mxu0 0.0
      %4376 = vmatpush2.msra.mxu0 0.0
      %4377 = vmatprep.subr.mxu0 0.0
      %4378 = vmatpush2.msra.mxu0 0.0
      %4379 = vmatprep.subr.mxu0 0.0
      %4380 = vmatpush2.msra.mxu0 0.0
      %4381 = vmatprep.subr.mxu0 0.0
      %4382 = vmatpush2.msra.mxu0 0.0
      %4383 = vmatprep.subr.mxu0 0.0
      %4384 = vmatpush2.msra.mxu0 0.0
      %4385 = vmatprep.subr.mxu0 0.0
      %4386 = vmatpush2.msra.mxu0 0.0
      %4387 = vmatprep.subr.mxu0 0.0
      %4388 = vmatpush2.msra.mxu0 0.0
      %4389 = vmatprep.subr.mxu0 0.0
      %4390 = vmatpush2.msra.mxu0 0.0
      %4391 = vmatprep.mubr.f32.mxu0 0.0
      %v4392 = vand.u32 %v4171, 4294901760
      %v4393 = vsub.f32 %v4171, %v4392
      %4394 = vmatmul.mubr.f32.gmra.mxu0 %v4393
      %v4395 = vpop.f32.mrf.mxu0
      %v4396 = vadd.f32 %v4322, %v4395
      %v4397 = vpop.f32.mrf.mxu0
      %4398 = vdwg.mxu0
      %4399 = vmatprep.subr.mxu0 0.0
      %4400 = vmatpush1.msra.mxu0 0.0
      %4401 = vmatprep.subr.mxu0 0.0
      %4402 = vmatpush1.msra.mxu0 0.0
      %4403 = vmatprep.subr.mxu0 0.0
      %4404 = vmatpush1.msra.mxu0 0.0
      %4405 = vmatprep.subr.mxu0 0.0
      %4406 = vmatpush1.msra.mxu0 0.0
      %4407 = vmatprep.subr.mxu0 0.0
      %4408 = vmatpush1.msra.mxu0 0.0
      %4409 = vmatprep.subr.mxu0 0.0
      %4410 = vmatpush1.msra.mxu0 0.0
      %4411 = vmatprep.subr.mxu0 0.0
      %4412 = vmatpush1.msra.mxu0 0.0
      %4413 = vmatprep.subr.mxu0 0.0
      %4414 = vmatpush1.msra.mxu0 0.0
      %4415 = vmatprep.subr.mxu0 0.0
      %4416 = vmatpush1.msra.mxu0 0.0
      %4417 = vmatprep.subr.mxu0 0.0
      %4418 = vmatpush1.msra.mxu0 0.0
      %4419 = vmatprep.subr.mxu0 0.0
      %4420 = vmatpush1.msra.mxu0 0.0
      %4421 = vmatprep.subr.mxu0 0.0
      %4422 = vmatpush1.msra.mxu0 0.0
      %4423 = vmatprep.subr.mxu0 0.0
      %4424 = vmatpush1.msra.mxu0 0.0
      %4425 = vmatprep.subr.mxu0 0.0
      %4426 = vmatpush1.msra.mxu0 0.0
      %4427 = vmatprep.subr.mxu0 0.0
      %4428 = vmatpush1.msra.mxu0 0.0
      %4429 = vmatprep.subr.mxu0 0.0
      %v4430 = vand.u32 %v2815, 4294901760
      %4431 = vmatpush1.msra.mxu0 %v4430
      %4432 = vmatprep.subr.mxu0 0.0
      %4433 = vmatpush2.msra.mxu0 0.0
      %4434 = vmatprep.subr.mxu0 0.0
      %4435 = vmatpush2.msra.mxu0 0.0
      %4436 = vmatprep.subr.mxu0 0.0
      %4437 = vmatpush2.msra.mxu0 0.0
      %4438 = vmatprep.subr.mxu0 0.0
      %4439 = vmatpush2.msra.mxu0 0.0
      %4440 = vmatprep.subr.mxu0 0.0
      %4441 = vmatpush2.msra.mxu0 0.0
      %4442 = vmatprep.subr.mxu0 0.0
      %4443 = vmatpush2.msra.mxu0 0.0
      %4444 = vmatprep.subr.mxu0 0.0
      %4445 = vmatpush2.msra.mxu0 0.0
      %4446 = vmatprep.subr.mxu0 0.0
      %4447 = vmatpush2.msra.mxu0 0.0
      %4448 = vmatprep.subr.mxu0 0.0
      %4449 = vmatpush2.msra.mxu0 0.0
      %4450 = vmatprep.subr.mxu0 0.0
      %4451 = vmatpush2.msra.mxu0 0.0
      %4452 = vmatprep.subr.mxu0 0.0
      %4453 = vmatpush2.msra.mxu0 0.0
      %4454 = vmatprep.subr.mxu0 0.0
      %4455 = vmatpush2.msra.mxu0 0.0
      %4456 = vmatprep.subr.mxu0 0.0
      %4457 = vmatpush2.msra.mxu0 0.0
      %4458 = vmatprep.subr.mxu0 0.0
      %4459 = vmatpush2.msra.mxu0 0.0
      %4460 = vmatprep.subr.mxu0 0.0
      %4461 = vmatpush2.msra.mxu0 0.0
      %4462 = vmatprep.subr.mxu0 0.0
      %4463 = vmatpush2.msra.mxu0 0.0
      %4464 = vmatprep.mubr.f32.mxu0 0.0
      %v4465 = vand.u32 %v4171, 4294901760
      %v4466 = vsub.f32 %v4171, %v4465
      %v4467 = vand.u32 %v4466, 4294901760
      %4468 = vmatmul.mubr.f32.gmra.mxu0 %v4467
      %v4469 = vpop.f32.mrf.mxu0
      %v4470 = vadd.f32 %v4396, %v4469
      %v4471 = vpop.f32.mrf.mxu0
      %4472 = vdwg.mxu0
      %4473 = vmatprep.subr.mxu0 0.0
      %4474 = vmatpush1.msra.mxu0 0.0
      %4475 = vmatprep.subr.mxu0 0.0
      %4476 = vmatpush1.msra.mxu0 0.0
      %4477 = vmatprep.subr.mxu0 0.0
      %4478 = vmatpush1.msra.mxu0 0.0
      %4479 = vmatprep.subr.mxu0 0.0
      %4480 = vmatpush1.msra.mxu0 0.0
      %4481 = vmatprep.subr.mxu0 0.0
      %4482 = vmatpush1.msra.mxu0 0.0
      %4483 = vmatprep.subr.mxu0 0.0
      %4484 = vmatpush1.msra.mxu0 0.0
      %4485 = vmatprep.subr.mxu0 0.0
      %4486 = vmatpush1.msra.mxu0 0.0
      %4487 = vmatprep.subr.mxu0 0.0
      %4488 = vmatpush1.msra.mxu0 0.0
      %4489 = vmatprep.subr.mxu0 0.0
      %4490 = vmatpush1.msra.mxu0 0.0
      %4491 = vmatprep.subr.mxu0 0.0
      %4492 = vmatpush1.msra.mxu0 0.0
      %4493 = vmatprep.subr.mxu0 0.0
      %4494 = vmatpush1.msra.mxu0 0.0
      %4495 = vmatprep.subr.mxu0 0.0
      %4496 = vmatpush1.msra.mxu0 0.0
      %4497 = vmatprep.subr.mxu0 0.0
      %4498 = vmatpush1.msra.mxu0 0.0
      %4499 = vmatprep.subr.mxu0 0.0
      %4500 = vmatpush1.msra.mxu0 0.0
      %4501 = vmatprep.subr.mxu0 0.0
      %4502 = vmatpush1.msra.mxu0 0.0
      %4503 = vmatprep.subr.mxu0 0.0
      %v4504 = vand.u32 %v2815, 4294901760
      %v4505 = vsub.f32 %v2815, %v4504
      %v4506 = vand.u32 %v4505, 4294901760
      %4507 = vmatpush1.msra.mxu0 %v4506
      %4508 = vmatprep.subr.mxu0 0.0
      %4509 = vmatpush2.msra.mxu0 0.0
      %4510 = vmatprep.subr.mxu0 0.0
      %4511 = vmatpush2.msra.mxu0 0.0
      %4512 = vmatprep.subr.mxu0 0.0
      %4513 = vmatpush2.msra.mxu0 0.0
      %4514 = vmatprep.subr.mxu0 0.0
      %4515 = vmatpush2.msra.mxu0 0.0
      %4516 = vmatprep.subr.mxu0 0.0
      %4517 = vmatpush2.msra.mxu0 0.0
      %4518 = vmatprep.subr.mxu0 0.0
      %4519 = vmatpush2.msra.mxu0 0.0
      %4520 = vmatprep.subr.mxu0 0.0
      %4521 = vmatpush2.msra.mxu0 0.0
      %4522 = vmatprep.subr.mxu0 0.0
      %4523 = vmatpush2.msra.mxu0 0.0
      %4524 = vmatprep.subr.mxu0 0.0
      %4525 = vmatpush2.msra.mxu0 0.0
      %4526 = vmatprep.subr.mxu0 0.0
      %4527 = vmatpush2.msra.mxu0 0.0
      %4528 = vmatprep.subr.mxu0 0.0
      %4529 = vmatpush2.msra.mxu0 0.0
      %4530 = vmatprep.subr.mxu0 0.0
      %4531 = vmatpush2.msra.mxu0 0.0
      %4532 = vmatprep.subr.mxu0 0.0
      %4533 = vmatpush2.msra.mxu0 0.0
      %4534 = vmatprep.subr.mxu0 0.0
      %4535 = vmatpush2.msra.mxu0 0.0
      %4536 = vmatprep.subr.mxu0 0.0
      %4537 = vmatpush2.msra.mxu0 0.0
      %4538 = vmatprep.subr.mxu0 0.0
      %4539 = vmatpush2.msra.mxu0 0.0
      %4540 = vmatprep.mubr.f32.mxu0 0.0
      %v4541 = vand.u32 %v4171, 4294901760
      %4542 = vmatmul.mubr.f32.gmra.mxu0 %v4541
      %v4543 = vpop.f32.mrf.mxu0
      %v4544 = vadd.f32 %v4470, %v4543
      %v4545 = vpop.f32.mrf.mxu0
      %4546 = vdwg.mxu0
      %4547 = vmatprep.subr.mxu0 0.0
      %4548 = vmatpush1.msra.mxu0 0.0
      %4549 = vmatprep.subr.mxu0 0.0
      %4550 = vmatpush1.msra.mxu0 0.0
      %4551 = vmatprep.subr.mxu0 0.0
      %4552 = vmatpush1.msra.mxu0 0.0
      %4553 = vmatprep.subr.mxu0 0.0
      %4554 = vmatpush1.msra.mxu0 0.0
      %4555 = vmatprep.subr.mxu0 0.0
      %4556 = vmatpush1.msra.mxu0 0.0
      %4557 = vmatprep.subr.mxu0 0.0
      %4558 = vmatpush1.msra.mxu0 0.0
      %4559 = vmatprep.subr.mxu0 0.0
      %4560 = vmatpush1.msra.mxu0 0.0
      %4561 = vmatprep.subr.mxu0 0.0
      %4562 = vmatpush1.msra.mxu0 0.0
      %4563 = vmatprep.subr.mxu0 0.0
      %4564 = vmatpush1.msra.mxu0 0.0
      %4565 = vmatprep.subr.mxu0 0.0
      %4566 = vmatpush1.msra.mxu0 0.0
      %4567 = vmatprep.subr.mxu0 0.0
      %4568 = vmatpush1.msra.mxu0 0.0
      %4569 = vmatprep.subr.mxu0 0.0
      %4570 = vmatpush1.msra.mxu0 0.0
      %4571 = vmatprep.subr.mxu0 0.0
      %4572 = vmatpush1.msra.mxu0 0.0
      %4573 = vmatprep.subr.mxu0 0.0
      %4574 = vmatpush1.msra.mxu0 0.0
      %4575 = vmatprep.subr.mxu0 0.0
      %4576 = vmatpush1.msra.mxu0 0.0
      %4577 = vmatprep.subr.mxu0 0.0
      %v4578 = vand.u32 %v2815, 4294901760
      %4579 = vmatpush1.msra.mxu0 %v4578
      %4580 = vmatprep.subr.mxu0 0.0
      %4581 = vmatpush2.msra.mxu0 0.0
      %4582 = vmatprep.subr.mxu0 0.0
      %4583 = vmatpush2.msra.mxu0 0.0
      %4584 = vmatprep.subr.mxu0 0.0
      %4585 = vmatpush2.msra.mxu0 0.0
      %4586 = vmatprep.subr.mxu0 0.0
      %4587 = vmatpush2.msra.mxu0 0.0
      %4588 = vmatprep.subr.mxu0 0.0
      %4589 = vmatpush2.msra.mxu0 0.0
      %4590 = vmatprep.subr.mxu0 0.0
      %4591 = vmatpush2.msra.mxu0 0.0
      %4592 = vmatprep.subr.mxu0 0.0
      %4593 = vmatpush2.msra.mxu0 0.0
      %4594 = vmatprep.subr.mxu0 0.0
      %4595 = vmatpush2.msra.mxu0 0.0
      %4596 = vmatprep.subr.mxu0 0.0
      %4597 = vmatpush2.msra.mxu0 0.0
      %4598 = vmatprep.subr.mxu0 0.0
      %4599 = vmatpush2.msra.mxu0 0.0
      %4600 = vmatprep.subr.mxu0 0.0
      %4601 = vmatpush2.msra.mxu0 0.0
      %4602 = vmatprep.subr.mxu0 0.0
      %4603 = vmatpush2.msra.mxu0 0.0
      %4604 = vmatprep.subr.mxu0 0.0
      %4605 = vmatpush2.msra.mxu0 0.0
      %4606 = vmatprep.subr.mxu0 0.0
      %4607 = vmatpush2.msra.mxu0 0.0
      %4608 = vmatprep.subr.mxu0 0.0
      %4609 = vmatpush2.msra.mxu0 0.0
      %4610 = vmatprep.subr.mxu0 0.0
      %4611 = vmatpush2.msra.mxu0 0.0
      %4612 = vmatprep.mubr.f32.mxu0 0.0
      %v4613 = vand.u32 %v4171, 4294901760
      %4614 = vmatmul.mubr.f32.gmra.mxu0 %v4613
      %v4615 = vpop.f32.mrf.mxu0
      %v4616 = vadd.f32 %v4544, %v4615
      %v4617 = vpop.f32.mrf.mxu0
      %4618 = vdwg.mxu0
      %v4619 = vmul.f32 %v2146, %v4616
      %v4620 = vadd.f32 %v4168, %v4619
      %4621 = vst [vmem:[%s199] sm:$0xf] %v4620
      %p4622 = scmp.lt.s32.totalorder %s18, 1
      %s4623 = scalar_select %p4622, %s18, 1
      %p4624 = scmp.lt.s32.totalorder %s19, 0
      %s4625 = scalar_select %p4624, %s19, 0
      %s4626 = sadd.s32 %s4625, %s4623
      %s4627 = smul.addr %s4626, 4
      %s4628 = scalar_lea.vmem %s3, %s4627
      // Predicated region
      $region33: #{learned_soft_aggregate.1} parent=31 // pred_check
        %p4629 = pneg %p116
      $region34: #{learned_soft_aggregate.1} parent=31 // pred_check_branch
        %4631 = sbr.rel (%p4629) target = $region36
      $region35: #{learned_soft_aggregate.1} parent=31 // pred_region
        _
      $region36: #{learned_soft_aggregate.1} parent=31 // pred_fallthru
        _
    $region32: #{learned_soft_aggregate.1} parent=5 // pred_fallthru
      _
    %p4632 = scmp.le.s32.totalorder 2, %s9
    // Predicated region
    $region37: #{learned_soft_aggregate.1} parent=5 // pred_check
      %p4633 = pneg %p4632
    $region38: #{learned_soft_aggregate.1} parent=5 // pred_check_branch
      %4635 = sbr.rel (%p4633) target = $region40
    $region39: #{learned_soft_aggregate.1} parent=5 // pred_region
      %s4636 = ssub.s32 %s9, 2
      // Predicated region
      $region41: #{learned_soft_aggregate.1} parent=39 // pred_check
        %p4637 = pneg %p122
      $region42: #{learned_soft_aggregate.1} parent=39 // pred_check_branch
        %4639 = sbr.rel (%p4637) target = $region44
      $region43: #{learned_soft_aggregate.1} parent=39 // pred_region
        %p4640 = scmp.lt.s32.totalorder %s20, 1
        %s4641 = scalar_select %p4640, %s20, 1
        %p4642 = scmp.lt.s32.totalorder %s21, 0
        %s4643 = scalar_select %p4642, %s21, 0
        %s4644 = sadd.s32 %s4643, %s4641
        %s4645 = smul.addr %s4644, 4
        %s4646 = scalar_lea.vmem %s3, %s4645
      $region44: #{learned_soft_aggregate.1} parent=39 // pred_fallthru
        _
    $region40: #{learned_soft_aggregate.1} parent=5 // pred_fallthru
      _
  $region6: #{learned_soft_aggregate.1} parent=0 // loop_footer
    %s13 = sadd.s32 1, %s9
  $region7: #{learned_soft_aggregate.1} parent=0 // loop_footer_branch
    %8 = sbr.rel target = $region3
  $region8: #{learned_soft_aggregate.1} parent=0 // loop_exit
    _

</llo_original>
